<compile_context>
chip_gen: v7x
topology: tpu7x:2x2x1
jax: 0.10.0
libtpu: 0.0.40
codegen_flags: <defaults>
</compile_context>

<pallas_src>
import functools

import jax
import jax.numpy as jnp
from jax import lax
from jax.experimental import pallas as pl
from jax.experimental.pallas import tpu as pltpu

EPS = 1e-5
LANE = 128


def _round_up(x, m):
    return (x + m - 1) // m * m


def _bn(y, gamma, beta):
    """Training-mode BatchNorm over flattened (M, C) rows.

    One-pass statistics (sum & sum-of-squares) in fp32, biased variance —
    matches nn.BatchNorm2d's normalization of the current batch."""
    inv_m = 1.0 / y.shape[0]
    mu = jnp.sum(y, axis=0, keepdims=True) * inv_m
    ex2 = jnp.sum(y * y, axis=0, keepdims=True) * inv_m
    var = ex2 - mu * mu
    return (y - mu) * lax.rsqrt(var + EPS) * gamma + beta


# ------------------------------ fused kernel ----------------------------------

def fused_bottleneck_kernel(x_ref, w1_ref, w2_ref, w3_ref,
                            g1_ref, b1_ref, g2_ref, b2_ref, g3_ref, b3_ref,
                            o_ref, xpad_ref, patch_ref,
                            *, N, H, W, M, WP, CP):
    # x: (M, CP) fp32; channels are lane-padded with zeros. Also the residual.
    x = x_ref[...]

    # ---- stage 1: 1x1 conv (bf16 operands, f32 acc on MXU) + BN + ReLU ----
    y1 = jnp.dot(x.astype(jnp.bfloat16), w1_ref[...],
                 preferred_element_type=jnp.float32)                 # (M, WP)
    out1 = jnp.maximum(_bn(y1, g1_ref[...], b1_ref[...]), 0.0)

    # ---- stage 2: 3x3 conv (stride 1, pad 1) + BN + ReLU ----
    # Zero-pad entirely in VMEM, im2col once into a VMEM scratch, then a single
    # K = 9*WP MXU matmul (instead of 9 relayouts feeding 9 shallow matmuls).
    xpad_ref[...] = jnp.zeros_like(xpad_ref)
    xpad_ref[:, 1:H + 1, 1:W + 1, :] = (
        out1.astype(jnp.bfloat16).reshape(N, H, W, WP))
    for di in range(3):                                 # static 3x3 taps
        for dj in range(3):
            tap = di * 3 + dj
            patch_ref[:, tap * WP:(tap + 1) * WP] = (
                xpad_ref[:, di:di + H, dj:dj + W, :].reshape(M, WP))
    y2 = jnp.dot(patch_ref[...], w2_ref[...],
                 preferred_element_type=jnp.float32)                 # (M, WP)
    out2 = jnp.maximum(_bn(y2, g2_ref[...], b2_ref[...]), 0.0)

    # ---- stage 3: 1x1 conv + BN + residual add + ReLU ----
    y3 = jnp.dot(out2.astype(jnp.bfloat16), w3_ref[...],
                 preferred_element_type=jnp.float32)                 # (M, CP)
    out3 = _bn(y3, g3_ref[...], b3_ref[...]) + x                     # identity
    o_ref[...] = jnp.maximum(out3, 0.0)


# ------------------------------ wrapper ---------------------------------------

def bottleneck_forward(x_nchw, params):
    """x_nchw: (N, inplanes, H, W) float32. Returns (N, planes*4, H, W)."""
    N, Cin, H, W = x_nchw.shape
    width = params["w1"].shape[1]
    Cout = params["w3"].shape[1]
    # downsample=None => identity add requires inplanes == planes*expansion.
    assert Cin == Cout, "downsample=None requires inplanes == planes * 4"
    M = N * H * W
    WP = _round_up(width, LANE)      # lane-padded mid width
    CP = _round_up(Cout, LANE)       # lane-padded output / input channels

    # Layout plumbing (wrapper side, one small op): NCHW -> NHWC -> (M, Cin),
    # lane-pad channels to CP so every in-kernel array is 128-lane dense.
    x_flat = jnp.transpose(x_nchw, (0, 2, 3, 1)).reshape(M, Cin)
    x_p = jnp.pad(x_flat, ((0, 0), (0, CP - Cin)))                    # fp32

    # Parameter preprocessing (one-time): lane-pad channel dims, cast matmul
    # operands to bf16, reshape the 3x3 weight for the single im2col matmul.
    w1 = jnp.pad(params["w1"], ((0, CP - Cin), (0, WP - width))).astype(jnp.bfloat16)
    w2 = jnp.pad(params["w2"], ((0, 0), (0, 0),
                                (0, WP - width), (0, WP - width)))
    w2 = w2.reshape(9 * WP, WP).astype(jnp.bfloat16)                  # tap-major
    w3 = jnp.pad(params["w3"], ((0, WP - width), (0, CP - Cout))).astype(jnp.bfloat16)

    def pad_gb(g, b, cp):
        gp = jnp.pad(g, (0, cp - g.shape[0]), constant_values=1.0).reshape(1, cp)
        bp = jnp.pad(b, (0, cp - b.shape[0])).reshape(1, cp)
        return gp.astype(jnp.float32), bp.astype(jnp.float32)

    g1, b1 = pad_gb(params["g1"], params["b1"], WP)
    g2, b2 = pad_gb(params["g2"], params["b2"], WP)
    g3, b3 = pad_gb(params["g3"], params["b3"], CP)

    kernel = functools.partial(fused_bottleneck_kernel,
                               N=N, H=H, W=W, M=M, WP=WP, CP=CP)

    flops = 2 * M * (CP * WP + 9 * WP * WP + WP * CP)
    bytes_accessed = (x_p.size * 4 + (w1.size + w2.size + w3.size) * 2
                      + (g1.size + b1.size + g2.size + b2.size + g3.size + b3.size) * 4
                      + M * CP * 4)

    # TODO(synk): for real ResNet shapes (e.g. N=32, 56x56, C>=256) add an
    # M-tiled grid with two-pass BN (cross-tile sum/sumsq accumulation) and
    # dimension_semantics=("parallel", "arbitrary") so v7x's two TensorCores
    # are used and tiles fit its 64 MiB VMEM; the toy config fits whole-array.
    out_p = pl.pallas_call(
        kernel,
        out_shape=jax.ShapeDtypeStruct((M, CP), jnp.float32),
        in_specs=[pl.BlockSpec(memory_space=pltpu.MemorySpace.VMEM)] * 10,
        out_specs=pl.BlockSpec(memory_space=pltpu.MemorySpace.VMEM),
        scratch_shapes=[
            pltpu.VMEM((N, H + 2, W + 2, WP), jnp.bfloat16),   # in-kernel zero pad
            pltpu.VMEM((M, 9 * WP), jnp.bfloat16),             # im2col patches
        ],
        compiler_params=pltpu.CompilerParams(vmem_limit_bytes=32 * 1024 * 1024),
        cost_estimate=pl.CostEstimate(flops=flops, transcendentals=0,
                                      bytes_accessed=bytes_accessed),
    )(x_p, w1, w2, w3, g1, b1, g2, b2, g3, b3)

    out = out_p[:, :Cout].reshape(N, H, W, Cout)        # fuses with transpose
    return jnp.transpose(out, (0, 3, 1, 2))


# --------------------------- pure-JAX reference --------------------------------

def bottleneck_reference(x_nchw, params):
    """Reference with matching operand precision (bf16 conv inputs, fp32 acc,
    fp32 BN/residual) so the comparison tolerance can stay tight."""
    x = jnp.transpose(x_nchw, (0, 2, 3, 1))
    dn = ("NHWC", "HWIO", "NHWC")

    def conv(a, w, padding):
        return lax.conv_general_dilated(
            a.astype(jnp.bfloat16), w.astype(jnp.bfloat16), (1, 1), padding,
            dimension_numbers=dn, preferred_element_type=jnp.float32)

    def bn(y, g, b):
        mu = y.mean(axis=(0, 1, 2), keepdims=True)
        var = ((y - mu) ** 2).mean(axis=(0, 1, 2), keepdims=True)
        return ((y - mu) / jnp.sqrt(var + EPS) * g.reshape(1, 1, 1, -1)
                + b.reshape(1, 1, 1, -1))

    y = conv(x, params["w1"][None, None], "VALID")
    y = jax.nn.relu(bn(y, params["g1"], params["b1"]))
    y = conv(y, params["w2"], "SAME")
    y = jax.nn.relu(bn(y, params["g2"], params["b2"]))
    y = conv(y, params["w3"][None, None], "VALID")
    y = jax.nn.relu(bn(y, params["g3"], params["b3"]) + x)
    return jnp.transpose(y, (0, 3, 1, 2))


# ------------------------------ main ------------------------------------------

if __name__ == "__main__":
    # Bottleneck(inplanes=32, planes=8): width = 8, out = planes*4 = 32 = inplanes
    N, inplanes, H, W = 2, 32, 8, 8
    planes = 8
    width = planes                       # groups=1, base_width=64
    Cout = planes * 4                    # expansion = 4

    key = jax.random.PRNGKey(0)
    k_x, k1, k2, k3 = jax.random.split(key, 4)

    x = jax.random.normal(k_x, (N, inplanes, H, W), dtype=jnp.float32)

    params = {
        # conv weights (bias=False as in the module); w2 stored HWIO
        "w1": jax.random.normal(k1, (inplanes, width), jnp.float32) * 0.1,
        "w2": jax.random.normal(k2, (3, 3, width, width), jnp.float32) * 0.1,
        "w3": jax.random.normal(k3, (width, Cout), jnp.float32) * 0.1,
        # BatchNorm affine params: PyTorch default init (gamma=1, beta=0)
        "g1": jnp.ones((width,), jnp.float32), "b1": jnp.zeros((width,), jnp.float32),
        "g2": jnp.ones((width,), jnp.float32), "b2": jnp.zeros((width,), jnp.float32),
        "g3": jnp.ones((Cout,), jnp.float32),  "b3": jnp.zeros((Cout,), jnp.float32),
    }

    out = jax.block_until_ready(jax.jit(bottleneck_forward)(x, params))
    ref = jax.block_until_ready(bottleneck_reference(x, params))

    assert out.shape == (N, Cout, H, W), out.shape
    max_err = float(jnp.max(jnp.abs(out - ref)))
    assert jnp.allclose(out, ref, atol=2e-3, rtol=2e-3), max_err

    print("KERNEL_OK")
</pallas_src>

<mosaic_0001>
module attributes {stable_mosaic.version = 11 : i64} {
  func.func @fused_bottleneck_kernel(%arg0: memref<128x128xf32, #tpu.memory_space<vmem>>, %arg1: memref<128x128xbf16, #tpu.memory_space<vmem>>, %arg2: memref<1152x128xbf16, #tpu.memory_space<vmem>>, %arg3: memref<128x128xbf16, #tpu.memory_space<vmem>>, %arg4: memref<1x128xf32, #tpu.memory_space<vmem>>, %arg5: memref<1x128xf32, #tpu.memory_space<vmem>>, %arg6: memref<1x128xf32, #tpu.memory_space<vmem>>, %arg7: memref<1x128xf32, #tpu.memory_space<vmem>>, %arg8: memref<1x128xf32, #tpu.memory_space<vmem>>, %arg9: memref<1x128xf32, #tpu.memory_space<vmem>>, %arg10: memref<128x128xf32, #tpu.memory_space<vmem>>, %arg11: memref<2x10x10x128xbf16, #tpu.memory_space<vmem>>, %arg12: memref<128x1152xbf16, #tpu.memory_space<vmem>>) attributes {dimension_semantics = [], scalar_prefetch = 0 : i64, scratch_operands = 2 : i64, tpu.core_type = #tpu.core_type<tc>} {
    %c0 = arith.constant 0 : index
    %c0_0 = arith.constant 0 : index
    %0 = vector.load %arg0[%c0, %c0_0] : memref<128x128xf32, #tpu.memory_space<vmem>>, vector<128x128xf32>
    %1 = arith.truncf %0 : vector<128x128xf32> to vector<128x128xbf16>
    %c0_1 = arith.constant 0 : index
    %c0_2 = arith.constant 0 : index
    %2 = vector.load %arg1[%c0_1, %c0_2] : memref<128x128xbf16, #tpu.memory_space<vmem>>, vector<128x128xbf16>
    %cst = arith.constant dense<0.000000e+00> : vector<128x128xf32>
    %3 = tpu.matmul %1, %2, %cst {dimension_numbers = #tpu.dot_dimension_numbers<[1], [0], [0], [1], [0, 0, 1, 1], [], []>} : vector<128x128xbf16>, vector<128x128xbf16>, vector<128x128xf32> -> vector<128x128xf32>
    %c0_3 = arith.constant 0 : index
    %c0_4 = arith.constant 0 : index
    %4 = vector.load %arg4[%c0_3, %c0_4] : memref<1x128xf32, #tpu.memory_space<vmem>>, vector<1x128xf32>
    %c0_5 = arith.constant 0 : index
    %c0_6 = arith.constant 0 : index
    %5 = vector.load %arg5[%c0_5, %c0_6] : memref<1x128xf32, #tpu.memory_space<vmem>>, vector<1x128xf32>
    %cst_7 = arith.constant dense<0.000000e+00> : vector<128xf32>
    %6 = vector.multi_reduction <add>, %3, %cst_7 [0] : vector<128x128xf32> to vector<128xf32>
    %7 = vector.shape_cast %6 : vector<128xf32> to vector<1x128xf32>
    %cst_8 = arith.constant 7.812500e-03 : f32
    %8 = vector.broadcast %cst_8 : f32 to vector<1x128xf32>
    %9 = arith.mulf %7, %8 : vector<1x128xf32>
    %10 = arith.mulf %3, %3 : vector<128x128xf32>
    %cst_9 = arith.constant dense<0.000000e+00> : vector<128xf32>
    %11 = vector.multi_reduction <add>, %10, %cst_9 [0] : vector<128x128xf32> to vector<128xf32>
    %12 = vector.shape_cast %11 : vector<128xf32> to vector<1x128xf32>
    %cst_10 = arith.constant 7.812500e-03 : f32
    %13 = vector.broadcast %cst_10 : f32 to vector<1x128xf32>
    %14 = arith.mulf %12, %13 : vector<1x128xf32>
    %15 = arith.mulf %9, %9 : vector<1x128xf32>
    %16 = arith.subf %14, %15 : vector<1x128xf32>
    %17 = vector.broadcast %9 : vector<1x128xf32> to vector<128x128xf32>
    %18 = arith.subf %3, %17 : vector<128x128xf32>
    %cst_11 = arith.constant 9.99999974E-6 : f32
    %19 = vector.broadcast %cst_11 : f32 to vector<1x128xf32>
    %20 = arith.addf %16, %19 : vector<1x128xf32>
    %21 = math.rsqrt %20 : vector<1x128xf32>
    %22 = vector.broadcast %21 : vector<1x128xf32> to vector<128x128xf32>
    %23 = arith.mulf %18, %22 : vector<128x128xf32>
    %24 = vector.broadcast %4 : vector<1x128xf32> to vector<128x128xf32>
    %25 = arith.mulf %23, %24 : vector<128x128xf32>
    %26 = vector.broadcast %5 : vector<1x128xf32> to vector<128x128xf32>
    %27 = arith.addf %25, %26 : vector<128x128xf32>
    %cst_12 = arith.constant 0.000000e+00 : f32
    %28 = vector.broadcast %cst_12 : f32 to vector<128x128xf32>
    %29 = arith.maximumf %27, %28 : vector<128x128xf32>
    %cst_13 = arith.constant 0.000000e+00 : bf16
    %30 = vector.broadcast %cst_13 : bf16 to vector<2x10x10x128xbf16>
    %c0_14 = arith.constant 0 : index
    %c0_15 = arith.constant 0 : index
    %c0_16 = arith.constant 0 : index
    %c0_17 = arith.constant 0 : index
    %31 = vector.load %arg11[%c0_14, %c0_15, %c0_16, %c0_17] : memref<2x10x10x128xbf16, #tpu.memory_space<vmem>>, vector<2x10x10x128xbf16>
    tpu.vector_store %arg11[%c0_14, %c0_15, %c0_16, %c0_17], %30 {strides = array<i32>} : memref<2x10x10x128xbf16, #tpu.memory_space<vmem>>, vector<2x10x10x128xbf16>,
    %32 = arith.truncf %29 : vector<128x128xf32> to vector<128x128xbf16>
    %33 = vector.shape_cast %32 : vector<128x128xbf16> to vector<2x8x8x128xbf16>
    %c0_18 = arith.constant 0 : index
    %c1 = arith.constant 1 : index
    %c1_19 = arith.constant 1 : index
    %c0_20 = arith.constant 0 : index
    %34 = vector.load %arg11[%c0_18, %c1, %c1_19, %c0_20] : memref<2x10x10x128xbf16, #tpu.memory_space<vmem>>, vector<2x8x8x128xbf16>
    tpu.vector_store %arg11[%c0_18, %c1, %c1_19, %c0_20], %33 {strides = array<i32>} : memref<2x10x10x128xbf16, #tpu.memory_space<vmem>>, vector<2x8x8x128xbf16>,
    %c0_21 = arith.constant 0 : index
    %c0_22 = arith.constant 0 : index
    %c0_23 = arith.constant 0 : index
    %c0_24 = arith.constant 0 : index
    %35 = vector.load %arg11[%c0_21, %c0_22, %c0_23, %c0_24] : memref<2x10x10x128xbf16, #tpu.memory_space<vmem>>, vector<2x8x8x128xbf16>
    %36 = vector.shape_cast %35 : vector<2x8x8x128xbf16> to vector<128x128xbf16>
    %c0_25 = arith.constant 0 : index
    %c0_26 = arith.constant 0 : index
    %37 = vector.load %arg12[%c0_25, %c0_26] : memref<128x1152xbf16, #tpu.memory_space<vmem>>, vector<128x128xbf16>
    tpu.vector_store %arg12[%c0_25, %c0_26], %36 {strides = array<i32>} : memref<128x1152xbf16, #tpu.memory_space<vmem>>, vector<128x128xbf16>,
    %c0_27 = arith.constant 0 : index
    %c0_28 = arith.constant 0 : index
    %c1_29 = arith.constant 1 : index
    %c0_30 = arith.constant 0 : index
    %38 = vector.load %arg11[%c0_27, %c0_28, %c1_29, %c0_30] : memref<2x10x10x128xbf16, #tpu.memory_space<vmem>>, vector<2x8x8x128xbf16>
    %39 = vector.shape_cast %38 : vector<2x8x8x128xbf16> to vector<128x128xbf16>
    %c0_31 = arith.constant 0 : index
    %c128 = arith.constant 128 : index
    %40 = vector.load %arg12[%c0_31, %c128] : memref<128x1152xbf16, #tpu.memory_space<vmem>>, vector<128x128xbf16>
    tpu.vector_store %arg12[%c0_31, %c128], %39 {strides = array<i32>} : memref<128x1152xbf16, #tpu.memory_space<vmem>>, vector<128x128xbf16>,
    %c0_32 = arith.constant 0 : index
    %c0_33 = arith.constant 0 : index
    %c2 = arith.constant 2 : index
    %c0_34 = arith.constant 0 : index
    %41 = vector.load %arg11[%c0_32, %c0_33, %c2, %c0_34] : memref<2x10x10x128xbf16, #tpu.memory_space<vmem>>, vector<2x8x8x128xbf16>
    %42 = vector.shape_cast %41 : vector<2x8x8x128xbf16> to vector<128x128xbf16>
    %c0_35 = arith.constant 0 : index
    %c256 = arith.constant 256 : index
    %43 = vector.load %arg12[%c0_35, %c256] : memref<128x1152xbf16, #tpu.memory_space<vmem>>, vector<128x128xbf16>
    tpu.vector_store %arg12[%c0_35, %c256], %42 {strides = array<i32>} : memref<128x1152xbf16, #tpu.memory_space<vmem>>, vector<128x128xbf16>,
    %c0_36 = arith.constant 0 : index
    %c1_37 = arith.constant 1 : index
    %c0_38 = arith.constant 0 : index
    %c0_39 = arith.constant 0 : index
    %44 = vector.load %arg11[%c0_36, %c1_37, %c0_38, %c0_39] : memref<2x10x10x128xbf16, #tpu.memory_space<vmem>>, vector<2x8x8x128xbf16>
    %45 = vector.shape_cast %44 : vector<2x8x8x128xbf16> to vector<128x128xbf16>
    %c0_40 = arith.constant 0 : index
    %c384 = arith.constant 384 : index
    %46 = vector.load %arg12[%c0_40, %c384] : memref<128x1152xbf16, #tpu.memory_space<vmem>>, vector<128x128xbf16>
    tpu.vector_store %arg12[%c0_40, %c384], %45 {strides = array<i32>} : memref<128x1152xbf16, #tpu.memory_space<vmem>>, vector<128x128xbf16>,
    %c0_41 = arith.constant 0 : index
    %c1_42 = arith.constant 1 : index
    %c1_43 = arith.constant 1 : index
    %c0_44 = arith.constant 0 : index
    %47 = vector.load %arg11[%c0_41, %c1_42, %c1_43, %c0_44] : memref<2x10x10x128xbf16, #tpu.memory_space<vmem>>, vector<2x8x8x128xbf16>
    %48 = vector.shape_cast %47 : vector<2x8x8x128xbf16> to vector<128x128xbf16>
    %c0_45 = arith.constant 0 : index
    %c512 = arith.constant 512 : index
    %49 = vector.load %arg12[%c0_45, %c512] : memref<128x1152xbf16, #tpu.memory_space<vmem>>, vector<128x128xbf16>
    tpu.vector_store %arg12[%c0_45, %c512], %48 {strides = array<i32>} : memref<128x1152xbf16, #tpu.memory_space<vmem>>, vector<128x128xbf16>,
    %c0_46 = arith.constant 0 : index
    %c1_47 = arith.constant 1 : index
    %c2_48 = arith.constant 2 : index
    %c0_49 = arith.constant 0 : index
    %50 = vector.load %arg11[%c0_46, %c1_47, %c2_48, %c0_49] : memref<2x10x10x128xbf16, #tpu.memory_space<vmem>>, vector<2x8x8x128xbf16>
    %51 = vector.shape_cast %50 : vector<2x8x8x128xbf16> to vector<128x128xbf16>
    %c0_50 = arith.constant 0 : index
    %c640 = arith.constant 640 : index
    %52 = vector.load %arg12[%c0_50, %c640] : memref<128x1152xbf16, #tpu.memory_space<vmem>>, vector<128x128xbf16>
    tpu.vector_store %arg12[%c0_50, %c640], %51 {strides = array<i32>} : memref<128x1152xbf16, #tpu.memory_space<vmem>>, vector<128x128xbf16>,
    %c0_51 = arith.constant 0 : index
    %c2_52 = arith.constant 2 : index
    %c0_53 = arith.constant 0 : index
    %c0_54 = arith.constant 0 : index
    %53 = vector.load %arg11[%c0_51, %c2_52, %c0_53, %c0_54] : memref<2x10x10x128xbf16, #tpu.memory_space<vmem>>, vector<2x8x8x128xbf16>
    %54 = vector.shape_cast %53 : vector<2x8x8x128xbf16> to vector<128x128xbf16>
    %c0_55 = arith.constant 0 : index
    %c768 = arith.constant 768 : index
    %55 = vector.load %arg12[%c0_55, %c768] : memref<128x1152xbf16, #tpu.memory_space<vmem>>, vector<128x128xbf16>
    tpu.vector_store %arg12[%c0_55, %c768], %54 {strides = array<i32>} : memref<128x1152xbf16, #tpu.memory_space<vmem>>, vector<128x128xbf16>,
    %c0_56 = arith.constant 0 : index
    %c2_57 = arith.constant 2 : index
    %c1_58 = arith.constant 1 : index
    %c0_59 = arith.constant 0 : index
    %56 = vector.load %arg11[%c0_56, %c2_57, %c1_58, %c0_59] : memref<2x10x10x128xbf16, #tpu.memory_space<vmem>>, vector<2x8x8x128xbf16>
    %57 = vector.shape_cast %56 : vector<2x8x8x128xbf16> to vector<128x128xbf16>
    %c0_60 = arith.constant 0 : index
    %c896 = arith.constant 896 : index
    %58 = vector.load %arg12[%c0_60, %c896] : memref<128x1152xbf16, #tpu.memory_space<vmem>>, vector<128x128xbf16>
    tpu.vector_store %arg12[%c0_60, %c896], %57 {strides = array<i32>} : memref<128x1152xbf16, #tpu.memory_space<vmem>>, vector<128x128xbf16>,
    %c0_61 = arith.constant 0 : index
    %c2_62 = arith.constant 2 : index
    %c2_63 = arith.constant 2 : index
    %c0_64 = arith.constant 0 : index
    %59 = vector.load %arg11[%c0_61, %c2_62, %c2_63, %c0_64] : memref<2x10x10x128xbf16, #tpu.memory_space<vmem>>, vector<2x8x8x128xbf16>
    %60 = vector.shape_cast %59 : vector<2x8x8x128xbf16> to vector<128x128xbf16>
    %c0_65 = arith.constant 0 : index
    %c1024 = arith.constant 1024 : index
    %61 = vector.load %arg12[%c0_65, %c1024] : memref<128x1152xbf16, #tpu.memory_space<vmem>>, vector<128x128xbf16>
    tpu.vector_store %arg12[%c0_65, %c1024], %60 {strides = array<i32>} : memref<128x1152xbf16, #tpu.memory_space<vmem>>, vector<128x128xbf16>,
    %c0_66 = arith.constant 0 : index
    %c0_67 = arith.constant 0 : index
    %62 = vector.load %arg12[%c0_66, %c0_67] : memref<128x1152xbf16, #tpu.memory_space<vmem>>, vector<128x1152xbf16>
    %c0_68 = arith.constant 0 : index
    %c0_69 = arith.constant 0 : index
    %63 = vector.load %arg2[%c0_68, %c0_69] : memref<1152x128xbf16, #tpu.memory_space<vmem>>, vector<1152x128xbf16>
    %cst_70 = arith.constant dense<0.000000e+00> : vector<128x128xf32>
    %64 = tpu.matmul %62, %63, %cst_70 {dimension_numbers = #tpu.dot_dimension_numbers<[1], [0], [0], [1], [0, 0, 1, 1], [], []>} : vector<128x1152xbf16>, vector<1152x128xbf16>, vector<128x128xf32> -> vector<128x128xf32>
    %c0_71 = arith.constant 0 : index
    %c0_72 = arith.constant 0 : index
    %65 = vector.load %arg6[%c0_71, %c0_72] : memref<1x128xf32, #tpu.memory_space<vmem>>, vector<1x128xf32>
    %c0_73 = arith.constant 0 : index
    %c0_74 = arith.constant 0 : index
    %66 = vector.load %arg7[%c0_73, %c0_74] : memref<1x128xf32, #tpu.memory_space<vmem>>, vector<1x128xf32>
    %cst_75 = arith.constant dense<0.000000e+00> : vector<128xf32>
    %67 = vector.multi_reduction <add>, %64, %cst_75 [0] : vector<128x128xf32> to vector<128xf32>
    %68 = vector.shape_cast %67 : vector<128xf32> to vector<1x128xf32>
    %cst_76 = arith.constant 7.812500e-03 : f32
    %69 = vector.broadcast %cst_76 : f32 to vector<1x128xf32>
    %70 = arith.mulf %68, %69 : vector<1x128xf32>
    %71 = arith.mulf %64, %64 : vector<128x128xf32>
    %cst_77 = arith.constant dense<0.000000e+00> : vector<128xf32>
    %72 = vector.multi_reduction <add>, %71, %cst_77 [0] : vector<128x128xf32> to vector<128xf32>
    %73 = vector.shape_cast %72 : vector<128xf32> to vector<1x128xf32>
    %cst_78 = arith.constant 7.812500e-03 : f32
    %74 = vector.broadcast %cst_78 : f32 to vector<1x128xf32>
    %75 = arith.mulf %73, %74 : vector<1x128xf32>
    %76 = arith.mulf %70, %70 : vector<1x128xf32>
    %77 = arith.subf %75, %76 : vector<1x128xf32>
    %78 = vector.broadcast %70 : vector<1x128xf32> to vector<128x128xf32>
    %79 = arith.subf %64, %78 : vector<128x128xf32>
    %cst_79 = arith.constant 9.99999974E-6 : f32
    %80 = vector.broadcast %cst_79 : f32 to vector<1x128xf32>
    %81 = arith.addf %77, %80 : vector<1x128xf32>
    %82 = math.rsqrt %81 : vector<1x128xf32>
    %83 = vector.broadcast %82 : vector<1x128xf32> to vector<128x128xf32>
    %84 = arith.mulf %79, %83 : vector<128x128xf32>
    %85 = vector.broadcast %65 : vector<1x128xf32> to vector<128x128xf32>
    %86 = arith.mulf %84, %85 : vector<128x128xf32>
    %87 = vector.broadcast %66 : vector<1x128xf32> to vector<128x128xf32>
    %88 = arith.addf %86, %87 : vector<128x128xf32>
    %cst_80 = arith.constant 0.000000e+00 : f32
    %89 = vector.broadcast %cst_80 : f32 to vector<128x128xf32>
    %90 = arith.maximumf %88, %89 : vector<128x128xf32>
    %91 = arith.truncf %90 : vector<128x128xf32> to vector<128x128xbf16>
    %c0_81 = arith.constant 0 : index
    %c0_82 = arith.constant 0 : index
    %92 = vector.load %arg3[%c0_81, %c0_82] : memref<128x128xbf16, #tpu.memory_space<vmem>>, vector<128x128xbf16>
    %cst_83 = arith.constant dense<0.000000e+00> : vector<128x128xf32>
    %93 = tpu.matmul %91, %92, %cst_83 {dimension_numbers = #tpu.dot_dimension_numbers<[1], [0], [0], [1], [0, 0, 1, 1], [], []>} : vector<128x128xbf16>, vector<128x128xbf16>, vector<128x128xf32> -> vector<128x128xf32>
    %c0_84 = arith.constant 0 : index
    %c0_85 = arith.constant 0 : index
    %94 = vector.load %arg8[%c0_84, %c0_85] : memref<1x128xf32, #tpu.memory_space<vmem>>, vector<1x128xf32>
    %c0_86 = arith.constant 0 : index
    %c0_87 = arith.constant 0 : index
    %95 = vector.load %arg9[%c0_86, %c0_87] : memref<1x128xf32, #tpu.memory_space<vmem>>, vector<1x128xf32>
    %cst_88 = arith.constant dense<0.000000e+00> : vector<128xf32>
    %96 = vector.multi_reduction <add>, %93, %cst_88 [0] : vector<128x128xf32> to vector<128xf32>
    %97 = vector.shape_cast %96 : vector<128xf32> to vector<1x128xf32>
    %cst_89 = arith.constant 7.812500e-03 : f32
    %98 = vector.broadcast %cst_89 : f32 to vector<1x128xf32>
    %99 = arith.mulf %97, %98 : vector<1x128xf32>
    %100 = arith.mulf %93, %93 : vector<128x128xf32>
    %cst_90 = arith.constant dense<0.000000e+00> : vector<128xf32>
    %101 = vector.multi_reduction <add>, %100, %cst_90 [0] : vector<128x128xf32> to vector<128xf32>
    %102 = vector.shape_cast %101 : vector<128xf32> to vector<1x128xf32>
    %cst_91 = arith.constant 7.812500e-03 : f32
    %103 = vector.broadcast %cst_91 : f32 to vector<1x128xf32>
    %104 = arith.mulf %102, %103 : vector<1x128xf32>
    %105 = arith.mulf %99, %99 : vector<1x128xf32>
    %106 = arith.subf %104, %105 : vector<1x128xf32>
    %107 = vector.broadcast %99 : vector<1x128xf32> to vector<128x128xf32>
    %108 = arith.subf %93, %107 : vector<128x128xf32>
    %cst_92 = arith.constant 9.99999974E-6 : f32
    %109 = vector.broadcast %cst_92 : f32 to vector<1x128xf32>
    %110 = arith.addf %106, %109 : vector<1x128xf32>
    %111 = math.rsqrt %110 : vector<1x128xf32>
    %112 = vector.broadcast %111 : vector<1x128xf32> to vector<128x128xf32>
    %113 = arith.mulf %108, %112 : vector<128x128xf32>
    %114 = vector.broadcast %94 : vector<1x128xf32> to vector<128x128xf32>
    %115 = arith.mulf %113, %114 : vector<128x128xf32>
    %116 = vector.broadcast %95 : vector<1x128xf32> to vector<128x128xf32>
    %117 = arith.addf %115, %116 : vector<128x128xf32>
    %118 = arith.addf %117, %0 : vector<128x128xf32>
    %cst_93 = arith.constant 0.000000e+00 : f32
    %119 = vector.broadcast %cst_93 : f32 to vector<128x128xf32>
    %120 = arith.maximumf %118, %119 : vector<128x128xf32>
    %c0_94 = arith.constant 0 : index
    %c0_95 = arith.constant 0 : index
    %121 = vector.load %arg10[%c0_94, %c0_95] : memref<128x128xf32, #tpu.memory_space<vmem>>, vector<128x128xf32>
    tpu.vector_store %arg10[%c0_94, %c0_95], %120 {strides = array<i32>} : memref<128x128xf32, #tpu.memory_space<vmem>>, vector<128x128xf32>,
    return
  }
}

</mosaic_0001>

<llo_original>
// kernel: bottleneck_forward.1
$region0: #{bottleneck_forward.1}
  #allocation0 [shape = 'u32[]', space=smem, size = 0x4, offset = 0x4, fixed_abs, tag = 'smem constant byte address 0x4 - core index']
  #allocation1 [shape = 'u32[144,128]{1,0:T(1,128)}', space=vmem, size = 0x12000, scoped, tag = 'internal scratch']
  #allocation2 [shape = 'bf16[2,10,10,128]{3,2,1,0:T(8,128)(2,1)}', space=vmem, size = 0x14000, scoped, tag = 'scratch operand']
  #allocation3 [shape = 'bf16[128,1152]{1,0:T(16,128)(2,1)}', space=vmem, size = 0x48000, scoped, tag = 'scratch operand']
  %s0 = inlined_call_operand.vmem [shape: f32[128,128], index: 0, kind: input, shape index: {}]
  %s1 = inlined_call_operand.vmem [shape: bf16[128,128], index: 1, kind: input, shape index: {}]
  %s2 = inlined_call_operand.vmem [shape: bf16[1152,128], index: 2, kind: input, shape index: {}]
  %s3 = inlined_call_operand.vmem [shape: bf16[128,128], index: 3, kind: input, shape index: {}]
  %s4 = inlined_call_operand.vmem [shape: f32[1,128], index: 4, kind: input, shape index: {}]
  %s5 = inlined_call_operand.vmem [shape: f32[1,128], index: 5, kind: input, shape index: {}]
  %s6 = inlined_call_operand.vmem [shape: f32[1,128], index: 6, kind: input, shape index: {}]
  %s7 = inlined_call_operand.vmem [shape: f32[1,128], index: 7, kind: input, shape index: {}]
  %s8 = inlined_call_operand.vmem [shape: f32[1,128], index: 8, kind: input, shape index: {}]
  %s9 = inlined_call_operand.vmem [shape: f32[1,128], index: 9, kind: input, shape index: {}]
  %s10 = inlined_call_operand.hbm [shape: f32[128,128], index: 10, kind: output, shape index: {}]
  %s11 = sld [smem:[#allocation0]]
  $region50: #{bottleneck_forward.1} parent=0
    _
  %s13 = ssub.s32 1, %s11
  %s14 = scalar_select 0, %s13, %s11
  $region1: #{bottleneck_forward.1} parent=0
    #allocation4 [shape = 'u8[65536]{0}', space=vmem, size = 0x10000, scoped, tag = 'output window, operand 0, single buffered']
    #allocation5 [shape = 's32[1]{0}', space=sflag, size = 0x4, scoped, tag = 'scoped memory for bottleneck_forward.1']
    %15 = vsyncpa [#allocation5], 0
    // Predicated region
    $region2: #{bottleneck_forward.1} parent=1 // pred_check
      _
    $region3: #{bottleneck_forward.1} parent=1 // pred_check_branch
      %17 = sbr.rel (0) target = $region5
    $region4: #{bottleneck_forward.1} parent=1 // pred_region
      _
    $region5: #{bottleneck_forward.1} parent=1 // pred_fallthru
      _
    // Predicated region
    $region6: #{bottleneck_forward.1} parent=1 // pred_check
      _
    $region7: #{bottleneck_forward.1} parent=1 // pred_check_branch
      %19 = sbr.rel (0) target = $region9
    $region8: #{bottleneck_forward.1} parent=1 // pred_region
      _
    $region9: #{bottleneck_forward.1} parent=1 // pred_fallthru
      _
    // Predicated region
    $region10: #{bottleneck_forward.1} parent=1 // pred_check
      _
    $region11: #{bottleneck_forward.1} parent=1 // pred_check_branch
      %21 = sbr.rel (0) target = $region13
    $region12: #{bottleneck_forward.1} parent=1 // pred_region
      _
    $region13: #{bottleneck_forward.1} parent=1 // pred_fallthru
      _
    // Predicated region
    $region14: #{bottleneck_forward.1} parent=1 // pred_check
      _
    $region15: #{bottleneck_forward.1} parent=1 // pred_check_branch
      %23 = sbr.rel (0) target = $region17
    $region16: #{bottleneck_forward.1} parent=1 // pred_region
      _
    $region17: #{bottleneck_forward.1} parent=1 // pred_fallthru
      _
    // Predicated region
    $region18: #{bottleneck_forward.1} parent=1 // pred_check
      _
    $region19: #{bottleneck_forward.1} parent=1 // pred_check_branch
      %25 = sbr.rel (0) target = $region21
    $region20: #{bottleneck_forward.1} parent=1 // pred_region
      _
    $region21: #{bottleneck_forward.1} parent=1 // pred_fallthru
      _
    // Predicated region
    $region22: #{bottleneck_forward.1} parent=1 // pred_check
      _
    $region23: #{bottleneck_forward.1} parent=1 // pred_check_branch
      %27 = sbr.rel (0) target = $region25
    $region24: #{bottleneck_forward.1} parent=1 // pred_region
      _
    $region25: #{bottleneck_forward.1} parent=1 // pred_fallthru
      _
    // Predicated region
    $region26: #{bottleneck_forward.1} parent=1 // pred_check
      _
    $region27: #{bottleneck_forward.1} parent=1 // pred_check_branch
      %29 = sbr.rel (0) target = $region29
    $region28: #{bottleneck_forward.1} parent=1 // pred_region
      _
    $region29: #{bottleneck_forward.1} parent=1 // pred_fallthru
      _
    // Predicated region
    $region30: #{bottleneck_forward.1} parent=1 // pred_check
      _
    $region31: #{bottleneck_forward.1} parent=1 // pred_check_branch
      %31 = sbr.rel (0) target = $region33
    $region32: #{bottleneck_forward.1} parent=1 // pred_region
      _
    $region33: #{bottleneck_forward.1} parent=1 // pred_fallthru
      _
    // Predicated region
    $region34: #{bottleneck_forward.1} parent=1 // pred_check
      _
    $region35: #{bottleneck_forward.1} parent=1 // pred_check_branch
      %33 = sbr.rel (0) target = $region37
    $region36: #{bottleneck_forward.1} parent=1 // pred_region
      _
    $region37: #{bottleneck_forward.1} parent=1 // pred_fallthru
      _
    // Predicated region
    $region38: #{bottleneck_forward.1} parent=1 // pred_check
      _
    $region39: #{bottleneck_forward.1} parent=1 // pred_check_branch
      %35 = sbr.rel (0) target = $region41
    $region40: #{bottleneck_forward.1} parent=1 // pred_region
      _
    $region41: #{bottleneck_forward.1} parent=1 // pred_fallthru
      _
    %v37 = vld [vmem:[%s0] sm:$0xff]
    %v38 = vld [vmem:[%s0 + $0x8] sm:$0xff]
    %v39 = vld [vmem:[%s0 + $0x10] sm:$0xff]
    %v40 = vld [vmem:[%s0 + $0x18] sm:$0xff]
    %v41 = vld [vmem:[%s0 + $0x20] sm:$0xff]
    %v42 = vld [vmem:[%s0 + $0x28] sm:$0xff]
    %v43 = vld [vmem:[%s0 + $0x30] sm:$0xff]
    %v44 = vld [vmem:[%s0 + $0x38] sm:$0xff]
    %v45 = vld [vmem:[%s0 + $0x40] sm:$0xff]
    %v46 = vld [vmem:[%s0 + $0x48] sm:$0xff]
    %v47 = vld [vmem:[%s0 + $0x50] sm:$0xff]
    %v48 = vld [vmem:[%s0 + $0x58] sm:$0xff]
    %v49 = vld [vmem:[%s0 + $0x60] sm:$0xff]
    %v50 = vld [vmem:[%s0 + $0x68] sm:$0xff]
    %v51 = vld [vmem:[%s0 + $0x70] sm:$0xff]
    %v52 = vld [vmem:[%s0 + $0x78] sm:$0xff]
    %v53 = vpack.c.bf16 %v38, %v37
    %v54 = vpack.c.bf16 %v40, %v39
    %v55 = vpack.c.bf16 %v42, %v41
    %v56 = vpack.c.bf16 %v44, %v43
    %v57 = vpack.c.bf16 %v46, %v45
    %v58 = vpack.c.bf16 %v48, %v47
    %v59 = vpack.c.bf16 %v50, %v49
    %v60 = vpack.c.bf16 %v52, %v51
    %v61 = vld [vmem:[%s1] sm:$0xf]
    %v62 = vld [vmem:[%s1 + $0x4] sm:$0xf]
    %v63 = vld [vmem:[%s1 + $0x8] sm:$0xf]
    %v64 = vld [vmem:[%s1 + $0xc] sm:$0xf]
    %v65 = vld [vmem:[%s1 + $0x10] sm:$0xf]
    %v66 = vld [vmem:[%s1 + $0x14] sm:$0xf]
    %v67 = vld [vmem:[%s1 + $0x18] sm:$0xf]
    %v68 = vld [vmem:[%s1 + $0x1c] sm:$0xf]
    %v69 = vld [vmem:[%s1 + $0x20] sm:$0xf]
    %v70 = vld [vmem:[%s1 + $0x24] sm:$0xf]
    %v71 = vld [vmem:[%s1 + $0x28] sm:$0xf]
    %v72 = vld [vmem:[%s1 + $0x2c] sm:$0xf]
    %v73 = vld [vmem:[%s1 + $0x30] sm:$0xf]
    %v74 = vld [vmem:[%s1 + $0x34] sm:$0xf]
    %v75 = vld [vmem:[%s1 + $0x38] sm:$0xf]
    %v76 = vld [vmem:[%s1 + $0x3c] sm:$0xf]
    %v93 = vunpack.c.l.b16 %v61
    %v94 = vunpack.c.l.b16 %v62
    %v95 = vunpack.c.l.b16 %v63
    %v96 = vunpack.c.l.b16 %v64
    %v97 = vunpack.c.l.b16 %v65
    %v98 = vunpack.c.l.b16 %v66
    %v99 = vunpack.c.l.b16 %v67
    %v100 = vunpack.c.l.b16 %v68
    %v101 = vunpack.c.l.b16 %v69
    %v102 = vunpack.c.l.b16 %v70
    %v103 = vunpack.c.l.b16 %v71
    %v104 = vunpack.c.l.b16 %v72
    %v105 = vunpack.c.l.b16 %v73
    %v106 = vunpack.c.l.b16 %v74
    %v107 = vunpack.c.l.b16 %v75
    %v108 = vunpack.c.l.b16 %v76
    %v109 = vpack.c.b16 %v94, %v93
    %v110 = vpack.c.b16 %v96, %v95
    %v111 = vpack.c.b16 %v98, %v97
    %v112 = vpack.c.b16 %v100, %v99
    %v113 = vpack.c.b16 %v102, %v101
    %v114 = vpack.c.b16 %v104, %v103
    %v115 = vpack.c.b16 %v106, %v105
    %v116 = vpack.c.b16 %v108, %v107
    %125 = vmatprep.subr.bf16.mxu0 0
    %126 = vmatpush1.bf16.msra.mxu0 %v109
    %127 = vmatprep.subr.bf16.mxu0 0
    %128 = vmatpush1.bf16.msra.mxu0 %v110
    %129 = vmatprep.subr.bf16.mxu0 0
    %130 = vmatpush1.bf16.msra.mxu0 %v111
    %131 = vmatprep.subr.bf16.mxu0 0
    %132 = vmatpush1.bf16.msra.mxu0 %v112
    %133 = vmatprep.subr.bf16.mxu0 0
    %134 = vmatpush1.bf16.msra.mxu0 %v113
    %135 = vmatprep.subr.bf16.mxu0 0
    %136 = vmatpush1.bf16.msra.mxu0 %v114
    %137 = vmatprep.subr.bf16.mxu0 0
    %138 = vmatpush1.bf16.msra.mxu0 %v115
    %139 = vmatprep.subr.bf16.mxu0 0
    %140 = vmatpush1.bf16.msra.mxu0 %v116
    %141 = vmatprep.subr.bf16.mxu0 0
    %142 = vmatpush1.bf16.msra.mxu0 0
    %143 = vmatprep.subr.bf16.mxu0 0
    %144 = vmatpush1.bf16.msra.mxu0 0
    %145 = vmatprep.subr.bf16.mxu0 0
    %146 = vmatpush1.bf16.msra.mxu0 0
    %147 = vmatprep.subr.bf16.mxu0 0
    %148 = vmatpush1.bf16.msra.mxu0 0
    %149 = vmatprep.subr.bf16.mxu0 0
    %150 = vmatpush1.bf16.msra.mxu0 0
    %151 = vmatprep.subr.bf16.mxu0 0
    %152 = vmatpush1.bf16.msra.mxu0 0
    %153 = vmatprep.subr.bf16.mxu0 0
    %154 = vmatpush1.bf16.msra.mxu0 0
    %155 = vmatprep.subr.bf16.mxu0 0
    %156 = vmatpush1.bf16.msra.mxu0 0
    %157 = vmatprep.mubr.bf16.mxu0 0
    %158 = vmatmul.mubr.bf16.gmra.mrb[0].mxu0 %v53
    %v159 = vpop.f32.mrb[0].mxu0
    %v160 = vadd.f32 0.0, %v159
    %v161 = vpop.f32.mrb[0].mxu0
    %v162 = vpop.f32.mrb[0].mxu0
    %v163 = vadd.f32 0.0, %v162
    %v164 = vpop.f32.mrb[0].mxu0
    %165 = vmatprep.mubr.bf16.mxu0 0
    %166 = vmatmul.mubr.bf16.gmra.mrb[0].mxu0 %v54
    %v167 = vpop.f32.mrb[0].mxu0
    %v168 = vadd.f32 0.0, %v167
    %v169 = vpop.f32.mrb[0].mxu0
    %v170 = vpop.f32.mrb[0].mxu0
    %v171 = vadd.f32 0.0, %v170
    %v172 = vpop.f32.mrb[0].mxu0
    %173 = vmatprep.mubr.bf16.mxu0 0
    %174 = vmatmul.mubr.bf16.gmra.mrb[0].mxu0 %v55
    %v175 = vpop.f32.mrb[0].mxu0
    %v176 = vadd.f32 0.0, %v175
    %v177 = vpop.f32.mrb[0].mxu0
    %v178 = vpop.f32.mrb[0].mxu0
    %v179 = vadd.f32 0.0, %v178
    %v180 = vpop.f32.mrb[0].mxu0
    %181 = vmatprep.mubr.bf16.mxu0 0
    %182 = vmatmul.mubr.bf16.gmra.mrb[0].mxu0 %v56
    %v183 = vpop.f32.mrb[0].mxu0
    %v184 = vadd.f32 0.0, %v183
    %v185 = vpop.f32.mrb[0].mxu0
    %v186 = vpop.f32.mrb[0].mxu0
    %v187 = vadd.f32 0.0, %v186
    %v188 = vpop.f32.mrb[0].mxu0
    %189 = vmatprep.mubr.bf16.mxu0 0
    %190 = vmatmul.mubr.bf16.gmra.mrb[0].mxu0 %v57
    %v191 = vpop.f32.mrb[0].mxu0
    %v192 = vadd.f32 0.0, %v191
    %v193 = vpop.f32.mrb[0].mxu0
    %v194 = vpop.f32.mrb[0].mxu0
    %v195 = vadd.f32 0.0, %v194
    %v196 = vpop.f32.mrb[0].mxu0
    %197 = vmatprep.mubr.bf16.mxu0 0
    %198 = vmatmul.mubr.bf16.gmra.mrb[0].mxu0 %v58
    %v199 = vpop.f32.mrb[0].mxu0
    %v200 = vadd.f32 0.0, %v199
    %v201 = vpop.f32.mrb[0].mxu0
    %v202 = vpop.f32.mrb[0].mxu0
    %v203 = vadd.f32 0.0, %v202
    %v204 = vpop.f32.mrb[0].mxu0
    %205 = vmatprep.mubr.bf16.mxu0 0
    %206 = vmatmul.mubr.bf16.gmra.mrb[0].mxu0 %v59
    %v207 = vpop.f32.mrb[0].mxu0
    %v208 = vadd.f32 0.0, %v207
    %v209 = vpop.f32.mrb[0].mxu0
    %v210 = vpop.f32.mrb[0].mxu0
    %v211 = vadd.f32 0.0, %v210
    %v212 = vpop.f32.mrb[0].mxu0
    %213 = vmatprep.mubr.bf16.mxu0 0
    %214 = vmatmul.mubr.bf16.gmra.mrb[0].mxu0 %v60
    %v215 = vpop.f32.mrb[0].mxu0
    %v216 = vadd.f32 0.0, %v215
    %v217 = vpop.f32.mrb[0].mxu0
    %v218 = vpop.f32.mrb[0].mxu0
    %v219 = vadd.f32 0.0, %v218
    %v220 = vpop.f32.mrb[0].mxu0
    %221 = vdwg.mxu0
    %v222 = vld [vmem:[%s4] sm:$0x1]
    %v223 = vld [vmem:[%s5] sm:$0x1]
    %v224 = vadd.f32 %v160, %v163
    %v225 = vadd.f32 %v224, %v168
    %v226 = vadd.f32 %v225, %v171
    %v227 = vadd.f32 %v226, %v176
    %v228 = vadd.f32 %v227, %v179
    %v229 = vadd.f32 %v228, %v184
    %v230 = vadd.f32 %v229, %v187
    %v231 = vadd.f32 %v230, %v192
    %v232 = vadd.f32 %v231, %v195
    %v233 = vadd.f32 %v232, %v200
    %v234 = vadd.f32 %v233, %v203
    %v235 = vadd.f32 %v234, %v208
    %v236 = vadd.f32 %v235, %v211
    %v237 = vadd.f32 %v236, %v216
    %v238 = vadd.f32 %v237, %v219
    %v239 = vrot.slane %v238, 4
    %v240 = vadd.f32 %v238, %v239
    %v241 = vrot.slane %v240, 2
    %v242 = vadd.f32 %v240, %v241
    %v243 = vrot.slane %v242, 1
    %v244 = vadd.f32 %v242, %v243
    %v245 = vmul.f32 %v244, 0.0078125
    %v246 = vmul.f32 %v160, %v160
    %v247 = vmul.f32 %v163, %v163
    %v248 = vmul.f32 %v168, %v168
    %v249 = vmul.f32 %v171, %v171
    %v250 = vmul.f32 %v176, %v176
    %v251 = vmul.f32 %v179, %v179
    %v252 = vmul.f32 %v184, %v184
    %v253 = vmul.f32 %v187, %v187
    %v254 = vmul.f32 %v192, %v192
    %v255 = vmul.f32 %v195, %v195
    %v256 = vmul.f32 %v200, %v200
    %v257 = vmul.f32 %v203, %v203
    %v258 = vmul.f32 %v208, %v208
    %v259 = vmul.f32 %v211, %v211
    %v260 = vmul.f32 %v216, %v216
    %v261 = vmul.f32 %v219, %v219
    %v262 = vadd.f32 %v246, %v247
    %v263 = vadd.f32 %v262, %v248
    %v264 = vadd.f32 %v263, %v249
    %v265 = vadd.f32 %v264, %v250
    %v266 = vadd.f32 %v265, %v251
    %v267 = vadd.f32 %v266, %v252
    %v268 = vadd.f32 %v267, %v253
    %v269 = vadd.f32 %v268, %v254
    %v270 = vadd.f32 %v269, %v255
    %v271 = vadd.f32 %v270, %v256
    %v272 = vadd.f32 %v271, %v257
    %v273 = vadd.f32 %v272, %v258
    %v274 = vadd.f32 %v273, %v259
    %v275 = vadd.f32 %v274, %v260
    %v276 = vadd.f32 %v275, %v261
    %v277 = vrot.slane %v276, 4
    %v278 = vadd.f32 %v276, %v277
    %v279 = vrot.slane %v278, 2
    %v280 = vadd.f32 %v278, %v279
    %v281 = vrot.slane %v280, 1
    %v282 = vadd.f32 %v280, %v281
    %v283 = vmul.f32 %v282, 0.0078125
    %v284 = vmul.f32 %v245, %v245
    %v285 = vsub.f32 %v283, %v284
    %v286 = vsub.f32 %v160, %v245
    %v287 = vsub.f32 %v163, %v245
    %v288 = vsub.f32 %v168, %v245
    %v289 = vsub.f32 %v171, %v245
    %v290 = vsub.f32 %v176, %v245
    %v291 = vsub.f32 %v179, %v245
    %v292 = vsub.f32 %v184, %v245
    %v293 = vsub.f32 %v187, %v245
    %v294 = vsub.f32 %v192, %v245
    %v295 = vsub.f32 %v195, %v245
    %v296 = vsub.f32 %v200, %v245
    %v297 = vsub.f32 %v203, %v245
    %v298 = vsub.f32 %v208, %v245
    %v299 = vsub.f32 %v211, %v245
    %v300 = vsub.f32 %v216, %v245
    %v301 = vsub.f32 %v219, %v245
    %v302 = vadd.f32 %v285, 1e-05
    %v303 = vrsqrt.pop %v302
    %v304 = vmul.f32 %v286, %v303
    %v305 = vmul.f32 %v287, %v303
    %v306 = vmul.f32 %v288, %v303
    %v307 = vmul.f32 %v289, %v303
    %v308 = vmul.f32 %v290, %v303
    %v309 = vmul.f32 %v291, %v303
    %v310 = vmul.f32 %v292, %v303
    %v311 = vmul.f32 %v293, %v303
    %v312 = vmul.f32 %v294, %v303
    %v313 = vmul.f32 %v295, %v303
    %v314 = vmul.f32 %v296, %v303
    %v315 = vmul.f32 %v297, %v303
    %v316 = vmul.f32 %v298, %v303
    %v317 = vmul.f32 %v299, %v303
    %v318 = vmul.f32 %v300, %v303
    %v319 = vmul.f32 %v301, %v303
    %v321 = vlaneseq
    %v322 = vshrl.u32 %v321, 7
    %v323 = vsub.s32 0, %v322
    %v324 = vrot.slane %v222, %v323
    %v326 = vmul.f32 %v304, %v324
    %v327 = vmul.f32 %v305, %v324
    %v328 = vmul.f32 %v306, %v324
    %v329 = vmul.f32 %v307, %v324
    %v330 = vmul.f32 %v308, %v324
    %v331 = vmul.f32 %v309, %v324
    %v332 = vmul.f32 %v310, %v324
    %v333 = vmul.f32 %v311, %v324
    %v334 = vmul.f32 %v312, %v324
    %v335 = vmul.f32 %v313, %v324
    %v336 = vmul.f32 %v314, %v324
    %v337 = vmul.f32 %v315, %v324
    %v338 = vmul.f32 %v316, %v324
    %v339 = vmul.f32 %v317, %v324
    %v340 = vmul.f32 %v318, %v324
    %v341 = vmul.f32 %v319, %v324
    %v343 = vlaneseq
    %v344 = vshrl.u32 %v343, 7
    %v345 = vsub.s32 0, %v344
    %v346 = vrot.slane %v223, %v345
    %v348 = vadd.f32 %v326, %v346
    %v349 = vadd.f32 %v327, %v346
    %v350 = vadd.f32 %v328, %v346
    %v351 = vadd.f32 %v329, %v346
    %v352 = vadd.f32 %v330, %v346
    %v353 = vadd.f32 %v331, %v346
    %v354 = vadd.f32 %v332, %v346
    %v355 = vadd.f32 %v333, %v346
    %v356 = vadd.f32 %v334, %v346
    %v357 = vadd.f32 %v335, %v346
    %v358 = vadd.f32 %v336, %v346
    %v359 = vadd.f32 %v337, %v346
    %v360 = vadd.f32 %v338, %v346
    %v361 = vadd.f32 %v339, %v346
    %v362 = vadd.f32 %v340, %v346
    %v363 = vadd.f32 %v341, %v346
    %v364 = vmax.f32 %v348, 0.0
    %v365 = vmax.f32 %v349, 0.0
    %v366 = vmax.f32 %v350, 0.0
    %v367 = vmax.f32 %v351, 0.0
    %v368 = vmax.f32 %v352, 0.0
    %v369 = vmax.f32 %v353, 0.0
    %v370 = vmax.f32 %v354, 0.0
    %v371 = vmax.f32 %v355, 0.0
    %v372 = vmax.f32 %v356, 0.0
    %v373 = vmax.f32 %v357, 0.0
    %v374 = vmax.f32 %v358, 0.0
    %v375 = vmax.f32 %v359, 0.0
    %v376 = vmax.f32 %v360, 0.0
    %v377 = vmax.f32 %v361, 0.0
    %v378 = vmax.f32 %v362, 0.0
    %v379 = vmax.f32 %v363, 0.0
    %380 = vst [vmem:[#allocation2] sm:$0xf] 0
    %381 = vst [vmem:[#allocation2 + $0x4] sm:$0x1] 0
    %382 = vst [vmem:[#allocation2 + $0x8] sm:$0xf] 0
    %383 = vst [vmem:[#allocation2 + $0xc] sm:$0x1] 0
    %384 = vst [vmem:[#allocation2 + $0x10] sm:$0xf] 0
    %385 = vst [vmem:[#allocation2 + $0x14] sm:$0x1] 0
    %386 = vst [vmem:[#allocation2 + $0x18] sm:$0xf] 0
    %387 = vst [vmem:[#allocation2 + $0x1c] sm:$0x1] 0
    %388 = vst [vmem:[#allocation2 + $0x20] sm:$0xf] 0
    %389 = vst [vmem:[#allocation2 + $0x24] sm:$0x1] 0
    %390 = vst [vmem:[#allocation2 + $0x28] sm:$0xf] 0
    %391 = vst [vmem:[#allocation2 + $0x2c] sm:$0x1] 0
    %392 = vst [vmem:[#allocation2 + $0x30] sm:$0xf] 0
    %393 = vst [vmem:[#allocation2 + $0x34] sm:$0x1] 0
    %394 = vst [vmem:[#allocation2 + $0x38] sm:$0xf] 0
    %395 = vst [vmem:[#allocation2 + $0x3c] sm:$0x1] 0
    %396 = vst [vmem:[#allocation2 + $0x40] sm:$0xf] 0
    %397 = vst [vmem:[#allocation2 + $0x44] sm:$0x1] 0
    %398 = vst [vmem:[#allocation2 + $0x48] sm:$0xf] 0
    %399 = vst [vmem:[#allocation2 + $0x4c] sm:$0x1] 0
    %400 = vst [vmem:[#allocation2 + $0x50] sm:$0xf] 0
    %401 = vst [vmem:[#allocation2 + $0x54] sm:$0x1] 0
    %402 = vst [vmem:[#allocation2 + $0x58] sm:$0xf] 0
    %403 = vst [vmem:[#allocation2 + $0x5c] sm:$0x1] 0
    %404 = vst [vmem:[#allocation2 + $0x60] sm:$0xf] 0
    %405 = vst [vmem:[#allocation2 + $0x64] sm:$0x1] 0
    %406 = vst [vmem:[#allocation2 + $0x68] sm:$0xf] 0
    %407 = vst [vmem:[#allocation2 + $0x6c] sm:$0x1] 0
    %408 = vst [vmem:[#allocation2 + $0x70] sm:$0xf] 0
    %409 = vst [vmem:[#allocation2 + $0x74] sm:$0x1] 0
    %410 = vst [vmem:[#allocation2 + $0x78] sm:$0xf] 0
    %411 = vst [vmem:[#allocation2 + $0x7c] sm:$0x1] 0
    %412 = vst [vmem:[#allocation2 + $0x80] sm:$0xf] 0
    %413 = vst [vmem:[#allocation2 + $0x84] sm:$0x1] 0
    %414 = vst [vmem:[#allocation2 + $0x88] sm:$0xf] 0
    %415 = vst [vmem:[#allocation2 + $0x8c] sm:$0x1] 0
    %416 = vst [vmem:[#allocation2 + $0x90] sm:$0xf] 0
    %417 = vst [vmem:[#allocation2 + $0x94] sm:$0x1] 0
    %418 = vst [vmem:[#allocation2 + $0x98] sm:$0xf] 0
    %419 = vst [vmem:[#allocation2 + $0x9c] sm:$0x1] 0
    %v420 = vpack.c.bf16 %v365, %v364
    %v421 = vpack.c.bf16 %v367, %v366
    %v422 = vpack.c.bf16 %v369, %v368
    %v423 = vpack.c.bf16 %v371, %v370
    %v424 = vpack.c.bf16 %v373, %v372
    %v425 = vpack.c.bf16 %v375, %v374
    %v426 = vpack.c.bf16 %v377, %v376
    %v427 = vpack.c.bf16 %v379, %v378
    %v436 = vunpack.c.l.b16 %v420
    %v437 = vunpack.c.h.b16 %v420
    %v438 = vunpack.c.l.b16 %v421
    %v439 = vunpack.c.h.b16 %v421
    %v440 = vunpack.c.l.b16 %v422
    %v441 = vunpack.c.h.b16 %v422
    %v442 = vunpack.c.l.b16 %v423
    %v443 = vunpack.c.h.b16 %v423
    %v444 = vunpack.c.l.b16 %v424
    %v445 = vunpack.c.h.b16 %v424
    %v446 = vunpack.c.l.b16 %v425
    %v447 = vunpack.c.h.b16 %v425
    %v448 = vunpack.c.l.b16 %v426
    %v449 = vunpack.c.h.b16 %v426
    %v450 = vunpack.c.l.b16 %v427
    %v451 = vunpack.c.h.b16 %v427
    %v452 = vpack.c.b16 %v436, %v436
    %v453 = vpack.c.b16 %v437, %v437
    %v454 = vpack.c.b16 %v438, %v438
    %v455 = vpack.c.b16 %v439, %v439
    %v456 = vpack.c.b16 %v440, %v440
    %v457 = vpack.c.b16 %v441, %v441
    %v458 = vpack.c.b16 %v442, %v442
    %v459 = vpack.c.b16 %v443, %v443
    %v460 = vpack.c.b16 %v444, %v444
    %v461 = vpack.c.b16 %v445, %v445
    %v462 = vpack.c.b16 %v446, %v446
    %v463 = vpack.c.b16 %v447, %v447
    %v464 = vpack.c.b16 %v448, %v448
    %v465 = vpack.c.b16 %v449, %v449
    %v466 = vpack.c.b16 %v450, %v450
    %v467 = vpack.c.b16 %v451, %v451
    %v469 = vshrl.u32 %v452, 16
    %v471 = vrot.slane %v469, 7
    %v472 = vshll.u32 %v452, 16
    %v474 = vor.u32 %v471, %v472
    %v475 = vrot.slane %v471, 4
    %v477 = vshrl.u32 %v453, 16
    %v479 = vrot.slane %v477, 7
    %v480 = vshll.u32 %v453, 16
    %v482 = vor.u32 %v479, %v480
    %v483 = vrot.slane %v479, 4
    %v485 = vshrl.u32 %v454, 16
    %v487 = vrot.slane %v485, 7
    %v488 = vshll.u32 %v454, 16
    %v490 = vor.u32 %v487, %v488
    %v491 = vrot.slane %v487, 4
    %v493 = vshrl.u32 %v455, 16
    %v495 = vrot.slane %v493, 7
    %v496 = vshll.u32 %v455, 16
    %v498 = vor.u32 %v495, %v496
    %v499 = vrot.slane %v495, 4
    %v501 = vshrl.u32 %v456, 16
    %v503 = vrot.slane %v501, 7
    %v504 = vshll.u32 %v456, 16
    %v506 = vor.u32 %v503, %v504
    %v507 = vrot.slane %v503, 4
    %v509 = vshrl.u32 %v457, 16
    %v511 = vrot.slane %v509, 7
    %v512 = vshll.u32 %v457, 16
    %v514 = vor.u32 %v511, %v512
    %v515 = vrot.slane %v511, 4
    %v517 = vshrl.u32 %v458, 16
    %v519 = vrot.slane %v517, 7
    %v520 = vshll.u32 %v458, 16
    %v522 = vor.u32 %v519, %v520
    %v523 = vrot.slane %v519, 4
    %v525 = vshrl.u32 %v459, 16
    %v527 = vrot.slane %v525, 7
    %v528 = vshll.u32 %v459, 16
    %v530 = vor.u32 %v527, %v528
    %v531 = vrot.slane %v527, 4
    %v533 = vshrl.u32 %v460, 16
    %v535 = vrot.slane %v533, 7
    %v536 = vshll.u32 %v460, 16
    %v538 = vor.u32 %v535, %v536
    %v539 = vrot.slane %v535, 4
    %v541 = vshrl.u32 %v461, 16
    %v543 = vrot.slane %v541, 7
    %v544 = vshll.u32 %v461, 16
    %v546 = vor.u32 %v543, %v544
    %v547 = vrot.slane %v543, 4
    %v549 = vshrl.u32 %v462, 16
    %v551 = vrot.slane %v549, 7
    %v552 = vshll.u32 %v462, 16
    %v554 = vor.u32 %v551, %v552
    %v555 = vrot.slane %v551, 4
    %v557 = vshrl.u32 %v463, 16
    %v559 = vrot.slane %v557, 7
    %v560 = vshll.u32 %v463, 16
    %v562 = vor.u32 %v559, %v560
    %v563 = vrot.slane %v559, 4
    %v565 = vshrl.u32 %v464, 16
    %v567 = vrot.slane %v565, 7
    %v568 = vshll.u32 %v464, 16
    %v570 = vor.u32 %v567, %v568
    %v571 = vrot.slane %v567, 4
    %v573 = vshrl.u32 %v465, 16
    %v575 = vrot.slane %v573, 7
    %v576 = vshll.u32 %v465, 16
    %v578 = vor.u32 %v575, %v576
    %v579 = vrot.slane %v575, 4
    %v581 = vshrl.u32 %v466, 16
    %v583 = vrot.slane %v581, 7
    %v584 = vshll.u32 %v466, 16
    %v586 = vor.u32 %v583, %v584
    %v587 = vrot.slane %v583, 4
    %v589 = vshrl.u32 %v467, 16
    %v591 = vrot.slane %v589, 7
    %v592 = vshll.u32 %v467, 16
    %v594 = vor.u32 %v591, %v592
    %v595 = vrot.slane %v591, 4
    %s628 = scalar_lea.vmem [#allocation2], 8
    %vm629 = vcmask 1043456
    %vm630 = vsmask.f32 7938
    %vm631 = vmand %vm629, %vm630
    %v632 = vld [vmem:[%s628] sm:$0xf]
    %v633 = vsel %vm631, %v474, %v632
    %634 = vst [vmem:[%s628] sm:$0xf] %v633
    %vm635 = vcmask 1040384
    %vm636 = vsmask.f32 256
    %vm637 = vmand %vm635, %vm636
    %v638 = vld [vmem:[%s628 + $0x4] sm:$0x1]
    %v639 = vsel %vm637, %v475, %v638
    %640 = vst [vmem:[%s628 + $0x4] sm:$0x1] %v639
    %v641 = vld [vmem:[%s628 + $0x8] sm:$0xf]
    %v642 = vsel %vm631, %v482, %v641
    %643 = vst [vmem:[%s628 + $0x8] sm:$0xf] %v642
    %v644 = vld [vmem:[%s628 + $0xc] sm:$0x1]
    %v645 = vsel %vm637, %v483, %v644
    %646 = vst [vmem:[%s628 + $0xc] sm:$0x1] %v645
    %v647 = vld [vmem:[%s628 + $0x10] sm:$0xf]
    %v648 = vsel %vm631, %v490, %v647
    %649 = vst [vmem:[%s628 + $0x10] sm:$0xf] %v648
    %v650 = vld [vmem:[%s628 + $0x14] sm:$0x1]
    %v651 = vsel %vm637, %v491, %v650
    %652 = vst [vmem:[%s628 + $0x14] sm:$0x1] %v651
    %v653 = vld [vmem:[%s628 + $0x18] sm:$0xf]
    %v654 = vsel %vm631, %v498, %v653
    %655 = vst [vmem:[%s628 + $0x18] sm:$0xf] %v654
    %v656 = vld [vmem:[%s628 + $0x1c] sm:$0x1]
    %v657 = vsel %vm637, %v499, %v656
    %658 = vst [vmem:[%s628 + $0x1c] sm:$0x1] %v657
    %v659 = vld [vmem:[%s628 + $0x20] sm:$0xf]
    %v660 = vsel %vm631, %v506, %v659
    %661 = vst [vmem:[%s628 + $0x20] sm:$0xf] %v660
    %v662 = vld [vmem:[%s628 + $0x24] sm:$0x1]
    %v663 = vsel %vm637, %v507, %v662
    %664 = vst [vmem:[%s628 + $0x24] sm:$0x1] %v663
    %v665 = vld [vmem:[%s628 + $0x28] sm:$0xf]
    %v666 = vsel %vm631, %v514, %v665
    %667 = vst [vmem:[%s628 + $0x28] sm:$0xf] %v666
    %v668 = vld [vmem:[%s628 + $0x2c] sm:$0x1]
    %v669 = vsel %vm637, %v515, %v668
    %670 = vst [vmem:[%s628 + $0x2c] sm:$0x1] %v669
    %v671 = vld [vmem:[%s628 + $0x30] sm:$0xf]
    %v672 = vsel %vm631, %v522, %v671
    %673 = vst [vmem:[%s628 + $0x30] sm:$0xf] %v672
    %v674 = vld [vmem:[%s628 + $0x34] sm:$0x1]
    %v675 = vsel %vm637, %v523, %v674
    %676 = vst [vmem:[%s628 + $0x34] sm:$0x1] %v675
    %v677 = vld [vmem:[%s628 + $0x38] sm:$0xf]
    %v678 = vsel %vm631, %v530, %v677
    %679 = vst [vmem:[%s628 + $0x38] sm:$0xf] %v678
    %v680 = vld [vmem:[%s628 + $0x3c] sm:$0x1]
    %v681 = vsel %vm637, %v531, %v680
    %682 = vst [vmem:[%s628 + $0x3c] sm:$0x1] %v681
    %v683 = vld [vmem:[%s628 + $0x50] sm:$0xf]
    %v684 = vsel %vm631, %v538, %v683
    %685 = vst [vmem:[%s628 + $0x50] sm:$0xf] %v684
    %v686 = vld [vmem:[%s628 + $0x54] sm:$0x1]
    %v687 = vsel %vm637, %v539, %v686
    %688 = vst [vmem:[%s628 + $0x54] sm:$0x1] %v687
    %v689 = vld [vmem:[%s628 + $0x58] sm:$0xf]
    %v690 = vsel %vm631, %v546, %v689
    %691 = vst [vmem:[%s628 + $0x58] sm:$0xf] %v690
    %v692 = vld [vmem:[%s628 + $0x5c] sm:$0x1]
    %v693 = vsel %vm637, %v547, %v692
    %694 = vst [vmem:[%s628 + $0x5c] sm:$0x1] %v693
    %v695 = vld [vmem:[%s628 + $0x60] sm:$0xf]
    %v696 = vsel %vm631, %v554, %v695
    %697 = vst [vmem:[%s628 + $0x60] sm:$0xf] %v696
    %v698 = vld [vmem:[%s628 + $0x64] sm:$0x1]
    %v699 = vsel %vm637, %v555, %v698
    %700 = vst [vmem:[%s628 + $0x64] sm:$0x1] %v699
    %v701 = vld [vmem:[%s628 + $0x68] sm:$0xf]
    %v702 = vsel %vm631, %v562, %v701
    %703 = vst [vmem:[%s628 + $0x68] sm:$0xf] %v702
    %v704 = vld [vmem:[%s628 + $0x6c] sm:$0x1]
    %v705 = vsel %vm637, %v563, %v704
    %706 = vst [vmem:[%s628 + $0x6c] sm:$0x1] %v705
    %v707 = vld [vmem:[%s628 + $0x70] sm:$0xf]
    %v708 = vsel %vm631, %v570, %v707
    %709 = vst [vmem:[%s628 + $0x70] sm:$0xf] %v708
    %v710 = vld [vmem:[%s628 + $0x74] sm:$0x1]
    %v711 = vsel %vm637, %v571, %v710
    %712 = vst [vmem:[%s628 + $0x74] sm:$0x1] %v711
    %v713 = vld [vmem:[%s628 + $0x78] sm:$0xf]
    %v714 = vsel %vm631, %v578, %v713
    %715 = vst [vmem:[%s628 + $0x78] sm:$0xf] %v714
    %v716 = vld [vmem:[%s628 + $0x7c] sm:$0x1]
    %v717 = vsel %vm637, %v579, %v716
    %718 = vst [vmem:[%s628 + $0x7c] sm:$0x1] %v717
    %v719 = vld [vmem:[%s628 + $0x80] sm:$0xf]
    %v720 = vsel %vm631, %v586, %v719
    %721 = vst [vmem:[%s628 + $0x80] sm:$0xf] %v720
    %v722 = vld [vmem:[%s628 + $0x84] sm:$0x1]
    %v723 = vsel %vm637, %v587, %v722
    %724 = vst [vmem:[%s628 + $0x84] sm:$0x1] %v723
    %v725 = vld [vmem:[%s628 + $0x88] sm:$0xf]
    %v726 = vsel %vm631, %v594, %v725
    %727 = vst [vmem:[%s628 + $0x88] sm:$0xf] %v726
    %v728 = vld [vmem:[%s628 + $0x8c] sm:$0x1]
    %v729 = vsel %vm637, %v595, %v728
    %730 = vst [vmem:[%s628 + $0x8c] sm:$0x1] %v729
    %v731 = vld [vmem:[#allocation2] sm:$0xf]
    %v732 = vld [vmem:[#allocation2 + $0x8] sm:$0xf]
    %v733 = vld [vmem:[#allocation2 + $0x10] sm:$0xf]
    %v734 = vld [vmem:[#allocation2 + $0x18] sm:$0xf]
    %v735 = vld [vmem:[#allocation2 + $0x20] sm:$0xf]
    %v736 = vld [vmem:[#allocation2 + $0x28] sm:$0xf]
    %v737 = vld [vmem:[#allocation2 + $0x30] sm:$0xf]
    %v738 = vld [vmem:[#allocation2 + $0x38] sm:$0xf]
    %v739 = vld [vmem:[#allocation2 + $0x50] sm:$0xf]
    %v740 = vld [vmem:[#allocation2 + $0x58] sm:$0xf]
    %v741 = vld [vmem:[#allocation2 + $0x60] sm:$0xf]
    %v742 = vld [vmem:[#allocation2 + $0x68] sm:$0xf]
    %v743 = vld [vmem:[#allocation2 + $0x70] sm:$0xf]
    %v744 = vld [vmem:[#allocation2 + $0x78] sm:$0xf]
    %v745 = vld [vmem:[#allocation2 + $0x80] sm:$0xf]
    %v746 = vld [vmem:[#allocation2 + $0x88] sm:$0xf]
    %v763 = vunpack.c.l.b16 %v731
    %v764 = vunpack.c.l.b16 %v732
    %v765 = vunpack.c.l.b16 %v733
    %v766 = vunpack.c.l.b16 %v734
    %v767 = vunpack.c.l.b16 %v735
    %v768 = vunpack.c.l.b16 %v736
    %v769 = vunpack.c.l.b16 %v737
    %v770 = vunpack.c.l.b16 %v738
    %v771 = vunpack.c.l.b16 %v739
    %v772 = vunpack.c.l.b16 %v740
    %v773 = vunpack.c.l.b16 %v741
    %v774 = vunpack.c.l.b16 %v742
    %v775 = vunpack.c.l.b16 %v743
    %v776 = vunpack.c.l.b16 %v744
    %v777 = vunpack.c.l.b16 %v745
    %v778 = vunpack.c.l.b16 %v746
    %v779 = vpack.c.b16 %v764, %v763
    %v780 = vpack.c.b16 %v766, %v765
    %v781 = vpack.c.b16 %v768, %v767
    %v782 = vpack.c.b16 %v770, %v769
    %v783 = vpack.c.b16 %v772, %v771
    %v784 = vpack.c.b16 %v774, %v773
    %v785 = vpack.c.b16 %v776, %v775
    %v786 = vpack.c.b16 %v778, %v777
    %795 = vst [vmem:[#allocation3] sm:$0xff] %v779
    %796 = vst [vmem:[#allocation3 + $0x48] sm:$0xff] %v780
    %797 = vst [vmem:[#allocation3 + $0x90] sm:$0xff] %v781
    %798 = vst [vmem:[#allocation3 + $0xd8] sm:$0xff] %v782
    %799 = vst [vmem:[#allocation3 + $0x120] sm:$0xff] %v783
    %800 = vst [vmem:[#allocation3 + $0x168] sm:$0xff] %v784
    %801 = vst [vmem:[#allocation3 + $0x1b0] sm:$0xff] %v785
    %802 = vst [vmem:[#allocation3 + $0x1f8] sm:$0xff] %v786
    %v803 = vld [vmem:[#allocation2] sm:$0xf]
    %v804 = vld [vmem:[#allocation2 + $0x4] sm:$0x1]
    %v805 = vld [vmem:[#allocation2 + $0x8] sm:$0xf]
    %v806 = vld [vmem:[#allocation2 + $0xc] sm:$0x1]
    %v807 = vld [vmem:[#allocation2 + $0x10] sm:$0xf]
    %v808 = vld [vmem:[#allocation2 + $0x14] sm:$0x1]
    %v809 = vld [vmem:[#allocation2 + $0x18] sm:$0xf]
    %v810 = vld [vmem:[#allocation2 + $0x1c] sm:$0x1]
    %v811 = vld [vmem:[#allocation2 + $0x20] sm:$0xf]
    %v812 = vld [vmem:[#allocation2 + $0x24] sm:$0x1]
    %v813 = vld [vmem:[#allocation2 + $0x28] sm:$0xf]
    %v814 = vld [vmem:[#allocation2 + $0x2c] sm:$0x1]
    %v815 = vld [vmem:[#allocation2 + $0x30] sm:$0xf]
    %v816 = vld [vmem:[#allocation2 + $0x34] sm:$0x1]
    %v817 = vld [vmem:[#allocation2 + $0x38] sm:$0xf]
    %v818 = vld [vmem:[#allocation2 + $0x3c] sm:$0x1]
    %v819 = vld [vmem:[#allocation2 + $0x50] sm:$0xf]
    %v820 = vld [vmem:[#allocation2 + $0x54] sm:$0x1]
    %v821 = vld [vmem:[#allocation2 + $0x58] sm:$0xf]
    %v822 = vld [vmem:[#allocation2 + $0x5c] sm:$0x1]
    %v823 = vld [vmem:[#allocation2 + $0x60] sm:$0xf]
    %v824 = vld [vmem:[#allocation2 + $0x64] sm:$0x1]
    %v825 = vld [vmem:[#allocation2 + $0x68] sm:$0xf]
    %v826 = vld [vmem:[#allocation2 + $0x6c] sm:$0x1]
    %v827 = vld [vmem:[#allocation2 + $0x70] sm:$0xf]
    %v828 = vld [vmem:[#allocation2 + $0x74] sm:$0x1]
    %v829 = vld [vmem:[#allocation2 + $0x78] sm:$0xf]
    %v830 = vld [vmem:[#allocation2 + $0x7c] sm:$0x1]
    %v831 = vld [vmem:[#allocation2 + $0x80] sm:$0xf]
    %v832 = vld [vmem:[#allocation2 + $0x84] sm:$0x1]
    %v833 = vld [vmem:[#allocation2 + $0x88] sm:$0xf]
    %v834 = vld [vmem:[#allocation2 + $0x8c] sm:$0x1]
    %vm835 = vsmask.f32 3328
    %vm836 = vsmask.f32 7440
    %vm837 = vmor %vm835, %vm836
    %v839 = vshrl.u32 %v803, 16
    %v841 = vrot.slane %v839, 4
    %v842 = vshll.u32 %v803, 16
    %v844 = vrot.slane %v842, 5
    %v845 = vor.u32 %v841, %v844
    %v846 = vrot.slane %v845, 4
    %v848 = vshll.u32 %v804, 16
    %v850 = vrot.slane %v848, 5
    %v851 = vsel %vm837, %v846, %v850
    %v853 = vshrl.u32 %v805, 16
    %v855 = vrot.slane %v853, 4
    %v856 = vshll.u32 %v805, 16
    %v858 = vrot.slane %v856, 5
    %v859 = vor.u32 %v855, %v858
    %v860 = vrot.slane %v859, 4
    %v862 = vshll.u32 %v806, 16
    %v864 = vrot.slane %v862, 5
    %v865 = vsel %vm837, %v860, %v864
    %v867 = vshrl.u32 %v807, 16
    %v869 = vrot.slane %v867, 4
    %v870 = vshll.u32 %v807, 16
    %v872 = vrot.slane %v870, 5
    %v873 = vor.u32 %v869, %v872
    %v874 = vrot.slane %v873, 4
    %v876 = vshll.u32 %v808, 16
    %v878 = vrot.slane %v876, 5
    %v879 = vsel %vm837, %v874, %v878
    %v881 = vshrl.u32 %v809, 16
    %v883 = vrot.slane %v881, 4
    %v884 = vshll.u32 %v809, 16
    %v886 = vrot.slane %v884, 5
    %v887 = vor.u32 %v883, %v886
    %v888 = vrot.slane %v887, 4
    %v890 = vshll.u32 %v810, 16
    %v892 = vrot.slane %v890, 5
    %v893 = vsel %vm837, %v888, %v892
    %v895 = vshrl.u32 %v811, 16
    %v897 = vrot.slane %v895, 4
    %v898 = vshll.u32 %v811, 16
    %v900 = vrot.slane %v898, 5
    %v901 = vor.u32 %v897, %v900
    %v902 = vrot.slane %v901, 4
    %v904 = vshll.u32 %v812, 16
    %v906 = vrot.slane %v904, 5
    %v907 = vsel %vm837, %v902, %v906
    %v909 = vshrl.u32 %v813, 16
    %v911 = vrot.slane %v909, 4
    %v912 = vshll.u32 %v813, 16
    %v914 = vrot.slane %v912, 5
    %v915 = vor.u32 %v911, %v914
    %v916 = vrot.slane %v915, 4
    %v918 = vshll.u32 %v814, 16
    %v920 = vrot.slane %v918, 5
    %v921 = vsel %vm837, %v916, %v920
    %v923 = vshrl.u32 %v815, 16
    %v925 = vrot.slane %v923, 4
    %v926 = vshll.u32 %v815, 16
    %v928 = vrot.slane %v926, 5
    %v929 = vor.u32 %v925, %v928
    %v930 = vrot.slane %v929, 4
    %v932 = vshll.u32 %v816, 16
    %v934 = vrot.slane %v932, 5
    %v935 = vsel %vm837, %v930, %v934
    %v937 = vshrl.u32 %v817, 16
    %v939 = vrot.slane %v937, 4
    %v940 = vshll.u32 %v817, 16
    %v942 = vrot.slane %v940, 5
    %v943 = vor.u32 %v939, %v942
    %v944 = vrot.slane %v943, 4
    %v946 = vshll.u32 %v818, 16
    %v948 = vrot.slane %v946, 5
    %v949 = vsel %vm837, %v944, %v948
    %v951 = vshrl.u32 %v819, 16
    %v953 = vrot.slane %v951, 4
    %v954 = vshll.u32 %v819, 16
    %v956 = vrot.slane %v954, 5
    %v957 = vor.u32 %v953, %v956
    %v958 = vrot.slane %v957, 4
    %v960 = vshll.u32 %v820, 16
    %v962 = vrot.slane %v960, 5
    %v963 = vsel %vm837, %v958, %v962
    %v965 = vshrl.u32 %v821, 16
    %v967 = vrot.slane %v965, 4
    %v968 = vshll.u32 %v821, 16
    %v970 = vrot.slane %v968, 5
    %v971 = vor.u32 %v967, %v970
    %v972 = vrot.slane %v971, 4
    %v974 = vshll.u32 %v822, 16
    %v976 = vrot.slane %v974, 5
    %v977 = vsel %vm837, %v972, %v976
    %v979 = vshrl.u32 %v823, 16
    %v981 = vrot.slane %v979, 4
    %v982 = vshll.u32 %v823, 16
    %v984 = vrot.slane %v982, 5
    %v985 = vor.u32 %v981, %v984
    %v986 = vrot.slane %v985, 4
    %v988 = vshll.u32 %v824, 16
    %v990 = vrot.slane %v988, 5
    %v991 = vsel %vm837, %v986, %v990
    %v993 = vshrl.u32 %v825, 16
    %v995 = vrot.slane %v993, 4
    %v996 = vshll.u32 %v825, 16
    %v998 = vrot.slane %v996, 5
    %v999 = vor.u32 %v995, %v998
    %v1000 = vrot.slane %v999, 4
    %v1002 = vshll.u32 %v826, 16
    %v1004 = vrot.slane %v1002, 5
    %v1005 = vsel %vm837, %v1000, %v1004
    %v1007 = vshrl.u32 %v827, 16
    %v1009 = vrot.slane %v1007, 4
    %v1010 = vshll.u32 %v827, 16
    %v1012 = vrot.slane %v1010, 5
    %v1013 = vor.u32 %v1009, %v1012
    %v1014 = vrot.slane %v1013, 4
    %v1016 = vshll.u32 %v828, 16
    %v1018 = vrot.slane %v1016, 5
    %v1019 = vsel %vm837, %v1014, %v1018
    %v1021 = vshrl.u32 %v829, 16
    %v1023 = vrot.slane %v1021, 4
    %v1024 = vshll.u32 %v829, 16
    %v1026 = vrot.slane %v1024, 5
    %v1027 = vor.u32 %v1023, %v1026
    %v1028 = vrot.slane %v1027, 4
    %v1030 = vshll.u32 %v830, 16
    %v1032 = vrot.slane %v1030, 5
    %v1033 = vsel %vm837, %v1028, %v1032
    %v1035 = vshrl.u32 %v831, 16
    %v1037 = vrot.slane %v1035, 4
    %v1038 = vshll.u32 %v831, 16
    %v1040 = vrot.slane %v1038, 5
    %v1041 = vor.u32 %v1037, %v1040
    %v1042 = vrot.slane %v1041, 4
    %v1044 = vshll.u32 %v832, 16
    %v1046 = vrot.slane %v1044, 5
    %v1047 = vsel %vm837, %v1042, %v1046
    %v1049 = vshrl.u32 %v833, 16
    %v1051 = vrot.slane %v1049, 4
    %v1052 = vshll.u32 %v833, 16
    %v1054 = vrot.slane %v1052, 5
    %v1055 = vor.u32 %v1051, %v1054
    %v1056 = vrot.slane %v1055, 4
    %v1058 = vshll.u32 %v834, 16
    %v1060 = vrot.slane %v1058, 5
    %v1061 = vsel %vm837, %v1056, %v1060
    %v1062 = vunpack.c.l.b16 %v851
    %v1063 = vunpack.c.l.b16 %v865
    %v1064 = vunpack.c.l.b16 %v879
    %v1065 = vunpack.c.l.b16 %v893
    %v1066 = vunpack.c.l.b16 %v907
    %v1067 = vunpack.c.l.b16 %v921
    %v1068 = vunpack.c.l.b16 %v935
    %v1069 = vunpack.c.l.b16 %v949
    %v1070 = vunpack.c.l.b16 %v963
    %v1071 = vunpack.c.l.b16 %v977
    %v1072 = vunpack.c.l.b16 %v991
    %v1073 = vunpack.c.l.b16 %v1005
    %v1074 = vunpack.c.l.b16 %v1019
    %v1075 = vunpack.c.l.b16 %v1033
    %v1076 = vunpack.c.l.b16 %v1047
    %v1077 = vunpack.c.l.b16 %v1061
    %v1078 = vpack.c.b16 %v1063, %v1062
    %v1079 = vpack.c.b16 %v1065, %v1064
    %v1080 = vpack.c.b16 %v1067, %v1066
    %v1081 = vpack.c.b16 %v1069, %v1068
    %v1082 = vpack.c.b16 %v1071, %v1070
    %v1083 = vpack.c.b16 %v1073, %v1072
    %v1084 = vpack.c.b16 %v1075, %v1074
    %v1085 = vpack.c.b16 %v1077, %v1076
    %1094 = vst [vmem:[#allocation3 + $0x8] sm:$0xff] %v1078
    %1095 = vst [vmem:[#allocation3 + $0x50] sm:$0xff] %v1079
    %1096 = vst [vmem:[#allocation3 + $0x98] sm:$0xff] %v1080
    %1097 = vst [vmem:[#allocation3 + $0xe0] sm:$0xff] %v1081
    %1098 = vst [vmem:[#allocation3 + $0x128] sm:$0xff] %v1082
    %1099 = vst [vmem:[#allocation3 + $0x170] sm:$0xff] %v1083
    %1100 = vst [vmem:[#allocation3 + $0x1b8] sm:$0xff] %v1084
    %1101 = vst [vmem:[#allocation3 + $0x200] sm:$0xff] %v1085
    %v1102 = vld [vmem:[#allocation2] sm:$0xe]
    %v1103 = vld [vmem:[#allocation2 + $0x4] sm:$0x1]
    %v1104 = vld [vmem:[#allocation2 + $0x8] sm:$0xe]
    %v1105 = vld [vmem:[#allocation2 + $0xc] sm:$0x1]
    %v1106 = vld [vmem:[#allocation2 + $0x10] sm:$0xe]
    %v1107 = vld [vmem:[#allocation2 + $0x14] sm:$0x1]
    %v1108 = vld [vmem:[#allocation2 + $0x18] sm:$0xe]
    %v1109 = vld [vmem:[#allocation2 + $0x1c] sm:$0x1]
    %v1110 = vld [vmem:[#allocation2 + $0x20] sm:$0xe]
    %v1111 = vld [vmem:[#allocation2 + $0x24] sm:$0x1]
    %v1112 = vld [vmem:[#allocation2 + $0x28] sm:$0xe]
    %v1113 = vld [vmem:[#allocation2 + $0x2c] sm:$0x1]
    %v1114 = vld [vmem:[#allocation2 + $0x30] sm:$0xe]
    %v1115 = vld [vmem:[#allocation2 + $0x34] sm:$0x1]
    %v1116 = vld [vmem:[#allocation2 + $0x38] sm:$0xe]
    %v1117 = vld [vmem:[#allocation2 + $0x3c] sm:$0x1]
    %v1118 = vld [vmem:[#allocation2 + $0x50] sm:$0xe]
    %v1119 = vld [vmem:[#allocation2 + $0x54] sm:$0x1]
    %v1120 = vld [vmem:[#allocation2 + $0x58] sm:$0xe]
    %v1121 = vld [vmem:[#allocation2 + $0x5c] sm:$0x1]
    %v1122 = vld [vmem:[#allocation2 + $0x60] sm:$0xe]
    %v1123 = vld [vmem:[#allocation2 + $0x64] sm:$0x1]
    %v1124 = vld [vmem:[#allocation2 + $0x68] sm:$0xe]
    %v1125 = vld [vmem:[#allocation2 + $0x6c] sm:$0x1]
    %v1126 = vld [vmem:[#allocation2 + $0x70] sm:$0xe]
    %v1127 = vld [vmem:[#allocation2 + $0x74] sm:$0x1]
    %v1128 = vld [vmem:[#allocation2 + $0x78] sm:$0xe]
    %v1129 = vld [vmem:[#allocation2 + $0x7c] sm:$0x1]
    %v1130 = vld [vmem:[#allocation2 + $0x80] sm:$0xe]
    %v1131 = vld [vmem:[#allocation2 + $0x84] sm:$0x1]
    %v1132 = vld [vmem:[#allocation2 + $0x88] sm:$0xe]
    %v1133 = vld [vmem:[#allocation2 + $0x8c] sm:$0x1]
    %vm1166 = vcmask 1042432
    %vm1167 = vcmask 1046532
    %vm1168 = vmor %vm1166, %vm1167
    %v1169 = vrot.slane %v1102, 5
    %v1170 = vrot.slane %v1169, 4
    %v1171 = vrot.slane %v1103, 5
    %v1172 = vsel %vm1168, %v1170, %v1171
    %v1173 = vrot.slane %v1104, 5
    %v1174 = vrot.slane %v1173, 4
    %v1175 = vrot.slane %v1105, 5
    %v1176 = vsel %vm1168, %v1174, %v1175
    %v1177 = vrot.slane %v1106, 5
    %v1178 = vrot.slane %v1177, 4
    %v1179 = vrot.slane %v1107, 5
    %v1180 = vsel %vm1168, %v1178, %v1179
    %v1181 = vrot.slane %v1108, 5
    %v1182 = vrot.slane %v1181, 4
    %v1183 = vrot.slane %v1109, 5
    %v1184 = vsel %vm1168, %v1182, %v1183
    %v1185 = vrot.slane %v1110, 5
    %v1186 = vrot.slane %v1185, 4
    %v1187 = vrot.slane %v1111, 5
    %v1188 = vsel %vm1168, %v1186, %v1187
    %v1189 = vrot.slane %v1112, 5
    %v1190 = vrot.slane %v1189, 4
    %v1191 = vrot.slane %v1113, 5
    %v1192 = vsel %vm1168, %v1190, %v1191
    %v1193 = vrot.slane %v1114, 5
    %v1194 = vrot.slane %v1193, 4
    %v1195 = vrot.slane %v1115, 5
    %v1196 = vsel %vm1168, %v1194, %v1195
    %v1197 = vrot.slane %v1116, 5
    %v1198 = vrot.slane %v1197, 4
    %v1199 = vrot.slane %v1117, 5
    %v1200 = vsel %vm1168, %v1198, %v1199
    %v1201 = vrot.slane %v1118, 5
    %v1202 = vrot.slane %v1201, 4
    %v1203 = vrot.slane %v1119, 5
    %v1204 = vsel %vm1168, %v1202, %v1203
    %v1205 = vrot.slane %v1120, 5
    %v1206 = vrot.slane %v1205, 4
    %v1207 = vrot.slane %v1121, 5
    %v1208 = vsel %vm1168, %v1206, %v1207
    %v1209 = vrot.slane %v1122, 5
    %v1210 = vrot.slane %v1209, 4
    %v1211 = vrot.slane %v1123, 5
    %v1212 = vsel %vm1168, %v1210, %v1211
    %v1213 = vrot.slane %v1124, 5
    %v1214 = vrot.slane %v1213, 4
    %v1215 = vrot.slane %v1125, 5
    %v1216 = vsel %vm1168, %v1214, %v1215
    %v1217 = vrot.slane %v1126, 5
    %v1218 = vrot.slane %v1217, 4
    %v1219 = vrot.slane %v1127, 5
    %v1220 = vsel %vm1168, %v1218, %v1219
    %v1221 = vrot.slane %v1128, 5
    %v1222 = vrot.slane %v1221, 4
    %v1223 = vrot.slane %v1129, 5
    %v1224 = vsel %vm1168, %v1222, %v1223
    %v1225 = vrot.slane %v1130, 5
    %v1226 = vrot.slane %v1225, 4
    %v1227 = vrot.slane %v1131, 5
    %v1228 = vsel %vm1168, %v1226, %v1227
    %v1229 = vrot.slane %v1132, 5
    %v1230 = vrot.slane %v1229, 4
    %v1231 = vrot.slane %v1133, 5
    %v1232 = vsel %vm1168, %v1230, %v1231
    %v1233 = vunpack.c.l.b16 %v1172
    %v1234 = vunpack.c.l.b16 %v1176
    %v1235 = vunpack.c.l.b16 %v1180
    %v1236 = vunpack.c.l.b16 %v1184
    %v1237 = vunpack.c.l.b16 %v1188
    %v1238 = vunpack.c.l.b16 %v1192
    %v1239 = vunpack.c.l.b16 %v1196
    %v1240 = vunpack.c.l.b16 %v1200
    %v1241 = vunpack.c.l.b16 %v1204
    %v1242 = vunpack.c.l.b16 %v1208
    %v1243 = vunpack.c.l.b16 %v1212
    %v1244 = vunpack.c.l.b16 %v1216
    %v1245 = vunpack.c.l.b16 %v1220
    %v1246 = vunpack.c.l.b16 %v1224
    %v1247 = vunpack.c.l.b16 %v1228
    %v1248 = vunpack.c.l.b16 %v1232
    %v1249 = vpack.c.b16 %v1234, %v1233
    %v1250 = vpack.c.b16 %v1236, %v1235
    %v1251 = vpack.c.b16 %v1238, %v1237
    %v1252 = vpack.c.b16 %v1240, %v1239
    %v1253 = vpack.c.b16 %v1242, %v1241
    %v1254 = vpack.c.b16 %v1244, %v1243
    %v1255 = vpack.c.b16 %v1246, %v1245
    %v1256 = vpack.c.b16 %v1248, %v1247
    %1265 = vst [vmem:[#allocation3 + $0x10] sm:$0xff] %v1249
    %1266 = vst [vmem:[#allocation3 + $0x58] sm:$0xff] %v1250
    %1267 = vst [vmem:[#allocation3 + $0xa0] sm:$0xff] %v1251
    %1268 = vst [vmem:[#allocation3 + $0xe8] sm:$0xff] %v1252
    %1269 = vst [vmem:[#allocation3 + $0x130] sm:$0xff] %v1253
    %1270 = vst [vmem:[#allocation3 + $0x178] sm:$0xff] %v1254
    %1271 = vst [vmem:[#allocation3 + $0x1c0] sm:$0xff] %v1255
    %1272 = vst [vmem:[#allocation3 + $0x208] sm:$0xff] %v1256
    %v1273 = vld [vmem:[%s628] sm:$0xf]
    %v1274 = vld [vmem:[%s628 + $0x8] sm:$0xf]
    %v1275 = vld [vmem:[%s628 + $0x10] sm:$0xf]
    %v1276 = vld [vmem:[%s628 + $0x18] sm:$0xf]
    %v1277 = vld [vmem:[%s628 + $0x20] sm:$0xf]
    %v1278 = vld [vmem:[%s628 + $0x28] sm:$0xf]
    %v1279 = vld [vmem:[%s628 + $0x30] sm:$0xf]
    %v1280 = vld [vmem:[%s628 + $0x38] sm:$0xf]
    %v1281 = vld [vmem:[%s628 + $0x50] sm:$0xf]
    %v1282 = vld [vmem:[%s628 + $0x58] sm:$0xf]
    %v1283 = vld [vmem:[%s628 + $0x60] sm:$0xf]
    %v1284 = vld [vmem:[%s628 + $0x68] sm:$0xf]
    %v1285 = vld [vmem:[%s628 + $0x70] sm:$0xf]
    %v1286 = vld [vmem:[%s628 + $0x78] sm:$0xf]
    %v1287 = vld [vmem:[%s628 + $0x80] sm:$0xf]
    %v1288 = vld [vmem:[%s628 + $0x88] sm:$0xf]
    %v1305 = vunpack.c.l.b16 %v1273
    %v1306 = vunpack.c.l.b16 %v1274
    %v1307 = vunpack.c.l.b16 %v1275
    %v1308 = vunpack.c.l.b16 %v1276
    %v1309 = vunpack.c.l.b16 %v1277
    %v1310 = vunpack.c.l.b16 %v1278
    %v1311 = vunpack.c.l.b16 %v1279
    %v1312 = vunpack.c.l.b16 %v1280
    %v1313 = vunpack.c.l.b16 %v1281
    %v1314 = vunpack.c.l.b16 %v1282
    %v1315 = vunpack.c.l.b16 %v1283
    %v1316 = vunpack.c.l.b16 %v1284
    %v1317 = vunpack.c.l.b16 %v1285
    %v1318 = vunpack.c.l.b16 %v1286
    %v1319 = vunpack.c.l.b16 %v1287
    %v1320 = vunpack.c.l.b16 %v1288
    %v1321 = vpack.c.b16 %v1306, %v1305
    %v1322 = vpack.c.b16 %v1308, %v1307
    %v1323 = vpack.c.b16 %v1310, %v1309
    %v1324 = vpack.c.b16 %v1312, %v1311
    %v1325 = vpack.c.b16 %v1314, %v1313
    %v1326 = vpack.c.b16 %v1316, %v1315
    %v1327 = vpack.c.b16 %v1318, %v1317
    %v1328 = vpack.c.b16 %v1320, %v1319
    %1337 = vst [vmem:[#allocation3 + $0x18] sm:$0xff] %v1321
    %1338 = vst [vmem:[#allocation3 + $0x60] sm:$0xff] %v1322
    %1339 = vst [vmem:[#allocation3 + $0xa8] sm:$0xff] %v1323
    %1340 = vst [vmem:[#allocation3 + $0xf0] sm:$0xff] %v1324
    %1341 = vst [vmem:[#allocation3 + $0x138] sm:$0xff] %v1325
    %1342 = vst [vmem:[#allocation3 + $0x180] sm:$0xff] %v1326
    %1343 = vst [vmem:[#allocation3 + $0x1c8] sm:$0xff] %v1327
    %1344 = vst [vmem:[#allocation3 + $0x210] sm:$0xff] %v1328
    %v1345 = vld [vmem:[%s628] sm:$0xf]
    %v1346 = vld [vmem:[%s628 + $0x4] sm:$0x1]
    %v1347 = vld [vmem:[%s628 + $0x8] sm:$0xf]
    %v1348 = vld [vmem:[%s628 + $0xc] sm:$0x1]
    %v1349 = vld [vmem:[%s628 + $0x10] sm:$0xf]
    %v1350 = vld [vmem:[%s628 + $0x14] sm:$0x1]
    %v1351 = vld [vmem:[%s628 + $0x18] sm:$0xf]
    %v1352 = vld [vmem:[%s628 + $0x1c] sm:$0x1]
    %v1353 = vld [vmem:[%s628 + $0x20] sm:$0xf]
    %v1354 = vld [vmem:[%s628 + $0x24] sm:$0x1]
    %v1355 = vld [vmem:[%s628 + $0x28] sm:$0xf]
    %v1356 = vld [vmem:[%s628 + $0x2c] sm:$0x1]
    %v1357 = vld [vmem:[%s628 + $0x30] sm:$0xf]
    %v1358 = vld [vmem:[%s628 + $0x34] sm:$0x1]
    %v1359 = vld [vmem:[%s628 + $0x38] sm:$0xf]
    %v1360 = vld [vmem:[%s628 + $0x3c] sm:$0x1]
    %v1361 = vld [vmem:[%s628 + $0x50] sm:$0xf]
    %v1362 = vld [vmem:[%s628 + $0x54] sm:$0x1]
    %v1363 = vld [vmem:[%s628 + $0x58] sm:$0xf]
    %v1364 = vld [vmem:[%s628 + $0x5c] sm:$0x1]
    %v1365 = vld [vmem:[%s628 + $0x60] sm:$0xf]
    %v1366 = vld [vmem:[%s628 + $0x64] sm:$0x1]
    %v1367 = vld [vmem:[%s628 + $0x68] sm:$0xf]
    %v1368 = vld [vmem:[%s628 + $0x6c] sm:$0x1]
    %v1369 = vld [vmem:[%s628 + $0x70] sm:$0xf]
    %v1370 = vld [vmem:[%s628 + $0x74] sm:$0x1]
    %v1371 = vld [vmem:[%s628 + $0x78] sm:$0xf]
    %v1372 = vld [vmem:[%s628 + $0x7c] sm:$0x1]
    %v1373 = vld [vmem:[%s628 + $0x80] sm:$0xf]
    %v1374 = vld [vmem:[%s628 + $0x84] sm:$0x1]
    %v1375 = vld [vmem:[%s628 + $0x88] sm:$0xf]
    %v1376 = vld [vmem:[%s628 + $0x8c] sm:$0x1]
    %v1378 = vshrl.u32 %v1345, 16
    %v1380 = vrot.slane %v1378, 4
    %v1381 = vshll.u32 %v1345, 16
    %v1383 = vrot.slane %v1381, 5
    %v1384 = vor.u32 %v1380, %v1383
    %v1385 = vrot.slane %v1384, 4
    %v1387 = vshll.u32 %v1346, 16
    %v1389 = vrot.slane %v1387, 5
    %v1390 = vsel %vm837, %v1385, %v1389
    %v1392 = vshrl.u32 %v1347, 16
    %v1394 = vrot.slane %v1392, 4
    %v1395 = vshll.u32 %v1347, 16
    %v1397 = vrot.slane %v1395, 5
    %v1398 = vor.u32 %v1394, %v1397
    %v1399 = vrot.slane %v1398, 4
    %v1401 = vshll.u32 %v1348, 16
    %v1403 = vrot.slane %v1401, 5
    %v1404 = vsel %vm837, %v1399, %v1403
    %v1406 = vshrl.u32 %v1349, 16
    %v1408 = vrot.slane %v1406, 4
    %v1409 = vshll.u32 %v1349, 16
    %v1411 = vrot.slane %v1409, 5
    %v1412 = vor.u32 %v1408, %v1411
    %v1413 = vrot.slane %v1412, 4
    %v1415 = vshll.u32 %v1350, 16
    %v1417 = vrot.slane %v1415, 5
    %v1418 = vsel %vm837, %v1413, %v1417
    %v1420 = vshrl.u32 %v1351, 16
    %v1422 = vrot.slane %v1420, 4
    %v1423 = vshll.u32 %v1351, 16
    %v1425 = vrot.slane %v1423, 5
    %v1426 = vor.u32 %v1422, %v1425
    %v1427 = vrot.slane %v1426, 4
    %v1429 = vshll.u32 %v1352, 16
    %v1431 = vrot.slane %v1429, 5
    %v1432 = vsel %vm837, %v1427, %v1431
    %v1434 = vshrl.u32 %v1353, 16
    %v1436 = vrot.slane %v1434, 4
    %v1437 = vshll.u32 %v1353, 16
    %v1439 = vrot.slane %v1437, 5
    %v1440 = vor.u32 %v1436, %v1439
    %v1441 = vrot.slane %v1440, 4
    %v1443 = vshll.u32 %v1354, 16
    %v1445 = vrot.slane %v1443, 5
    %v1446 = vsel %vm837, %v1441, %v1445
    %v1448 = vshrl.u32 %v1355, 16
    %v1450 = vrot.slane %v1448, 4
    %v1451 = vshll.u32 %v1355, 16
    %v1453 = vrot.slane %v1451, 5
    %v1454 = vor.u32 %v1450, %v1453
    %v1455 = vrot.slane %v1454, 4
    %v1457 = vshll.u32 %v1356, 16
    %v1459 = vrot.slane %v1457, 5
    %v1460 = vsel %vm837, %v1455, %v1459
    %v1462 = vshrl.u32 %v1357, 16
    %v1464 = vrot.slane %v1462, 4
    %v1465 = vshll.u32 %v1357, 16
    %v1467 = vrot.slane %v1465, 5
    %v1468 = vor.u32 %v1464, %v1467
    %v1469 = vrot.slane %v1468, 4
    %v1471 = vshll.u32 %v1358, 16
    %v1473 = vrot.slane %v1471, 5
    %v1474 = vsel %vm837, %v1469, %v1473
    %v1476 = vshrl.u32 %v1359, 16
    %v1478 = vrot.slane %v1476, 4
    %v1479 = vshll.u32 %v1359, 16
    %v1481 = vrot.slane %v1479, 5
    %v1482 = vor.u32 %v1478, %v1481
    %v1483 = vrot.slane %v1482, 4
    %v1485 = vshll.u32 %v1360, 16
    %v1487 = vrot.slane %v1485, 5
    %v1488 = vsel %vm837, %v1483, %v1487
    %v1490 = vshrl.u32 %v1361, 16
    %v1492 = vrot.slane %v1490, 4
    %v1493 = vshll.u32 %v1361, 16
    %v1495 = vrot.slane %v1493, 5
    %v1496 = vor.u32 %v1492, %v1495
    %v1497 = vrot.slane %v1496, 4
    %v1499 = vshll.u32 %v1362, 16
    %v1501 = vrot.slane %v1499, 5
    %v1502 = vsel %vm837, %v1497, %v1501
    %v1504 = vshrl.u32 %v1363, 16
    %v1506 = vrot.slane %v1504, 4
    %v1507 = vshll.u32 %v1363, 16
    %v1509 = vrot.slane %v1507, 5
    %v1510 = vor.u32 %v1506, %v1509
    %v1511 = vrot.slane %v1510, 4
    %v1513 = vshll.u32 %v1364, 16
    %v1515 = vrot.slane %v1513, 5
    %v1516 = vsel %vm837, %v1511, %v1515
    %v1518 = vshrl.u32 %v1365, 16
    %v1520 = vrot.slane %v1518, 4
    %v1521 = vshll.u32 %v1365, 16
    %v1523 = vrot.slane %v1521, 5
    %v1524 = vor.u32 %v1520, %v1523
    %v1525 = vrot.slane %v1524, 4
    %v1527 = vshll.u32 %v1366, 16
    %v1529 = vrot.slane %v1527, 5
    %v1530 = vsel %vm837, %v1525, %v1529
    %v1532 = vshrl.u32 %v1367, 16
    %v1534 = vrot.slane %v1532, 4
    %v1535 = vshll.u32 %v1367, 16
    %v1537 = vrot.slane %v1535, 5
    %v1538 = vor.u32 %v1534, %v1537
    %v1539 = vrot.slane %v1538, 4
    %v1541 = vshll.u32 %v1368, 16
    %v1543 = vrot.slane %v1541, 5
    %v1544 = vsel %vm837, %v1539, %v1543
    %v1546 = vshrl.u32 %v1369, 16
    %v1548 = vrot.slane %v1546, 4
    %v1549 = vshll.u32 %v1369, 16
    %v1551 = vrot.slane %v1549, 5
    %v1552 = vor.u32 %v1548, %v1551
    %v1553 = vrot.slane %v1552, 4
    %v1555 = vshll.u32 %v1370, 16
    %v1557 = vrot.slane %v1555, 5
    %v1558 = vsel %vm837, %v1553, %v1557
    %v1560 = vshrl.u32 %v1371, 16
    %v1562 = vrot.slane %v1560, 4
    %v1563 = vshll.u32 %v1371, 16
    %v1565 = vrot.slane %v1563, 5
    %v1566 = vor.u32 %v1562, %v1565
    %v1567 = vrot.slane %v1566, 4
    %v1569 = vshll.u32 %v1372, 16
    %v1571 = vrot.slane %v1569, 5
    %v1572 = vsel %vm837, %v1567, %v1571
    %v1574 = vshrl.u32 %v1373, 16
    %v1576 = vrot.slane %v1574, 4
    %v1577 = vshll.u32 %v1373, 16
    %v1579 = vrot.slane %v1577, 5
    %v1580 = vor.u32 %v1576, %v1579
    %v1581 = vrot.slane %v1580, 4
    %v1583 = vshll.u32 %v1374, 16
    %v1585 = vrot.slane %v1583, 5
    %v1586 = vsel %vm837, %v1581, %v1585
    %v1588 = vshrl.u32 %v1375, 16
    %v1590 = vrot.slane %v1588, 4
    %v1591 = vshll.u32 %v1375, 16
    %v1593 = vrot.slane %v1591, 5
    %v1594 = vor.u32 %v1590, %v1593
    %v1595 = vrot.slane %v1594, 4
    %v1597 = vshll.u32 %v1376, 16
    %v1599 = vrot.slane %v1597, 5
    %v1600 = vsel %vm837, %v1595, %v1599
    %v1601 = vunpack.c.l.b16 %v1390
    %v1602 = vunpack.c.l.b16 %v1404
    %v1603 = vunpack.c.l.b16 %v1418
    %v1604 = vunpack.c.l.b16 %v1432
    %v1605 = vunpack.c.l.b16 %v1446
    %v1606 = vunpack.c.l.b16 %v1460
    %v1607 = vunpack.c.l.b16 %v1474
    %v1608 = vunpack.c.l.b16 %v1488
    %v1609 = vunpack.c.l.b16 %v1502
    %v1610 = vunpack.c.l.b16 %v1516
    %v1611 = vunpack.c.l.b16 %v1530
    %v1612 = vunpack.c.l.b16 %v1544
    %v1613 = vunpack.c.l.b16 %v1558
    %v1614 = vunpack.c.l.b16 %v1572
    %v1615 = vunpack.c.l.b16 %v1586
    %v1616 = vunpack.c.l.b16 %v1600
    %v1617 = vpack.c.b16 %v1602, %v1601
    %v1618 = vpack.c.b16 %v1604, %v1603
    %v1619 = vpack.c.b16 %v1606, %v1605
    %v1620 = vpack.c.b16 %v1608, %v1607
    %v1621 = vpack.c.b16 %v1610, %v1609
    %v1622 = vpack.c.b16 %v1612, %v1611
    %v1623 = vpack.c.b16 %v1614, %v1613
    %v1624 = vpack.c.b16 %v1616, %v1615
    %1633 = vst [vmem:[#allocation3 + $0x20] sm:$0xff] %v1617
    %1634 = vst [vmem:[#allocation3 + $0x68] sm:$0xff] %v1618
    %1635 = vst [vmem:[#allocation3 + $0xb0] sm:$0xff] %v1619
    %1636 = vst [vmem:[#allocation3 + $0xf8] sm:$0xff] %v1620
    %1637 = vst [vmem:[#allocation3 + $0x140] sm:$0xff] %v1621
    %1638 = vst [vmem:[#allocation3 + $0x188] sm:$0xff] %v1622
    %1639 = vst [vmem:[#allocation3 + $0x1d0] sm:$0xff] %v1623
    %1640 = vst [vmem:[#allocation3 + $0x218] sm:$0xff] %v1624
    %v1641 = vld [vmem:[%s628] sm:$0xe]
    %v1642 = vld [vmem:[%s628 + $0x4] sm:$0x1]
    %v1643 = vld [vmem:[%s628 + $0x8] sm:$0xe]
    %v1644 = vld [vmem:[%s628 + $0xc] sm:$0x1]
    %v1645 = vld [vmem:[%s628 + $0x10] sm:$0xe]
    %v1646 = vld [vmem:[%s628 + $0x14] sm:$0x1]
    %v1647 = vld [vmem:[%s628 + $0x18] sm:$0xe]
    %v1648 = vld [vmem:[%s628 + $0x1c] sm:$0x1]
    %v1649 = vld [vmem:[%s628 + $0x20] sm:$0xe]
    %v1650 = vld [vmem:[%s628 + $0x24] sm:$0x1]
    %v1651 = vld [vmem:[%s628 + $0x28] sm:$0xe]
    %v1652 = vld [vmem:[%s628 + $0x2c] sm:$0x1]
    %v1653 = vld [vmem:[%s628 + $0x30] sm:$0xe]
    %v1654 = vld [vmem:[%s628 + $0x34] sm:$0x1]
    %v1655 = vld [vmem:[%s628 + $0x38] sm:$0xe]
    %v1656 = vld [vmem:[%s628 + $0x3c] sm:$0x1]
    %v1657 = vld [vmem:[%s628 + $0x50] sm:$0xe]
    %v1658 = vld [vmem:[%s628 + $0x54] sm:$0x1]
    %v1659 = vld [vmem:[%s628 + $0x58] sm:$0xe]
    %v1660 = vld [vmem:[%s628 + $0x5c] sm:$0x1]
    %v1661 = vld [vmem:[%s628 + $0x60] sm:$0xe]
    %v1662 = vld [vmem:[%s628 + $0x64] sm:$0x1]
    %v1663 = vld [vmem:[%s628 + $0x68] sm:$0xe]
    %v1664 = vld [vmem:[%s628 + $0x6c] sm:$0x1]
    %v1665 = vld [vmem:[%s628 + $0x70] sm:$0xe]
    %v1666 = vld [vmem:[%s628 + $0x74] sm:$0x1]
    %v1667 = vld [vmem:[%s628 + $0x78] sm:$0xe]
    %v1668 = vld [vmem:[%s628 + $0x7c] sm:$0x1]
    %v1669 = vld [vmem:[%s628 + $0x80] sm:$0xe]
    %v1670 = vld [vmem:[%s628 + $0x84] sm:$0x1]
    %v1671 = vld [vmem:[%s628 + $0x88] sm:$0xe]
    %v1672 = vld [vmem:[%s628 + $0x8c] sm:$0x1]
    %v1705 = vrot.slane %v1641, 5
    %v1706 = vrot.slane %v1705, 4
    %v1707 = vrot.slane %v1642, 5
    %v1708 = vsel %vm1168, %v1706, %v1707
    %v1709 = vrot.slane %v1643, 5
    %v1710 = vrot.slane %v1709, 4
    %v1711 = vrot.slane %v1644, 5
    %v1712 = vsel %vm1168, %v1710, %v1711
    %v1713 = vrot.slane %v1645, 5
    %v1714 = vrot.slane %v1713, 4
    %v1715 = vrot.slane %v1646, 5
    %v1716 = vsel %vm1168, %v1714, %v1715
    %v1717 = vrot.slane %v1647, 5
    %v1718 = vrot.slane %v1717, 4
    %v1719 = vrot.slane %v1648, 5
    %v1720 = vsel %vm1168, %v1718, %v1719
    %v1721 = vrot.slane %v1649, 5
    %v1722 = vrot.slane %v1721, 4
    %v1723 = vrot.slane %v1650, 5
    %v1724 = vsel %vm1168, %v1722, %v1723
    %v1725 = vrot.slane %v1651, 5
    %v1726 = vrot.slane %v1725, 4
    %v1727 = vrot.slane %v1652, 5
    %v1728 = vsel %vm1168, %v1726, %v1727
    %v1729 = vrot.slane %v1653, 5
    %v1730 = vrot.slane %v1729, 4
    %v1731 = vrot.slane %v1654, 5
    %v1732 = vsel %vm1168, %v1730, %v1731
    %v1733 = vrot.slane %v1655, 5
    %v1734 = vrot.slane %v1733, 4
    %v1735 = vrot.slane %v1656, 5
    %v1736 = vsel %vm1168, %v1734, %v1735
    %v1737 = vrot.slane %v1657, 5
    %v1738 = vrot.slane %v1737, 4
    %v1739 = vrot.slane %v1658, 5
    %v1740 = vsel %vm1168, %v1738, %v1739
    %v1741 = vrot.slane %v1659, 5
    %v1742 = vrot.slane %v1741, 4
    %v1743 = vrot.slane %v1660, 5
    %v1744 = vsel %vm1168, %v1742, %v1743
    %v1745 = vrot.slane %v1661, 5
    %v1746 = vrot.slane %v1745, 4
    %v1747 = vrot.slane %v1662, 5
    %v1748 = vsel %vm1168, %v1746, %v1747
    %v1749 = vrot.slane %v1663, 5
    %v1750 = vrot.slane %v1749, 4
    %v1751 = vrot.slane %v1664, 5
    %v1752 = vsel %vm1168, %v1750, %v1751
    %v1753 = vrot.slane %v1665, 5
    %v1754 = vrot.slane %v1753, 4
    %v1755 = vrot.slane %v1666, 5
    %v1756 = vsel %vm1168, %v1754, %v1755
    %v1757 = vrot.slane %v1667, 5
    %v1758 = vrot.slane %v1757, 4
    %v1759 = vrot.slane %v1668, 5
    %v1760 = vsel %vm1168, %v1758, %v1759
    %v1761 = vrot.slane %v1669, 5
    %v1762 = vrot.slane %v1761, 4
    %v1763 = vrot.slane %v1670, 5
    %v1764 = vsel %vm1168, %v1762, %v1763
    %v1765 = vrot.slane %v1671, 5
    %v1766 = vrot.slane %v1765, 4
    %v1767 = vrot.slane %v1672, 5
    %v1768 = vsel %vm1168, %v1766, %v1767
    %v1769 = vunpack.c.l.b16 %v1708
    %v1770 = vunpack.c.l.b16 %v1712
    %v1771 = vunpack.c.l.b16 %v1716
    %v1772 = vunpack.c.l.b16 %v1720
    %v1773 = vunpack.c.l.b16 %v1724
    %v1774 = vunpack.c.l.b16 %v1728
    %v1775 = vunpack.c.l.b16 %v1732
    %v1776 = vunpack.c.l.b16 %v1736
    %v1777 = vunpack.c.l.b16 %v1740
    %v1778 = vunpack.c.l.b16 %v1744
    %v1779 = vunpack.c.l.b16 %v1748
    %v1780 = vunpack.c.l.b16 %v1752
    %v1781 = vunpack.c.l.b16 %v1756
    %v1782 = vunpack.c.l.b16 %v1760
    %v1783 = vunpack.c.l.b16 %v1764
    %v1784 = vunpack.c.l.b16 %v1768
    %v1785 = vpack.c.b16 %v1770, %v1769
    %v1786 = vpack.c.b16 %v1772, %v1771
    %v1787 = vpack.c.b16 %v1774, %v1773
    %v1788 = vpack.c.b16 %v1776, %v1775
    %v1789 = vpack.c.b16 %v1778, %v1777
    %v1790 = vpack.c.b16 %v1780, %v1779
    %v1791 = vpack.c.b16 %v1782, %v1781
    %v1792 = vpack.c.b16 %v1784, %v1783
    %1801 = vst [vmem:[#allocation3 + $0x28] sm:$0xff] %v1785
    %1802 = vst [vmem:[#allocation3 + $0x70] sm:$0xff] %v1786
    %1803 = vst [vmem:[#allocation3 + $0xb8] sm:$0xff] %v1787
    %1804 = vst [vmem:[#allocation3 + $0x100] sm:$0xff] %v1788
    %1805 = vst [vmem:[#allocation3 + $0x148] sm:$0xff] %v1789
    %1806 = vst [vmem:[#allocation3 + $0x190] sm:$0xff] %v1790
    %1807 = vst [vmem:[#allocation3 + $0x1d8] sm:$0xff] %v1791
    %1808 = vst [vmem:[#allocation3 + $0x220] sm:$0xff] %v1792
    %s1809 = scalar_lea.vmem [#allocation2], 16
    %v1810 = vld [vmem:[%s1809] sm:$0xf]
    %v1811 = vld [vmem:[%s1809 + $0x8] sm:$0xf]
    %v1812 = vld [vmem:[%s1809 + $0x10] sm:$0xf]
    %v1813 = vld [vmem:[%s1809 + $0x18] sm:$0xf]
    %v1814 = vld [vmem:[%s1809 + $0x20] sm:$0xf]
    %v1815 = vld [vmem:[%s1809 + $0x28] sm:$0xf]
    %v1816 = vld [vmem:[%s1809 + $0x30] sm:$0xf]
    %v1817 = vld [vmem:[%s1809 + $0x38] sm:$0xf]
    %v1818 = vld [vmem:[%s1809 + $0x50] sm:$0xf]
    %v1819 = vld [vmem:[%s1809 + $0x58] sm:$0xf]
    %v1820 = vld [vmem:[%s1809 + $0x60] sm:$0xf]
    %v1821 = vld [vmem:[%s1809 + $0x68] sm:$0xf]
    %v1822 = vld [vmem:[%s1809 + $0x70] sm:$0xf]
    %v1823 = vld [vmem:[%s1809 + $0x78] sm:$0xf]
    %v1824 = vld [vmem:[%s1809 + $0x80] sm:$0xf]
    %v1825 = vld [vmem:[%s1809 + $0x88] sm:$0xf]
    %v1842 = vunpack.c.l.b16 %v1810
    %v1843 = vunpack.c.l.b16 %v1811
    %v1844 = vunpack.c.l.b16 %v1812
    %v1845 = vunpack.c.l.b16 %v1813
    %v1846 = vunpack.c.l.b16 %v1814
    %v1847 = vunpack.c.l.b16 %v1815
    %v1848 = vunpack.c.l.b16 %v1816
    %v1849 = vunpack.c.l.b16 %v1817
    %v1850 = vunpack.c.l.b16 %v1818
    %v1851 = vunpack.c.l.b16 %v1819
    %v1852 = vunpack.c.l.b16 %v1820
    %v1853 = vunpack.c.l.b16 %v1821
    %v1854 = vunpack.c.l.b16 %v1822
    %v1855 = vunpack.c.l.b16 %v1823
    %v1856 = vunpack.c.l.b16 %v1824
    %v1857 = vunpack.c.l.b16 %v1825
    %v1858 = vpack.c.b16 %v1843, %v1842
    %v1859 = vpack.c.b16 %v1845, %v1844
    %v1860 = vpack.c.b16 %v1847, %v1846
    %v1861 = vpack.c.b16 %v1849, %v1848
    %v1862 = vpack.c.b16 %v1851, %v1850
    %v1863 = vpack.c.b16 %v1853, %v1852
    %v1864 = vpack.c.b16 %v1855, %v1854
    %v1865 = vpack.c.b16 %v1857, %v1856
    %1874 = vst [vmem:[#allocation3 + $0x30] sm:$0xff] %v1858
    %1875 = vst [vmem:[#allocation3 + $0x78] sm:$0xff] %v1859
    %1876 = vst [vmem:[#allocation3 + $0xc0] sm:$0xff] %v1860
    %1877 = vst [vmem:[#allocation3 + $0x108] sm:$0xff] %v1861
    %1878 = vst [vmem:[#allocation3 + $0x150] sm:$0xff] %v1862
    %1879 = vst [vmem:[#allocation3 + $0x198] sm:$0xff] %v1863
    %1880 = vst [vmem:[#allocation3 + $0x1e0] sm:$0xff] %v1864
    %1881 = vst [vmem:[#allocation3 + $0x228] sm:$0xff] %v1865
    %v1882 = vld [vmem:[%s1809] sm:$0xf]
    %v1883 = vld [vmem:[%s1809 + $0x4] sm:$0x1]
    %v1884 = vld [vmem:[%s1809 + $0x8] sm:$0xf]
    %v1885 = vld [vmem:[%s1809 + $0xc] sm:$0x1]
    %v1886 = vld [vmem:[%s1809 + $0x10] sm:$0xf]
    %v1887 = vld [vmem:[%s1809 + $0x14] sm:$0x1]
    %v1888 = vld [vmem:[%s1809 + $0x18] sm:$0xf]
    %v1889 = vld [vmem:[%s1809 + $0x1c] sm:$0x1]
    %v1890 = vld [vmem:[%s1809 + $0x20] sm:$0xf]
    %v1891 = vld [vmem:[%s1809 + $0x24] sm:$0x1]
    %v1892 = vld [vmem:[%s1809 + $0x28] sm:$0xf]
    %v1893 = vld [vmem:[%s1809 + $0x2c] sm:$0x1]
    %v1894 = vld [vmem:[%s1809 + $0x30] sm:$0xf]
    %v1895 = vld [vmem:[%s1809 + $0x34] sm:$0x1]
    %v1896 = vld [vmem:[%s1809 + $0x38] sm:$0xf]
    %v1897 = vld [vmem:[%s1809 + $0x3c] sm:$0x1]
    %v1898 = vld [vmem:[%s1809 + $0x50] sm:$0xf]
    %v1899 = vld [vmem:[%s1809 + $0x54] sm:$0x1]
    %v1900 = vld [vmem:[%s1809 + $0x58] sm:$0xf]
    %v1901 = vld [vmem:[%s1809 + $0x5c] sm:$0x1]
    %v1902 = vld [vmem:[%s1809 + $0x60] sm:$0xf]
    %v1903 = vld [vmem:[%s1809 + $0x64] sm:$0x1]
    %v1904 = vld [vmem:[%s1809 + $0x68] sm:$0xf]
    %v1905 = vld [vmem:[%s1809 + $0x6c] sm:$0x1]
    %v1906 = vld [vmem:[%s1809 + $0x70] sm:$0xf]
    %v1907 = vld [vmem:[%s1809 + $0x74] sm:$0x1]
    %v1908 = vld [vmem:[%s1809 + $0x78] sm:$0xf]
    %v1909 = vld [vmem:[%s1809 + $0x7c] sm:$0x1]
    %v1910 = vld [vmem:[%s1809 + $0x80] sm:$0xf]
    %v1911 = vld [vmem:[%s1809 + $0x84] sm:$0x1]
    %v1912 = vld [vmem:[%s1809 + $0x88] sm:$0xf]
    %v1913 = vld [vmem:[%s1809 + $0x8c] sm:$0x1]
    %v1915 = vshrl.u32 %v1882, 16
    %v1917 = vrot.slane %v1915, 4
    %v1918 = vshll.u32 %v1882, 16
    %v1920 = vrot.slane %v1918, 5
    %v1921 = vor.u32 %v1917, %v1920
    %v1922 = vrot.slane %v1921, 4
    %v1924 = vshll.u32 %v1883, 16
    %v1926 = vrot.slane %v1924, 5
    %v1927 = vsel %vm837, %v1922, %v1926
    %v1929 = vshrl.u32 %v1884, 16
    %v1931 = vrot.slane %v1929, 4
    %v1932 = vshll.u32 %v1884, 16
    %v1934 = vrot.slane %v1932, 5
    %v1935 = vor.u32 %v1931, %v1934
    %v1936 = vrot.slane %v1935, 4
    %v1938 = vshll.u32 %v1885, 16
    %v1940 = vrot.slane %v1938, 5
    %v1941 = vsel %vm837, %v1936, %v1940
    %v1943 = vshrl.u32 %v1886, 16
    %v1945 = vrot.slane %v1943, 4
    %v1946 = vshll.u32 %v1886, 16
    %v1948 = vrot.slane %v1946, 5
    %v1949 = vor.u32 %v1945, %v1948
    %v1950 = vrot.slane %v1949, 4
    %v1952 = vshll.u32 %v1887, 16
    %v1954 = vrot.slane %v1952, 5
    %v1955 = vsel %vm837, %v1950, %v1954
    %v1957 = vshrl.u32 %v1888, 16
    %v1959 = vrot.slane %v1957, 4
    %v1960 = vshll.u32 %v1888, 16
    %v1962 = vrot.slane %v1960, 5
    %v1963 = vor.u32 %v1959, %v1962
    %v1964 = vrot.slane %v1963, 4
    %v1966 = vshll.u32 %v1889, 16
    %v1968 = vrot.slane %v1966, 5
    %v1969 = vsel %vm837, %v1964, %v1968
    %v1971 = vshrl.u32 %v1890, 16
    %v1973 = vrot.slane %v1971, 4
    %v1974 = vshll.u32 %v1890, 16
    %v1976 = vrot.slane %v1974, 5
    %v1977 = vor.u32 %v1973, %v1976
    %v1978 = vrot.slane %v1977, 4
    %v1980 = vshll.u32 %v1891, 16
    %v1982 = vrot.slane %v1980, 5
    %v1983 = vsel %vm837, %v1978, %v1982
    %v1985 = vshrl.u32 %v1892, 16
    %v1987 = vrot.slane %v1985, 4
    %v1988 = vshll.u32 %v1892, 16
    %v1990 = vrot.slane %v1988, 5
    %v1991 = vor.u32 %v1987, %v1990
    %v1992 = vrot.slane %v1991, 4
    %v1994 = vshll.u32 %v1893, 16
    %v1996 = vrot.slane %v1994, 5
    %v1997 = vsel %vm837, %v1992, %v1996
    %v1999 = vshrl.u32 %v1894, 16
    %v2001 = vrot.slane %v1999, 4
    %v2002 = vshll.u32 %v1894, 16
    %v2004 = vrot.slane %v2002, 5
    %v2005 = vor.u32 %v2001, %v2004
    %v2006 = vrot.slane %v2005, 4
    %v2008 = vshll.u32 %v1895, 16
    %v2010 = vrot.slane %v2008, 5
    %v2011 = vsel %vm837, %v2006, %v2010
    %v2013 = vshrl.u32 %v1896, 16
    %v2015 = vrot.slane %v2013, 4
    %v2016 = vshll.u32 %v1896, 16
    %v2018 = vrot.slane %v2016, 5
    %v2019 = vor.u32 %v2015, %v2018
    %v2020 = vrot.slane %v2019, 4
    %v2022 = vshll.u32 %v1897, 16
    %v2024 = vrot.slane %v2022, 5
    %v2025 = vsel %vm837, %v2020, %v2024
    %v2027 = vshrl.u32 %v1898, 16
    %v2029 = vrot.slane %v2027, 4
    %v2030 = vshll.u32 %v1898, 16
    %v2032 = vrot.slane %v2030, 5
    %v2033 = vor.u32 %v2029, %v2032
    %v2034 = vrot.slane %v2033, 4
    %v2036 = vshll.u32 %v1899, 16
    %v2038 = vrot.slane %v2036, 5
    %v2039 = vsel %vm837, %v2034, %v2038
    %v2041 = vshrl.u32 %v1900, 16
    %v2043 = vrot.slane %v2041, 4
    %v2044 = vshll.u32 %v1900, 16
    %v2046 = vrot.slane %v2044, 5
    %v2047 = vor.u32 %v2043, %v2046
    %v2048 = vrot.slane %v2047, 4
    %v2050 = vshll.u32 %v1901, 16
    %v2052 = vrot.slane %v2050, 5
    %v2053 = vsel %vm837, %v2048, %v2052
    %v2055 = vshrl.u32 %v1902, 16
    %v2057 = vrot.slane %v2055, 4
    %v2058 = vshll.u32 %v1902, 16
    %v2060 = vrot.slane %v2058, 5
    %v2061 = vor.u32 %v2057, %v2060
    %v2062 = vrot.slane %v2061, 4
    %v2064 = vshll.u32 %v1903, 16
    %v2066 = vrot.slane %v2064, 5
    %v2067 = vsel %vm837, %v2062, %v2066
    %v2069 = vshrl.u32 %v1904, 16
    %v2071 = vrot.slane %v2069, 4
    %v2072 = vshll.u32 %v1904, 16
    %v2074 = vrot.slane %v2072, 5
    %v2075 = vor.u32 %v2071, %v2074
    %v2076 = vrot.slane %v2075, 4
    %v2078 = vshll.u32 %v1905, 16
    %v2080 = vrot.slane %v2078, 5
    %v2081 = vsel %vm837, %v2076, %v2080
    %v2083 = vshrl.u32 %v1906, 16
    %v2085 = vrot.slane %v2083, 4
    %v2086 = vshll.u32 %v1906, 16
    %v2088 = vrot.slane %v2086, 5
    %v2089 = vor.u32 %v2085, %v2088
    %v2090 = vrot.slane %v2089, 4
    %v2092 = vshll.u32 %v1907, 16
    %v2094 = vrot.slane %v2092, 5
    %v2095 = vsel %vm837, %v2090, %v2094
    %v2097 = vshrl.u32 %v1908, 16
    %v2099 = vrot.slane %v2097, 4
    %v2100 = vshll.u32 %v1908, 16
    %v2102 = vrot.slane %v2100, 5
    %v2103 = vor.u32 %v2099, %v2102
    %v2104 = vrot.slane %v2103, 4
    %v2106 = vshll.u32 %v1909, 16
    %v2108 = vrot.slane %v2106, 5
    %v2109 = vsel %vm837, %v2104, %v2108
    %v2111 = vshrl.u32 %v1910, 16
    %v2113 = vrot.slane %v2111, 4
    %v2114 = vshll.u32 %v1910, 16
    %v2116 = vrot.slane %v2114, 5
    %v2117 = vor.u32 %v2113, %v2116
    %v2118 = vrot.slane %v2117, 4
    %v2120 = vshll.u32 %v1911, 16
    %v2122 = vrot.slane %v2120, 5
    %v2123 = vsel %vm837, %v2118, %v2122
    %v2125 = vshrl.u32 %v1912, 16
    %v2127 = vrot.slane %v2125, 4
    %v2128 = vshll.u32 %v1912, 16
    %v2130 = vrot.slane %v2128, 5
    %v2131 = vor.u32 %v2127, %v2130
    %v2132 = vrot.slane %v2131, 4
    %v2134 = vshll.u32 %v1913, 16
    %v2136 = vrot.slane %v2134, 5
    %v2137 = vsel %vm837, %v2132, %v2136
    %v2138 = vunpack.c.l.b16 %v1927
    %v2139 = vunpack.c.l.b16 %v1941
    %v2140 = vunpack.c.l.b16 %v1955
    %v2141 = vunpack.c.l.b16 %v1969
    %v2142 = vunpack.c.l.b16 %v1983
    %v2143 = vunpack.c.l.b16 %v1997
    %v2144 = vunpack.c.l.b16 %v2011
    %v2145 = vunpack.c.l.b16 %v2025
    %v2146 = vunpack.c.l.b16 %v2039
    %v2147 = vunpack.c.l.b16 %v2053
    %v2148 = vunpack.c.l.b16 %v2067
    %v2149 = vunpack.c.l.b16 %v2081
    %v2150 = vunpack.c.l.b16 %v2095
    %v2151 = vunpack.c.l.b16 %v2109
    %v2152 = vunpack.c.l.b16 %v2123
    %v2153 = vunpack.c.l.b16 %v2137
    %v2154 = vpack.c.b16 %v2139, %v2138
    %v2155 = vpack.c.b16 %v2141, %v2140
    %v2156 = vpack.c.b16 %v2143, %v2142
    %v2157 = vpack.c.b16 %v2145, %v2144
    %v2158 = vpack.c.b16 %v2147, %v2146
    %v2159 = vpack.c.b16 %v2149, %v2148
    %v2160 = vpack.c.b16 %v2151, %v2150
    %v2161 = vpack.c.b16 %v2153, %v2152
    %2170 = vst [vmem:[#allocation3 + $0x38] sm:$0xff] %v2154
    %2171 = vst [vmem:[#allocation3 + $0x80] sm:$0xff] %v2155
    %2172 = vst [vmem:[#allocation3 + $0xc8] sm:$0xff] %v2156
    %2173 = vst [vmem:[#allocation3 + $0x110] sm:$0xff] %v2157
    %2174 = vst [vmem:[#allocation3 + $0x158] sm:$0xff] %v2158
    %2175 = vst [vmem:[#allocation3 + $0x1a0] sm:$0xff] %v2159
    %2176 = vst [vmem:[#allocation3 + $0x1e8] sm:$0xff] %v2160
    %2177 = vst [vmem:[#allocation3 + $0x230] sm:$0xff] %v2161
    %v2178 = vld [vmem:[%s1809] sm:$0xe]
    %v2179 = vld [vmem:[%s1809 + $0x4] sm:$0x1]
    %v2180 = vld [vmem:[%s1809 + $0x8] sm:$0xe]
    %v2181 = vld [vmem:[%s1809 + $0xc] sm:$0x1]
    %v2182 = vld [vmem:[%s1809 + $0x10] sm:$0xe]
    %v2183 = vld [vmem:[%s1809 + $0x14] sm:$0x1]
    %v2184 = vld [vmem:[%s1809 + $0x18] sm:$0xe]
    %v2185 = vld [vmem:[%s1809 + $0x1c] sm:$0x1]
    %v2186 = vld [vmem:[%s1809 + $0x20] sm:$0xe]
    %v2187 = vld [vmem:[%s1809 + $0x24] sm:$0x1]
    %v2188 = vld [vmem:[%s1809 + $0x28] sm:$0xe]
    %v2189 = vld [vmem:[%s1809 + $0x2c] sm:$0x1]
    %v2190 = vld [vmem:[%s1809 + $0x30] sm:$0xe]
    %v2191 = vld [vmem:[%s1809 + $0x34] sm:$0x1]
    %v2192 = vld [vmem:[%s1809 + $0x38] sm:$0xe]
    %v2193 = vld [vmem:[%s1809 + $0x3c] sm:$0x1]
    %v2194 = vld [vmem:[%s1809 + $0x50] sm:$0xe]
    %v2195 = vld [vmem:[%s1809 + $0x54] sm:$0x1]
    %v2196 = vld [vmem:[%s1809 + $0x58] sm:$0xe]
    %v2197 = vld [vmem:[%s1809 + $0x5c] sm:$0x1]
    %v2198 = vld [vmem:[%s1809 + $0x60] sm:$0xe]
    %v2199 = vld [vmem:[%s1809 + $0x64] sm:$0x1]
    %v2200 = vld [vmem:[%s1809 + $0x68] sm:$0xe]
    %v2201 = vld [vmem:[%s1809 + $0x6c] sm:$0x1]
    %v2202 = vld [vmem:[%s1809 + $0x70] sm:$0xe]
    %v2203 = vld [vmem:[%s1809 + $0x74] sm:$0x1]
    %v2204 = vld [vmem:[%s1809 + $0x78] sm:$0xe]
    %v2205 = vld [vmem:[%s1809 + $0x7c] sm:$0x1]
    %v2206 = vld [vmem:[%s1809 + $0x80] sm:$0xe]
    %v2207 = vld [vmem:[%s1809 + $0x84] sm:$0x1]
    %v2208 = vld [vmem:[%s1809 + $0x88] sm:$0xe]
    %v2209 = vld [vmem:[%s1809 + $0x8c] sm:$0x1]
    %v2242 = vrot.slane %v2178, 5
    %v2243 = vrot.slane %v2242, 4
    %v2244 = vrot.slane %v2179, 5
    %v2245 = vsel %vm1168, %v2243, %v2244
    %v2246 = vrot.slane %v2180, 5
    %v2247 = vrot.slane %v2246, 4
    %v2248 = vrot.slane %v2181, 5
    %v2249 = vsel %vm1168, %v2247, %v2248
    %v2250 = vrot.slane %v2182, 5
    %v2251 = vrot.slane %v2250, 4
    %v2252 = vrot.slane %v2183, 5
    %v2253 = vsel %vm1168, %v2251, %v2252
    %v2254 = vrot.slane %v2184, 5
    %v2255 = vrot.slane %v2254, 4
    %v2256 = vrot.slane %v2185, 5
    %v2257 = vsel %vm1168, %v2255, %v2256
    %v2258 = vrot.slane %v2186, 5
    %v2259 = vrot.slane %v2258, 4
    %v2260 = vrot.slane %v2187, 5
    %v2261 = vsel %vm1168, %v2259, %v2260
    %v2262 = vrot.slane %v2188, 5
    %v2263 = vrot.slane %v2262, 4
    %v2264 = vrot.slane %v2189, 5
    %v2265 = vsel %vm1168, %v2263, %v2264
    %v2266 = vrot.slane %v2190, 5
    %v2267 = vrot.slane %v2266, 4
    %v2268 = vrot.slane %v2191, 5
    %v2269 = vsel %vm1168, %v2267, %v2268
    %v2270 = vrot.slane %v2192, 5
    %v2271 = vrot.slane %v2270, 4
    %v2272 = vrot.slane %v2193, 5
    %v2273 = vsel %vm1168, %v2271, %v2272
    %v2274 = vrot.slane %v2194, 5
    %v2275 = vrot.slane %v2274, 4
    %v2276 = vrot.slane %v2195, 5
    %v2277 = vsel %vm1168, %v2275, %v2276
    %v2278 = vrot.slane %v2196, 5
    %v2279 = vrot.slane %v2278, 4
    %v2280 = vrot.slane %v2197, 5
    %v2281 = vsel %vm1168, %v2279, %v2280
    %v2282 = vrot.slane %v2198, 5
    %v2283 = vrot.slane %v2282, 4
    %v2284 = vrot.slane %v2199, 5
    %v2285 = vsel %vm1168, %v2283, %v2284
    %v2286 = vrot.slane %v2200, 5
    %v2287 = vrot.slane %v2286, 4
    %v2288 = vrot.slane %v2201, 5
    %v2289 = vsel %vm1168, %v2287, %v2288
    %v2290 = vrot.slane %v2202, 5
    %v2291 = vrot.slane %v2290, 4
    %v2292 = vrot.slane %v2203, 5
    %v2293 = vsel %vm1168, %v2291, %v2292
    %v2294 = vrot.slane %v2204, 5
    %v2295 = vrot.slane %v2294, 4
    %v2296 = vrot.slane %v2205, 5
    %v2297 = vsel %vm1168, %v2295, %v2296
    %v2298 = vrot.slane %v2206, 5
    %v2299 = vrot.slane %v2298, 4
    %v2300 = vrot.slane %v2207, 5
    %v2301 = vsel %vm1168, %v2299, %v2300
    %v2302 = vrot.slane %v2208, 5
    %v2303 = vrot.slane %v2302, 4
    %v2304 = vrot.slane %v2209, 5
    %v2305 = vsel %vm1168, %v2303, %v2304
    %v2306 = vunpack.c.l.b16 %v2245
    %v2307 = vunpack.c.l.b16 %v2249
    %v2308 = vunpack.c.l.b16 %v2253
    %v2309 = vunpack.c.l.b16 %v2257
    %v2310 = vunpack.c.l.b16 %v2261
    %v2311 = vunpack.c.l.b16 %v2265
    %v2312 = vunpack.c.l.b16 %v2269
    %v2313 = vunpack.c.l.b16 %v2273
    %v2314 = vunpack.c.l.b16 %v2277
    %v2315 = vunpack.c.l.b16 %v2281
    %v2316 = vunpack.c.l.b16 %v2285
    %v2317 = vunpack.c.l.b16 %v2289
    %v2318 = vunpack.c.l.b16 %v2293
    %v2319 = vunpack.c.l.b16 %v2297
    %v2320 = vunpack.c.l.b16 %v2301
    %v2321 = vunpack.c.l.b16 %v2305
    %v2322 = vpack.c.b16 %v2307, %v2306
    %v2323 = vpack.c.b16 %v2309, %v2308
    %v2324 = vpack.c.b16 %v2311, %v2310
    %v2325 = vpack.c.b16 %v2313, %v2312
    %v2326 = vpack.c.b16 %v2315, %v2314
    %v2327 = vpack.c.b16 %v2317, %v2316
    %v2328 = vpack.c.b16 %v2319, %v2318
    %v2329 = vpack.c.b16 %v2321, %v2320
    %2338 = vst [vmem:[#allocation3 + $0x40] sm:$0xff] %v2322
    %2339 = vst [vmem:[#allocation3 + $0x88] sm:$0xff] %v2323
    %2340 = vst [vmem:[#allocation3 + $0xd0] sm:$0xff] %v2324
    %2341 = vst [vmem:[#allocation3 + $0x118] sm:$0xff] %v2325
    %2342 = vst [vmem:[#allocation3 + $0x160] sm:$0xff] %v2326
    %2343 = vst [vmem:[#allocation3 + $0x1a8] sm:$0xff] %v2327
    %2344 = vst [vmem:[#allocation3 + $0x1f0] sm:$0xff] %v2328
    %2345 = vst [vmem:[#allocation3 + $0x238] sm:$0xff] %v2329
    %v2346 = vld [vmem:[#allocation3] sm:$0xff]
    %v2347 = vld [vmem:[#allocation3 + $0x8] sm:$0xff]
    %v2348 = vld [vmem:[#allocation3 + $0x10] sm:$0xff]
    %v2349 = vld [vmem:[#allocation3 + $0x18] sm:$0xff]
    %v2350 = vld [vmem:[#allocation3 + $0x20] sm:$0xff]
    %v2351 = vld [vmem:[#allocation3 + $0x28] sm:$0xff]
    %v2352 = vld [vmem:[#allocation3 + $0x30] sm:$0xff]
    %v2353 = vld [vmem:[#allocation3 + $0x38] sm:$0xff]
    %v2354 = vld [vmem:[#allocation3 + $0x40] sm:$0xff]
    %v2355 = vld [vmem:[#allocation3 + $0x48] sm:$0xff]
    %v2356 = vld [vmem:[#allocation3 + $0x50] sm:$0xff]
    %v2357 = vld [vmem:[#allocation3 + $0x58] sm:$0xff]
    %v2358 = vld [vmem:[#allocation3 + $0x60] sm:$0xff]
    %v2359 = vld [vmem:[#allocation3 + $0x68] sm:$0xff]
    %v2360 = vld [vmem:[#allocation3 + $0x70] sm:$0xff]
    %v2361 = vld [vmem:[#allocation3 + $0x78] sm:$0xff]
    %v2362 = vld [vmem:[#allocation3 + $0x80] sm:$0xff]
    %v2363 = vld [vmem:[#allocation3 + $0x88] sm:$0xff]
    %v2364 = vld [vmem:[#allocation3 + $0x90] sm:$0xff]
    %v2365 = vld [vmem:[#allocation3 + $0x98] sm:$0xff]
    %v2366 = vld [vmem:[#allocation3 + $0xa0] sm:$0xff]
    %v2367 = vld [vmem:[#allocation3 + $0xa8] sm:$0xff]
    %v2368 = vld [vmem:[#allocation3 + $0xb0] sm:$0xff]
    %v2369 = vld [vmem:[#allocation3 + $0xb8] sm:$0xff]
    %v2370 = vld [vmem:[#allocation3 + $0xc0] sm:$0xff]
    %v2371 = vld [vmem:[#allocation3 + $0xc8] sm:$0xff]
    %v2372 = vld [vmem:[#allocation3 + $0xd0] sm:$0xff]
    %v2373 = vld [vmem:[#allocation3 + $0xd8] sm:$0xff]
    %v2374 = vld [vmem:[#allocation3 + $0xe0] sm:$0xff]
    %v2375 = vld [vmem:[#allocation3 + $0xe8] sm:$0xff]
    %v2376 = vld [vmem:[#allocation3 + $0xf0] sm:$0xff]
    %v2377 = vld [vmem:[#allocation3 + $0xf8] sm:$0xff]
    %v2378 = vld [vmem:[#allocation3 + $0x100] sm:$0xff]
    %v2379 = vld [vmem:[#allocation3 + $0x108] sm:$0xff]
    %v2380 = vld [vmem:[#allocation3 + $0x110] sm:$0xff]
    %v2381 = vld [vmem:[#allocation3 + $0x118] sm:$0xff]
    %v2382 = vld [vmem:[#allocation3 + $0x120] sm:$0xff]
    %v2383 = vld [vmem:[#allocation3 + $0x128] sm:$0xff]
    %v2384 = vld [vmem:[#allocation3 + $0x130] sm:$0xff]
    %v2385 = vld [vmem:[#allocation3 + $0x138] sm:$0xff]
    %v2386 = vld [vmem:[#allocation3 + $0x140] sm:$0xff]
    %v2387 = vld [vmem:[#allocation3 + $0x148] sm:$0xff]
    %v2388 = vld [vmem:[#allocation3 + $0x150] sm:$0xff]
    %v2389 = vld [vmem:[#allocation3 + $0x158] sm:$0xff]
    %v2390 = vld [vmem:[#allocation3 + $0x160] sm:$0xff]
    %v2391 = vld [vmem:[#allocation3 + $0x168] sm:$0xff]
    %v2392 = vld [vmem:[#allocation3 + $0x170] sm:$0xff]
    %v2393 = vld [vmem:[#allocation3 + $0x178] sm:$0xff]
    %v2394 = vld [vmem:[#allocation3 + $0x180] sm:$0xff]
    %v2395 = vld [vmem:[#allocation3 + $0x188] sm:$0xff]
    %v2396 = vld [vmem:[#allocation3 + $0x190] sm:$0xff]
    %v2397 = vld [vmem:[#allocation3 + $0x198] sm:$0xff]
    %v2398 = vld [vmem:[#allocation3 + $0x1a0] sm:$0xff]
    %v2399 = vld [vmem:[#allocation3 + $0x1a8] sm:$0xff]
    %v2400 = vld [vmem:[#allocation3 + $0x1b0] sm:$0xff]
    %v2401 = vld [vmem:[#allocation3 + $0x1b8] sm:$0xff]
    %v2402 = vld [vmem:[#allocation3 + $0x1c0] sm:$0xff]
    %v2403 = vld [vmem:[#allocation3 + $0x1c8] sm:$0xff]
    %v2404 = vld [vmem:[#allocation3 + $0x1d0] sm:$0xff]
    %v2405 = vld [vmem:[#allocation3 + $0x1d8] sm:$0xff]
    %v2406 = vld [vmem:[#allocation3 + $0x1e0] sm:$0xff]
    %v2407 = vld [vmem:[#allocation3 + $0x1e8] sm:$0xff]
    %v2408 = vld [vmem:[#allocation3 + $0x1f0] sm:$0xff]
    %v2409 = vld [vmem:[#allocation3 + $0x1f8] sm:$0xff]
    %v2410 = vld [vmem:[#allocation3 + $0x200] sm:$0xff]
    %v2411 = vld [vmem:[#allocation3 + $0x208] sm:$0xff]
    %v2412 = vld [vmem:[#allocation3 + $0x210] sm:$0xff]
    %v2413 = vld [vmem:[#allocation3 + $0x218] sm:$0xff]
    %v2414 = vld [vmem:[#allocation3 + $0x220] sm:$0xff]
    %v2415 = vld [vmem:[#allocation3 + $0x228] sm:$0xff]
    %v2416 = vld [vmem:[#allocation3 + $0x230] sm:$0xff]
    %v2417 = vld [vmem:[#allocation3 + $0x238] sm:$0xff]
    %v2418 = vld [vmem:[%s2] sm:$0xf]
    %v2419 = vld [vmem:[%s2 + $0x4] sm:$0xf]
    %v2420 = vld [vmem:[%s2 + $0x8] sm:$0xf]
    %v2421 = vld [vmem:[%s2 + $0xc] sm:$0xf]
    %v2422 = vld [vmem:[%s2 + $0x10] sm:$0xf]
    %v2423 = vld [vmem:[%s2 + $0x14] sm:$0xf]
    %v2424 = vld [vmem:[%s2 + $0x18] sm:$0xf]
    %v2425 = vld [vmem:[%s2 + $0x1c] sm:$0xf]
    %v2426 = vld [vmem:[%s2 + $0x20] sm:$0xf]
    %v2427 = vld [vmem:[%s2 + $0x24] sm:$0xf]
    %v2428 = vld [vmem:[%s2 + $0x28] sm:$0xf]
    %v2429 = vld [vmem:[%s2 + $0x2c] sm:$0xf]
    %v2430 = vld [vmem:[%s2 + $0x30] sm:$0xf]
    %v2431 = vld [vmem:[%s2 + $0x34] sm:$0xf]
    %v2432 = vld [vmem:[%s2 + $0x38] sm:$0xf]
    %v2433 = vld [vmem:[%s2 + $0x3c] sm:$0xf]
    %v2434 = vld [vmem:[%s2 + $0x40] sm:$0xf]
    %v2435 = vld [vmem:[%s2 + $0x44] sm:$0xf]
    %v2436 = vld [vmem:[%s2 + $0x48] sm:$0xf]
    %v2437 = vld [vmem:[%s2 + $0x4c] sm:$0xf]
    %v2438 = vld [vmem:[%s2 + $0x50] sm:$0xf]
    %v2439 = vld [vmem:[%s2 + $0x54] sm:$0xf]
    %v2440 = vld [vmem:[%s2 + $0x58] sm:$0xf]
    %v2441 = vld [vmem:[%s2 + $0x5c] sm:$0xf]
    %v2442 = vld [vmem:[%s2 + $0x60] sm:$0xf]
    %v2443 = vld [vmem:[%s2 + $0x64] sm:$0xf]
    %v2444 = vld [vmem:[%s2 + $0x68] sm:$0xf]
    %v2445 = vld [vmem:[%s2 + $0x6c] sm:$0xf]
    %v2446 = vld [vmem:[%s2 + $0x70] sm:$0xf]
    %v2447 = vld [vmem:[%s2 + $0x74] sm:$0xf]
    %v2448 = vld [vmem:[%s2 + $0x78] sm:$0xf]
    %v2449 = vld [vmem:[%s2 + $0x7c] sm:$0xf]
    %v2450 = vld [vmem:[%s2 + $0x80] sm:$0xf]
    %v2451 = vld [vmem:[%s2 + $0x84] sm:$0xf]
    %v2452 = vld [vmem:[%s2 + $0x88] sm:$0xf]
    %v2453 = vld [vmem:[%s2 + $0x8c] sm:$0xf]
    %v2454 = vld [vmem:[%s2 + $0x90] sm:$0xf]
    %v2455 = vld [vmem:[%s2 + $0x94] sm:$0xf]
    %v2456 = vld [vmem:[%s2 + $0x98] sm:$0xf]
    %v2457 = vld [vmem:[%s2 + $0x9c] sm:$0xf]
    %v2458 = vld [vmem:[%s2 + $0xa0] sm:$0xf]
    %v2459 = vld [vmem:[%s2 + $0xa4] sm:$0xf]
    %v2460 = vld [vmem:[%s2 + $0xa8] sm:$0xf]
    %v2461 = vld [vmem:[%s2 + $0xac] sm:$0xf]
    %v2462 = vld [vmem:[%s2 + $0xb0] sm:$0xf]
    %v2463 = vld [vmem:[%s2 + $0xb4] sm:$0xf]
    %v2464 = vld [vmem:[%s2 + $0xb8] sm:$0xf]
    %v2465 = vld [vmem:[%s2 + $0xbc] sm:$0xf]
    %v2466 = vld [vmem:[%s2 + $0xc0] sm:$0xf]
    %v2467 = vld [vmem:[%s2 + $0xc4] sm:$0xf]
    %v2468 = vld [vmem:[%s2 + $0xc8] sm:$0xf]
    %v2469 = vld [vmem:[%s2 + $0xcc] sm:$0xf]
    %v2470 = vld [vmem:[%s2 + $0xd0] sm:$0xf]
    %v2471 = vld [vmem:[%s2 + $0xd4] sm:$0xf]
    %v2472 = vld [vmem:[%s2 + $0xd8] sm:$0xf]
    %v2473 = vld [vmem:[%s2 + $0xdc] sm:$0xf]
    %v2474 = vld [vmem:[%s2 + $0xe0] sm:$0xf]
    %v2475 = vld [vmem:[%s2 + $0xe4] sm:$0xf]
    %v2476 = vld [vmem:[%s2 + $0xe8] sm:$0xf]
    %v2477 = vld [vmem:[%s2 + $0xec] sm:$0xf]
    %v2478 = vld [vmem:[%s2 + $0xf0] sm:$0xf]
    %v2479 = vld [vmem:[%s2 + $0xf4] sm:$0xf]
    %v2480 = vld [vmem:[%s2 + $0xf8] sm:$0xf]
    %v2481 = vld [vmem:[%s2 + $0xfc] sm:$0xf]
    %v2482 = vld [vmem:[%s2 + $0x100] sm:$0xf]
    %v2483 = vld [vmem:[%s2 + $0x104] sm:$0xf]
    %v2484 = vld [vmem:[%s2 + $0x108] sm:$0xf]
    %v2485 = vld [vmem:[%s2 + $0x10c] sm:$0xf]
    %v2486 = vld [vmem:[%s2 + $0x110] sm:$0xf]
    %v2487 = vld [vmem:[%s2 + $0x114] sm:$0xf]
    %v2488 = vld [vmem:[%s2 + $0x118] sm:$0xf]
    %v2489 = vld [vmem:[%s2 + $0x11c] sm:$0xf]
    %v2490 = vld [vmem:[%s2 + $0x120] sm:$0xf]
    %v2491 = vld [vmem:[%s2 + $0x124] sm:$0xf]
    %v2492 = vld [vmem:[%s2 + $0x128] sm:$0xf]
    %v2493 = vld [vmem:[%s2 + $0x12c] sm:$0xf]
    %v2494 = vld [vmem:[%s2 + $0x130] sm:$0xf]
    %v2495 = vld [vmem:[%s2 + $0x134] sm:$0xf]
    %v2496 = vld [vmem:[%s2 + $0x138] sm:$0xf]
    %v2497 = vld [vmem:[%s2 + $0x13c] sm:$0xf]
    %v2498 = vld [vmem:[%s2 + $0x140] sm:$0xf]
    %v2499 = vld [vmem:[%s2 + $0x144] sm:$0xf]
    %v2500 = vld [vmem:[%s2 + $0x148] sm:$0xf]
    %v2501 = vld [vmem:[%s2 + $0x14c] sm:$0xf]
    %v2502 = vld [vmem:[%s2 + $0x150] sm:$0xf]
    %v2503 = vld [vmem:[%s2 + $0x154] sm:$0xf]
    %v2504 = vld [vmem:[%s2 + $0x158] sm:$0xf]
    %v2505 = vld [vmem:[%s2 + $0x15c] sm:$0xf]
    %v2506 = vld [vmem:[%s2 + $0x160] sm:$0xf]
    %v2507 = vld [vmem:[%s2 + $0x164] sm:$0xf]
    %v2508 = vld [vmem:[%s2 + $0x168] sm:$0xf]
    %v2509 = vld [vmem:[%s2 + $0x16c] sm:$0xf]
    %v2510 = vld [vmem:[%s2 + $0x170] sm:$0xf]
    %v2511 = vld [vmem:[%s2 + $0x174] sm:$0xf]
    %v2512 = vld [vmem:[%s2 + $0x178] sm:$0xf]
    %v2513 = vld [vmem:[%s2 + $0x17c] sm:$0xf]
    %v2514 = vld [vmem:[%s2 + $0x180] sm:$0xf]
    %v2515 = vld [vmem:[%s2 + $0x184] sm:$0xf]
    %v2516 = vld [vmem:[%s2 + $0x188] sm:$0xf]
    %v2517 = vld [vmem:[%s2 + $0x18c] sm:$0xf]
    %v2518 = vld [vmem:[%s2 + $0x190] sm:$0xf]
    %v2519 = vld [vmem:[%s2 + $0x194] sm:$0xf]
    %v2520 = vld [vmem:[%s2 + $0x198] sm:$0xf]
    %v2521 = vld [vmem:[%s2 + $0x19c] sm:$0xf]
    %v2522 = vld [vmem:[%s2 + $0x1a0] sm:$0xf]
    %v2523 = vld [vmem:[%s2 + $0x1a4] sm:$0xf]
    %v2524 = vld [vmem:[%s2 + $0x1a8] sm:$0xf]
    %v2525 = vld [vmem:[%s2 + $0x1ac] sm:$0xf]
    %v2526 = vld [vmem:[%s2 + $0x1b0] sm:$0xf]
    %v2527 = vld [vmem:[%s2 + $0x1b4] sm:$0xf]
    %v2528 = vld [vmem:[%s2 + $0x1b8] sm:$0xf]
    %v2529 = vld [vmem:[%s2 + $0x1bc] sm:$0xf]
    %v2530 = vld [vmem:[%s2 + $0x1c0] sm:$0xf]
    %v2531 = vld [vmem:[%s2 + $0x1c4] sm:$0xf]
    %v2532 = vld [vmem:[%s2 + $0x1c8] sm:$0xf]
    %v2533 = vld [vmem:[%s2 + $0x1cc] sm:$0xf]
    %v2534 = vld [vmem:[%s2 + $0x1d0] sm:$0xf]
    %v2535 = vld [vmem:[%s2 + $0x1d4] sm:$0xf]
    %v2536 = vld [vmem:[%s2 + $0x1d8] sm:$0xf]
    %v2537 = vld [vmem:[%s2 + $0x1dc] sm:$0xf]
    %v2538 = vld [vmem:[%s2 + $0x1e0] sm:$0xf]
    %v2539 = vld [vmem:[%s2 + $0x1e4] sm:$0xf]
    %v2540 = vld [vmem:[%s2 + $0x1e8] sm:$0xf]
    %v2541 = vld [vmem:[%s2 + $0x1ec] sm:$0xf]
    %v2542 = vld [vmem:[%s2 + $0x1f0] sm:$0xf]
    %v2543 = vld [vmem:[%s2 + $0x1f4] sm:$0xf]
    %v2544 = vld [vmem:[%s2 + $0x1f8] sm:$0xf]
    %v2545 = vld [vmem:[%s2 + $0x1fc] sm:$0xf]
    %v2546 = vld [vmem:[%s2 + $0x200] sm:$0xf]
    %v2547 = vld [vmem:[%s2 + $0x204] sm:$0xf]
    %v2548 = vld [vmem:[%s2 + $0x208] sm:$0xf]
    %v2549 = vld [vmem:[%s2 + $0x20c] sm:$0xf]
    %v2550 = vld [vmem:[%s2 + $0x210] sm:$0xf]
    %v2551 = vld [vmem:[%s2 + $0x214] sm:$0xf]
    %v2552 = vld [vmem:[%s2 + $0x218] sm:$0xf]
    %v2553 = vld [vmem:[%s2 + $0x21c] sm:$0xf]
    %v2554 = vld [vmem:[%s2 + $0x220] sm:$0xf]
    %v2555 = vld [vmem:[%s2 + $0x224] sm:$0xf]
    %v2556 = vld [vmem:[%s2 + $0x228] sm:$0xf]
    %v2557 = vld [vmem:[%s2 + $0x22c] sm:$0xf]
    %v2558 = vld [vmem:[%s2 + $0x230] sm:$0xf]
    %v2559 = vld [vmem:[%s2 + $0x234] sm:$0xf]
    %v2560 = vld [vmem:[%s2 + $0x238] sm:$0xf]
    %v2561 = vld [vmem:[%s2 + $0x23c] sm:$0xf]
    %v2706 = vunpack.c.l.b16 %v2418
    %v2707 = vunpack.c.l.b16 %v2419
    %v2708 = vunpack.c.l.b16 %v2420
    %v2709 = vunpack.c.l.b16 %v2421
    %v2710 = vunpack.c.l.b16 %v2422
    %v2711 = vunpack.c.l.b16 %v2423
    %v2712 = vunpack.c.l.b16 %v2424
    %v2713 = vunpack.c.l.b16 %v2425
    %v2714 = vunpack.c.l.b16 %v2426
    %v2715 = vunpack.c.l.b16 %v2427
    %v2716 = vunpack.c.l.b16 %v2428
    %v2717 = vunpack.c.l.b16 %v2429
    %v2718 = vunpack.c.l.b16 %v2430
    %v2719 = vunpack.c.l.b16 %v2431
    %v2720 = vunpack.c.l.b16 %v2432
    %v2721 = vunpack.c.l.b16 %v2433
    %v2722 = vunpack.c.l.b16 %v2434
    %v2723 = vunpack.c.l.b16 %v2435
    %v2724 = vunpack.c.l.b16 %v2436
    %v2725 = vunpack.c.l.b16 %v2437
    %v2726 = vunpack.c.l.b16 %v2438
    %v2727 = vunpack.c.l.b16 %v2439
    %v2728 = vunpack.c.l.b16 %v2440
    %v2729 = vunpack.c.l.b16 %v2441
    %v2730 = vunpack.c.l.b16 %v2442
    %v2731 = vunpack.c.l.b16 %v2443
    %v2732 = vunpack.c.l.b16 %v2444
    %v2733 = vunpack.c.l.b16 %v2445
    %v2734 = vunpack.c.l.b16 %v2446
    %v2735 = vunpack.c.l.b16 %v2447
    %v2736 = vunpack.c.l.b16 %v2448
    %v2737 = vunpack.c.l.b16 %v2449
    %v2738 = vunpack.c.l.b16 %v2450
    %v2739 = vunpack.c.l.b16 %v2451
    %v2740 = vunpack.c.l.b16 %v2452
    %v2741 = vunpack.c.l.b16 %v2453
    %v2742 = vunpack.c.l.b16 %v2454
    %v2743 = vunpack.c.l.b16 %v2455
    %v2744 = vunpack.c.l.b16 %v2456
    %v2745 = vunpack.c.l.b16 %v2457
    %v2746 = vunpack.c.l.b16 %v2458
    %v2747 = vunpack.c.l.b16 %v2459
    %v2748 = vunpack.c.l.b16 %v2460
    %v2749 = vunpack.c.l.b16 %v2461
    %v2750 = vunpack.c.l.b16 %v2462
    %v2751 = vunpack.c.l.b16 %v2463
    %v2752 = vunpack.c.l.b16 %v2464
    %v2753 = vunpack.c.l.b16 %v2465
    %v2754 = vunpack.c.l.b16 %v2466
    %v2755 = vunpack.c.l.b16 %v2467
    %v2756 = vunpack.c.l.b16 %v2468
    %v2757 = vunpack.c.l.b16 %v2469
    %v2758 = vunpack.c.l.b16 %v2470
    %v2759 = vunpack.c.l.b16 %v2471
    %v2760 = vunpack.c.l.b16 %v2472
    %v2761 = vunpack.c.l.b16 %v2473
    %v2762 = vunpack.c.l.b16 %v2474
    %v2763 = vunpack.c.l.b16 %v2475
    %v2764 = vunpack.c.l.b16 %v2476
    %v2765 = vunpack.c.l.b16 %v2477
    %v2766 = vunpack.c.l.b16 %v2478
    %v2767 = vunpack.c.l.b16 %v2479
    %v2768 = vunpack.c.l.b16 %v2480
    %v2769 = vunpack.c.l.b16 %v2481
    %v2770 = vunpack.c.l.b16 %v2482
    %v2771 = vunpack.c.l.b16 %v2483
    %v2772 = vunpack.c.l.b16 %v2484
    %v2773 = vunpack.c.l.b16 %v2485
    %v2774 = vunpack.c.l.b16 %v2486
    %v2775 = vunpack.c.l.b16 %v2487
    %v2776 = vunpack.c.l.b16 %v2488
    %v2777 = vunpack.c.l.b16 %v2489
    %v2778 = vunpack.c.l.b16 %v2490
    %v2779 = vunpack.c.l.b16 %v2491
    %v2780 = vunpack.c.l.b16 %v2492
    %v2781 = vunpack.c.l.b16 %v2493
    %v2782 = vunpack.c.l.b16 %v2494
    %v2783 = vunpack.c.l.b16 %v2495
    %v2784 = vunpack.c.l.b16 %v2496
    %v2785 = vunpack.c.l.b16 %v2497
    %v2786 = vunpack.c.l.b16 %v2498
    %v2787 = vunpack.c.l.b16 %v2499
    %v2788 = vunpack.c.l.b16 %v2500
    %v2789 = vunpack.c.l.b16 %v2501
    %v2790 = vunpack.c.l.b16 %v2502
    %v2791 = vunpack.c.l.b16 %v2503
    %v2792 = vunpack.c.l.b16 %v2504
    %v2793 = vunpack.c.l.b16 %v2505
    %v2794 = vunpack.c.l.b16 %v2506
    %v2795 = vunpack.c.l.b16 %v2507
    %v2796 = vunpack.c.l.b16 %v2508
    %v2797 = vunpack.c.l.b16 %v2509
    %v2798 = vunpack.c.l.b16 %v2510
    %v2799 = vunpack.c.l.b16 %v2511
    %v2800 = vunpack.c.l.b16 %v2512
    %v2801 = vunpack.c.l.b16 %v2513
    %v2802 = vunpack.c.l.b16 %v2514
    %v2803 = vunpack.c.l.b16 %v2515
    %v2804 = vunpack.c.l.b16 %v2516
    %v2805 = vunpack.c.l.b16 %v2517
    %v2806 = vunpack.c.l.b16 %v2518
    %v2807 = vunpack.c.l.b16 %v2519
    %v2808 = vunpack.c.l.b16 %v2520
    %v2809 = vunpack.c.l.b16 %v2521
    %v2810 = vunpack.c.l.b16 %v2522
    %v2811 = vunpack.c.l.b16 %v2523
    %v2812 = vunpack.c.l.b16 %v2524
    %v2813 = vunpack.c.l.b16 %v2525
    %v2814 = vunpack.c.l.b16 %v2526
    %v2815 = vunpack.c.l.b16 %v2527
    %v2816 = vunpack.c.l.b16 %v2528
    %v2817 = vunpack.c.l.b16 %v2529
    %v2818 = vunpack.c.l.b16 %v2530
    %v2819 = vunpack.c.l.b16 %v2531
    %v2820 = vunpack.c.l.b16 %v2532
    %v2821 = vunpack.c.l.b16 %v2533
    %v2822 = vunpack.c.l.b16 %v2534
    %v2823 = vunpack.c.l.b16 %v2535
    %v2824 = vunpack.c.l.b16 %v2536
    %v2825 = vunpack.c.l.b16 %v2537
    %v2826 = vunpack.c.l.b16 %v2538
    %v2827 = vunpack.c.l.b16 %v2539
    %v2828 = vunpack.c.l.b16 %v2540
    %v2829 = vunpack.c.l.b16 %v2541
    %v2830 = vunpack.c.l.b16 %v2542
    %v2831 = vunpack.c.l.b16 %v2543
    %v2832 = vunpack.c.l.b16 %v2544
    %v2833 = vunpack.c.l.b16 %v2545
    %v2834 = vunpack.c.l.b16 %v2546
    %v2835 = vunpack.c.l.b16 %v2547
    %v2836 = vunpack.c.l.b16 %v2548
    %v2837 = vunpack.c.l.b16 %v2549
    %v2838 = vunpack.c.l.b16 %v2550
    %v2839 = vunpack.c.l.b16 %v2551
    %v2840 = vunpack.c.l.b16 %v2552
    %v2841 = vunpack.c.l.b16 %v2553
    %v2842 = vunpack.c.l.b16 %v2554
    %v2843 = vunpack.c.l.b16 %v2555
    %v2844 = vunpack.c.l.b16 %v2556
    %v2845 = vunpack.c.l.b16 %v2557
    %v2846 = vunpack.c.l.b16 %v2558
    %v2847 = vunpack.c.l.b16 %v2559
    %v2848 = vunpack.c.l.b16 %v2560
    %v2849 = vunpack.c.l.b16 %v2561
    %v2850 = vpack.c.b16 %v2707, %v2706
    %v2851 = vpack.c.b16 %v2709, %v2708
    %v2852 = vpack.c.b16 %v2711, %v2710
    %v2853 = vpack.c.b16 %v2713, %v2712
    %v2854 = vpack.c.b16 %v2715, %v2714
    %v2855 = vpack.c.b16 %v2717, %v2716
    %v2856 = vpack.c.b16 %v2719, %v2718
    %v2857 = vpack.c.b16 %v2721, %v2720
    %v2858 = vpack.c.b16 %v2723, %v2722
    %v2859 = vpack.c.b16 %v2725, %v2724
    %v2860 = vpack.c.b16 %v2727, %v2726
    %v2861 = vpack.c.b16 %v2729, %v2728
    %v2862 = vpack.c.b16 %v2731, %v2730
    %v2863 = vpack.c.b16 %v2733, %v2732
    %v2864 = vpack.c.b16 %v2735, %v2734
    %v2865 = vpack.c.b16 %v2737, %v2736
    %v2866 = vpack.c.b16 %v2739, %v2738
    %v2867 = vpack.c.b16 %v2741, %v2740
    %v2868 = vpack.c.b16 %v2743, %v2742
    %v2869 = vpack.c.b16 %v2745, %v2744
    %v2870 = vpack.c.b16 %v2747, %v2746
    %v2871 = vpack.c.b16 %v2749, %v2748
    %v2872 = vpack.c.b16 %v2751, %v2750
    %v2873 = vpack.c.b16 %v2753, %v2752
    %v2874 = vpack.c.b16 %v2755, %v2754
    %v2875 = vpack.c.b16 %v2757, %v2756
    %v2876 = vpack.c.b16 %v2759, %v2758
    %v2877 = vpack.c.b16 %v2761, %v2760
    %v2878 = vpack.c.b16 %v2763, %v2762
    %v2879 = vpack.c.b16 %v2765, %v2764
    %v2880 = vpack.c.b16 %v2767, %v2766
    %v2881 = vpack.c.b16 %v2769, %v2768
    %v2882 = vpack.c.b16 %v2771, %v2770
    %v2883 = vpack.c.b16 %v2773, %v2772
    %v2884 = vpack.c.b16 %v2775, %v2774
    %v2885 = vpack.c.b16 %v2777, %v2776
    %v2886 = vpack.c.b16 %v2779, %v2778
    %v2887 = vpack.c.b16 %v2781, %v2780
    %v2888 = vpack.c.b16 %v2783, %v2782
    %v2889 = vpack.c.b16 %v2785, %v2784
    %v2890 = vpack.c.b16 %v2787, %v2786
    %v2891 = vpack.c.b16 %v2789, %v2788
    %v2892 = vpack.c.b16 %v2791, %v2790
    %v2893 = vpack.c.b16 %v2793, %v2792
    %v2894 = vpack.c.b16 %v2795, %v2794
    %v2895 = vpack.c.b16 %v2797, %v2796
    %v2896 = vpack.c.b16 %v2799, %v2798
    %v2897 = vpack.c.b16 %v2801, %v2800
    %v2898 = vpack.c.b16 %v2803, %v2802
    %v2899 = vpack.c.b16 %v2805, %v2804
    %v2900 = vpack.c.b16 %v2807, %v2806
    %v2901 = vpack.c.b16 %v2809, %v2808
    %v2902 = vpack.c.b16 %v2811, %v2810
    %v2903 = vpack.c.b16 %v2813, %v2812
    %v2904 = vpack.c.b16 %v2815, %v2814
    %v2905 = vpack.c.b16 %v2817, %v2816
    %v2906 = vpack.c.b16 %v2819, %v2818
    %v2907 = vpack.c.b16 %v2821, %v2820
    %v2908 = vpack.c.b16 %v2823, %v2822
    %v2909 = vpack.c.b16 %v2825, %v2824
    %v2910 = vpack.c.b16 %v2827, %v2826
    %v2911 = vpack.c.b16 %v2829, %v2828
    %v2912 = vpack.c.b16 %v2831, %v2830
    %v2913 = vpack.c.b16 %v2833, %v2832
    %v2914 = vpack.c.b16 %v2835, %v2834
    %v2915 = vpack.c.b16 %v2837, %v2836
    %v2916 = vpack.c.b16 %v2839, %v2838
    %v2917 = vpack.c.b16 %v2841, %v2840
    %v2918 = vpack.c.b16 %v2843, %v2842
    %v2919 = vpack.c.b16 %v2845, %v2844
    %v2920 = vpack.c.b16 %v2847, %v2846
    %v2921 = vpack.c.b16 %v2849, %v2848
    %2994 = vmatprep.subr.bf16.mxu0 0
    %2995 = vmatpush1.bf16.msra.mxu0 %v2850
    %2996 = vmatprep.subr.bf16.mxu0 0
    %2997 = vmatpush1.bf16.msra.mxu0 %v2851
    %2998 = vmatprep.subr.bf16.mxu0 0
    %2999 = vmatpush1.bf16.msra.mxu0 %v2852
    %3000 = vmatprep.subr.bf16.mxu0 0
    %3001 = vmatpush1.bf16.msra.mxu0 %v2853
    %3002 = vmatprep.subr.bf16.mxu0 0
    %3003 = vmatpush1.bf16.msra.mxu0 %v2854
    %3004 = vmatprep.subr.bf16.mxu0 0
    %3005 = vmatpush1.bf16.msra.mxu0 %v2855
    %3006 = vmatprep.subr.bf16.mxu0 0
    %3007 = vmatpush1.bf16.msra.mxu0 %v2856
    %3008 = vmatprep.subr.bf16.mxu0 0
    %3009 = vmatpush1.bf16.msra.mxu0 %v2857
    %3010 = vmatprep.subr.bf16.mxu0 0
    %3011 = vmatpush1.bf16.msra.mxu0 %v2858
    %3012 = vmatprep.subr.bf16.mxu0 0
    %3013 = vmatpush1.bf16.msra.mxu0 %v2859
    %3014 = vmatprep.subr.bf16.mxu0 0
    %3015 = vmatpush1.bf16.msra.mxu0 %v2860
    %3016 = vmatprep.subr.bf16.mxu0 0
    %3017 = vmatpush1.bf16.msra.mxu0 %v2861
    %3018 = vmatprep.subr.bf16.mxu0 0
    %3019 = vmatpush1.bf16.msra.mxu0 %v2862
    %3020 = vmatprep.subr.bf16.mxu0 0
    %3021 = vmatpush1.bf16.msra.mxu0 %v2863
    %3022 = vmatprep.subr.bf16.mxu0 0
    %3023 = vmatpush1.bf16.msra.mxu0 %v2864
    %3024 = vmatprep.subr.bf16.mxu0 0
    %3025 = vmatpush1.bf16.msra.mxu0 %v2865
    %3026 = vmatprep.mubr.bf16.mxu0 %v2347
    %3027 = vmatmul.mubr.bf16.gmra.mrb[0].mxu0 %v2346
    %v3028 = vpop.f32.mrb[0].mxu0
    %v3029 = vadd.f32 0.0, %v3028
    %v3030 = vpop.f32.mrb[0].mxu0
    %v3031 = vpop.f32.mrb[0].mxu0
    %v3032 = vadd.f32 0.0, %v3031
    %v3033 = vpop.f32.mrb[0].mxu0
    %3034 = vmatprep.mubr.bf16.mxu0 %v2356
    %3035 = vmatmul.mubr.bf16.gmra.mrb[0].mxu0 %v2355
    %v3036 = vpop.f32.mrb[0].mxu0
    %v3037 = vadd.f32 0.0, %v3036
    %v3038 = vpop.f32.mrb[0].mxu0
    %v3039 = vpop.f32.mrb[0].mxu0
    %v3040 = vadd.f32 0.0, %v3039
    %v3041 = vpop.f32.mrb[0].mxu0
    %3042 = vmatprep.mubr.bf16.mxu0 %v2365
    %3043 = vmatmul.mubr.bf16.gmra.mrb[0].mxu0 %v2364
    %v3044 = vpop.f32.mrb[0].mxu0
    %v3045 = vadd.f32 0.0, %v3044
    %v3046 = vpop.f32.mrb[0].mxu0
    %v3047 = vpop.f32.mrb[0].mxu0
    %v3048 = vadd.f32 0.0, %v3047
    %v3049 = vpop.f32.mrb[0].mxu0
    %3050 = vmatprep.mubr.bf16.mxu0 %v2374
    %3051 = vmatmul.mubr.bf16.gmra.mrb[0].mxu0 %v2373
    %v3052 = vpop.f32.mrb[0].mxu0
    %v3053 = vadd.f32 0.0, %v3052
    %v3054 = vpop.f32.mrb[0].mxu0
    %v3055 = vpop.f32.mrb[0].mxu0
    %v3056 = vadd.f32 0.0, %v3055
    %v3057 = vpop.f32.mrb[0].mxu0
    %3058 = vmatprep.mubr.bf16.mxu0 %v2383
    %3059 = vmatmul.mubr.bf16.gmra.mrb[0].mxu0 %v2382
    %v3060 = vpop.f32.mrb[0].mxu0
    %v3061 = vadd.f32 0.0, %v3060
    %v3062 = vpop.f32.mrb[0].mxu0
    %v3063 = vpop.f32.mrb[0].mxu0
    %v3064 = vadd.f32 0.0, %v3063
    %v3065 = vpop.f32.mrb[0].mxu0
    %3066 = vmatprep.mubr.bf16.mxu0 %v2392
    %3067 = vmatmul.mubr.bf16.gmra.mrb[0].mxu0 %v2391
    %v3068 = vpop.f32.mrb[0].mxu0
    %v3069 = vadd.f32 0.0, %v3068
    %v3070 = vpop.f32.mrb[0].mxu0
    %v3071 = vpop.f32.mrb[0].mxu0
    %v3072 = vadd.f32 0.0, %v3071
    %v3073 = vpop.f32.mrb[0].mxu0
    %3074 = vmatprep.mubr.bf16.mxu0 %v2401
    %3075 = vmatmul.mubr.bf16.gmra.mrb[0].mxu0 %v2400
    %v3076 = vpop.f32.mrb[0].mxu0
    %v3077 = vadd.f32 0.0, %v3076
    %v3078 = vpop.f32.mrb[0].mxu0
    %v3079 = vpop.f32.mrb[0].mxu0
    %v3080 = vadd.f32 0.0, %v3079
    %v3081 = vpop.f32.mrb[0].mxu0
    %3082 = vmatprep.mubr.bf16.mxu0 %v2410
    %3083 = vmatmul.mubr.bf16.gmra.mrb[0].mxu0 %v2409
    %v3084 = vpop.f32.mrb[0].mxu0
    %v3085 = vadd.f32 0.0, %v3084
    %v3086 = vpop.f32.mrb[0].mxu0
    %v3087 = vpop.f32.mrb[0].mxu0
    %v3088 = vadd.f32 0.0, %v3087
    %v3089 = vpop.f32.mrb[0].mxu0
    %3090 = vdwg.mxu0
    %3091 = vmatprep.subr.bf16.mxu0 0
    %3092 = vmatpush1.bf16.msra.mxu0 %v2866
    %3093 = vmatprep.subr.bf16.mxu0 0
    %3094 = vmatpush1.bf16.msra.mxu0 %v2867
    %3095 = vmatprep.subr.bf16.mxu0 0
    %3096 = vmatpush1.bf16.msra.mxu0 %v2868
    %3097 = vmatprep.subr.bf16.mxu0 0
    %3098 = vmatpush1.bf16.msra.mxu0 %v2869
    %3099 = vmatprep.subr.bf16.mxu0 0
    %3100 = vmatpush1.bf16.msra.mxu0 %v2870
    %3101 = vmatprep.subr.bf16.mxu0 0
    %3102 = vmatpush1.bf16.msra.mxu0 %v2871
    %3103 = vmatprep.subr.bf16.mxu0 0
    %3104 = vmatpush1.bf16.msra.mxu0 %v2872
    %3105 = vmatprep.subr.bf16.mxu0 0
    %3106 = vmatpush1.bf16.msra.mxu0 %v2873
    %3107 = vmatprep.subr.bf16.mxu0 0
    %3108 = vmatpush1.bf16.msra.mxu0 %v2874
    %3109 = vmatprep.subr.bf16.mxu0 0
    %3110 = vmatpush1.bf16.msra.mxu0 %v2875
    %3111 = vmatprep.subr.bf16.mxu0 0
    %3112 = vmatpush1.bf16.msra.mxu0 %v2876
    %3113 = vmatprep.subr.bf16.mxu0 0
    %3114 = vmatpush1.bf16.msra.mxu0 %v2877
    %3115 = vmatprep.subr.bf16.mxu0 0
    %3116 = vmatpush1.bf16.msra.mxu0 %v2878
    %3117 = vmatprep.subr.bf16.mxu0 0
    %3118 = vmatpush1.bf16.msra.mxu0 %v2879
    %3119 = vmatprep.subr.bf16.mxu0 0
    %3120 = vmatpush1.bf16.msra.mxu0 %v2880
    %3121 = vmatprep.subr.bf16.mxu0 0
    %3122 = vmatpush1.bf16.msra.mxu0 %v2881
    %3123 = vmatprep.mubr.bf16.mxu0 %v2349
    %3124 = vmatmul.mubr.bf16.gmra.mrb[0].mxu0 %v2348
    %v3125 = vpop.f32.mrb[0].mxu0
    %v3126 = vadd.f32 %v3029, %v3125
    %v3127 = vpop.f32.mrb[0].mxu0
    %v3128 = vpop.f32.mrb[0].mxu0
    %v3129 = vadd.f32 %v3032, %v3128
    %v3130 = vpop.f32.mrb[0].mxu0
    %3131 = vmatprep.mubr.bf16.mxu0 %v2358
    %3132 = vmatmul.mubr.bf16.gmra.mrb[0].mxu0 %v2357
    %v3133 = vpop.f32.mrb[0].mxu0
    %v3134 = vadd.f32 %v3037, %v3133
    %v3135 = vpop.f32.mrb[0].mxu0
    %v3136 = vpop.f32.mrb[0].mxu0
    %v3137 = vadd.f32 %v3040, %v3136
    %v3138 = vpop.f32.mrb[0].mxu0
    %3139 = vmatprep.mubr.bf16.mxu0 %v2367
    %3140 = vmatmul.mubr.bf16.gmra.mrb[0].mxu0 %v2366
    %v3141 = vpop.f32.mrb[0].mxu0
    %v3142 = vadd.f32 %v3045, %v3141
    %v3143 = vpop.f32.mrb[0].mxu0
    %v3144 = vpop.f32.mrb[0].mxu0
    %v3145 = vadd.f32 %v3048, %v3144
    %v3146 = vpop.f32.mrb[0].mxu0
    %3147 = vmatprep.mubr.bf16.mxu0 %v2376
    %3148 = vmatmul.mubr.bf16.gmra.mrb[0].mxu0 %v2375
    %v3149 = vpop.f32.mrb[0].mxu0
    %v3150 = vadd.f32 %v3053, %v3149
    %v3151 = vpop.f32.mrb[0].mxu0
    %v3152 = vpop.f32.mrb[0].mxu0
    %v3153 = vadd.f32 %v3056, %v3152
    %v3154 = vpop.f32.mrb[0].mxu0
    %3155 = vmatprep.mubr.bf16.mxu0 %v2385
    %3156 = vmatmul.mubr.bf16.gmra.mrb[0].mxu0 %v2384
    %v3157 = vpop.f32.mrb[0].mxu0
    %v3158 = vadd.f32 %v3061, %v3157
    %v3159 = vpop.f32.mrb[0].mxu0
    %v3160 = vpop.f32.mrb[0].mxu0
    %v3161 = vadd.f32 %v3064, %v3160
    %v3162 = vpop.f32.mrb[0].mxu0
    %3163 = vmatprep.mubr.bf16.mxu0 %v2394
    %3164 = vmatmul.mubr.bf16.gmra.mrb[0].mxu0 %v2393
    %v3165 = vpop.f32.mrb[0].mxu0
    %v3166 = vadd.f32 %v3069, %v3165
    %v3167 = vpop.f32.mrb[0].mxu0
    %v3168 = vpop.f32.mrb[0].mxu0
    %v3169 = vadd.f32 %v3072, %v3168
    %v3170 = vpop.f32.mrb[0].mxu0
    %3171 = vmatprep.mubr.bf16.mxu0 %v2403
    %3172 = vmatmul.mubr.bf16.gmra.mrb[0].mxu0 %v2402
    %v3173 = vpop.f32.mrb[0].mxu0
    %v3174 = vadd.f32 %v3077, %v3173
    %v3175 = vpop.f32.mrb[0].mxu0
    %v3176 = vpop.f32.mrb[0].mxu0
    %v3177 = vadd.f32 %v3080, %v3176
    %v3178 = vpop.f32.mrb[0].mxu0
    %3179 = vmatprep.mubr.bf16.mxu0 %v2412
    %3180 = vmatmul.mubr.bf16.gmra.mrb[0].mxu0 %v2411
    %v3181 = vpop.f32.mrb[0].mxu0
    %v3182 = vadd.f32 %v3085, %v3181
    %v3183 = vpop.f32.mrb[0].mxu0
    %v3184 = vpop.f32.mrb[0].mxu0
    %v3185 = vadd.f32 %v3088, %v3184
    %v3186 = vpop.f32.mrb[0].mxu0
    %3187 = vdwg.mxu0
    %3188 = vmatprep.subr.bf16.mxu0 0
    %3189 = vmatpush1.bf16.msra.mxu0 %v2882
    %3190 = vmatprep.subr.bf16.mxu0 0
    %3191 = vmatpush1.bf16.msra.mxu0 %v2883
    %3192 = vmatprep.subr.bf16.mxu0 0
    %3193 = vmatpush1.bf16.msra.mxu0 %v2884
    %3194 = vmatprep.subr.bf16.mxu0 0
    %3195 = vmatpush1.bf16.msra.mxu0 %v2885
    %3196 = vmatprep.subr.bf16.mxu0 0
    %3197 = vmatpush1.bf16.msra.mxu0 %v2886
    %3198 = vmatprep.subr.bf16.mxu0 0
    %3199 = vmatpush1.bf16.msra.mxu0 %v2887
    %3200 = vmatprep.subr.bf16.mxu0 0
    %3201 = vmatpush1.bf16.msra.mxu0 %v2888
    %3202 = vmatprep.subr.bf16.mxu0 0
    %3203 = vmatpush1.bf16.msra.mxu0 %v2889
    %3204 = vmatprep.subr.bf16.mxu0 0
    %3205 = vmatpush1.bf16.msra.mxu0 %v2890
    %3206 = vmatprep.subr.bf16.mxu0 0
    %3207 = vmatpush1.bf16.msra.mxu0 %v2891
    %3208 = vmatprep.subr.bf16.mxu0 0
    %3209 = vmatpush1.bf16.msra.mxu0 %v2892
    %3210 = vmatprep.subr.bf16.mxu0 0
    %3211 = vmatpush1.bf16.msra.mxu0 %v2893
    %3212 = vmatprep.subr.bf16.mxu0 0
    %3213 = vmatpush1.bf16.msra.mxu0 %v2894
    %3214 = vmatprep.subr.bf16.mxu0 0
    %3215 = vmatpush1.bf16.msra.mxu0 %v2895
    %3216 = vmatprep.subr.bf16.mxu0 0
    %3217 = vmatpush1.bf16.msra.mxu0 %v2896
    %3218 = vmatprep.subr.bf16.mxu0 0
    %3219 = vmatpush1.bf16.msra.mxu0 %v2897
    %3220 = vmatprep.mubr.bf16.mxu0 %v2351
    %3221 = vmatmul.mubr.bf16.gmra.mrb[0].mxu0 %v2350
    %v3222 = vpop.f32.mrb[0].mxu0
    %v3223 = vadd.f32 %v3126, %v3222
    %v3224 = vpop.f32.mrb[0].mxu0
    %v3225 = vpop.f32.mrb[0].mxu0
    %v3226 = vadd.f32 %v3129, %v3225
    %v3227 = vpop.f32.mrb[0].mxu0
    %3228 = vmatprep.mubr.bf16.mxu0 %v2360
    %3229 = vmatmul.mubr.bf16.gmra.mrb[0].mxu0 %v2359
    %v3230 = vpop.f32.mrb[0].mxu0
    %v3231 = vadd.f32 %v3134, %v3230
    %v3232 = vpop.f32.mrb[0].mxu0
    %v3233 = vpop.f32.mrb[0].mxu0
    %v3234 = vadd.f32 %v3137, %v3233
    %v3235 = vpop.f32.mrb[0].mxu0
    %3236 = vmatprep.mubr.bf16.mxu0 %v2369
    %3237 = vmatmul.mubr.bf16.gmra.mrb[0].mxu0 %v2368
    %v3238 = vpop.f32.mrb[0].mxu0
    %v3239 = vadd.f32 %v3142, %v3238
    %v3240 = vpop.f32.mrb[0].mxu0
    %v3241 = vpop.f32.mrb[0].mxu0
    %v3242 = vadd.f32 %v3145, %v3241
    %v3243 = vpop.f32.mrb[0].mxu0
    %3244 = vmatprep.mubr.bf16.mxu0 %v2378
    %3245 = vmatmul.mubr.bf16.gmra.mrb[0].mxu0 %v2377
    %v3246 = vpop.f32.mrb[0].mxu0
    %v3247 = vadd.f32 %v3150, %v3246
    %v3248 = vpop.f32.mrb[0].mxu0
    %v3249 = vpop.f32.mrb[0].mxu0
    %v3250 = vadd.f32 %v3153, %v3249
    %v3251 = vpop.f32.mrb[0].mxu0
    %3252 = vmatprep.mubr.bf16.mxu0 %v2387
    %3253 = vmatmul.mubr.bf16.gmra.mrb[0].mxu0 %v2386
    %v3254 = vpop.f32.mrb[0].mxu0
    %v3255 = vadd.f32 %v3158, %v3254
    %v3256 = vpop.f32.mrb[0].mxu0
    %v3257 = vpop.f32.mrb[0].mxu0
    %v3258 = vadd.f32 %v3161, %v3257
    %v3259 = vpop.f32.mrb[0].mxu0
    %3260 = vmatprep.mubr.bf16.mxu0 %v2396
    %3261 = vmatmul.mubr.bf16.gmra.mrb[0].mxu0 %v2395
    %v3262 = vpop.f32.mrb[0].mxu0
    %v3263 = vadd.f32 %v3166, %v3262
    %v3264 = vpop.f32.mrb[0].mxu0
    %v3265 = vpop.f32.mrb[0].mxu0
    %v3266 = vadd.f32 %v3169, %v3265
    %v3267 = vpop.f32.mrb[0].mxu0
    %3268 = vmatprep.mubr.bf16.mxu0 %v2405
    %3269 = vmatmul.mubr.bf16.gmra.mrb[0].mxu0 %v2404
    %v3270 = vpop.f32.mrb[0].mxu0
    %v3271 = vadd.f32 %v3174, %v3270
    %v3272 = vpop.f32.mrb[0].mxu0
    %v3273 = vpop.f32.mrb[0].mxu0
    %v3274 = vadd.f32 %v3177, %v3273
    %v3275 = vpop.f32.mrb[0].mxu0
    %3276 = vmatprep.mubr.bf16.mxu0 %v2414
    %3277 = vmatmul.mubr.bf16.gmra.mrb[0].mxu0 %v2413
    %v3278 = vpop.f32.mrb[0].mxu0
    %v3279 = vadd.f32 %v3182, %v3278
    %v3280 = vpop.f32.mrb[0].mxu0
    %v3281 = vpop.f32.mrb[0].mxu0
    %v3282 = vadd.f32 %v3185, %v3281
    %v3283 = vpop.f32.mrb[0].mxu0
    %3284 = vdwg.mxu0
    %3285 = vmatprep.subr.bf16.mxu0 0
    %3286 = vmatpush1.bf16.msra.mxu0 %v2898
    %3287 = vmatprep.subr.bf16.mxu0 0
    %3288 = vmatpush1.bf16.msra.mxu0 %v2899
    %3289 = vmatprep.subr.bf16.mxu0 0
    %3290 = vmatpush1.bf16.msra.mxu0 %v2900
    %3291 = vmatprep.subr.bf16.mxu0 0
    %3292 = vmatpush1.bf16.msra.mxu0 %v2901
    %3293 = vmatprep.subr.bf16.mxu0 0
    %3294 = vmatpush1.bf16.msra.mxu0 %v2902
    %3295 = vmatprep.subr.bf16.mxu0 0
    %3296 = vmatpush1.bf16.msra.mxu0 %v2903
    %3297 = vmatprep.subr.bf16.mxu0 0
    %3298 = vmatpush1.bf16.msra.mxu0 %v2904
    %3299 = vmatprep.subr.bf16.mxu0 0
    %3300 = vmatpush1.bf16.msra.mxu0 %v2905
    %3301 = vmatprep.subr.bf16.mxu0 0
    %3302 = vmatpush1.bf16.msra.mxu0 %v2906
    %3303 = vmatprep.subr.bf16.mxu0 0
    %3304 = vmatpush1.bf16.msra.mxu0 %v2907
    %3305 = vmatprep.subr.bf16.mxu0 0
    %3306 = vmatpush1.bf16.msra.mxu0 %v2908
    %3307 = vmatprep.subr.bf16.mxu0 0
    %3308 = vmatpush1.bf16.msra.mxu0 %v2909
    %3309 = vmatprep.subr.bf16.mxu0 0
    %3310 = vmatpush1.bf16.msra.mxu0 %v2910
    %3311 = vmatprep.subr.bf16.mxu0 0
    %3312 = vmatpush1.bf16.msra.mxu0 %v2911
    %3313 = vmatprep.subr.bf16.mxu0 0
    %3314 = vmatpush1.bf16.msra.mxu0 %v2912
    %3315 = vmatprep.subr.bf16.mxu0 0
    %3316 = vmatpush1.bf16.msra.mxu0 %v2913
    %3317 = vmatprep.mubr.bf16.mxu0 %v2353
    %3318 = vmatmul.mubr.bf16.gmra.mrb[0].mxu0 %v2352
    %v3319 = vpop.f32.mrb[0].mxu0
    %v3320 = vadd.f32 %v3223, %v3319
    %v3321 = vpop.f32.mrb[0].mxu0
    %v3322 = vpop.f32.mrb[0].mxu0
    %v3323 = vadd.f32 %v3226, %v3322
    %v3324 = vpop.f32.mrb[0].mxu0
    %3325 = vmatprep.mubr.bf16.mxu0 %v2362
    %3326 = vmatmul.mubr.bf16.gmra.mrb[0].mxu0 %v2361
    %v3327 = vpop.f32.mrb[0].mxu0
    %v3328 = vadd.f32 %v3231, %v3327
    %v3329 = vpop.f32.mrb[0].mxu0
    %v3330 = vpop.f32.mrb[0].mxu0
    %v3331 = vadd.f32 %v3234, %v3330
    %v3332 = vpop.f32.mrb[0].mxu0
    %3333 = vmatprep.mubr.bf16.mxu0 %v2371
    %3334 = vmatmul.mubr.bf16.gmra.mrb[0].mxu0 %v2370
    %v3335 = vpop.f32.mrb[0].mxu0
    %v3336 = vadd.f32 %v3239, %v3335
    %v3337 = vpop.f32.mrb[0].mxu0
    %v3338 = vpop.f32.mrb[0].mxu0
    %v3339 = vadd.f32 %v3242, %v3338
    %v3340 = vpop.f32.mrb[0].mxu0
    %3341 = vmatprep.mubr.bf16.mxu0 %v2380
    %3342 = vmatmul.mubr.bf16.gmra.mrb[0].mxu0 %v2379
    %v3343 = vpop.f32.mrb[0].mxu0
    %v3344 = vadd.f32 %v3247, %v3343
    %v3345 = vpop.f32.mrb[0].mxu0
    %v3346 = vpop.f32.mrb[0].mxu0
    %v3347 = vadd.f32 %v3250, %v3346
    %v3348 = vpop.f32.mrb[0].mxu0
    %3349 = vmatprep.mubr.bf16.mxu0 %v2389
    %3350 = vmatmul.mubr.bf16.gmra.mrb[0].mxu0 %v2388
    %v3351 = vpop.f32.mrb[0].mxu0
    %v3352 = vadd.f32 %v3255, %v3351
    %v3353 = vpop.f32.mrb[0].mxu0
    %v3354 = vpop.f32.mrb[0].mxu0
    %v3355 = vadd.f32 %v3258, %v3354
    %v3356 = vpop.f32.mrb[0].mxu0
    %3357 = vmatprep.mubr.bf16.mxu0 %v2398
    %3358 = vmatmul.mubr.bf16.gmra.mrb[0].mxu0 %v2397
    %v3359 = vpop.f32.mrb[0].mxu0
    %v3360 = vadd.f32 %v3263, %v3359
    %v3361 = vpop.f32.mrb[0].mxu0
    %v3362 = vpop.f32.mrb[0].mxu0
    %v3363 = vadd.f32 %v3266, %v3362
    %v3364 = vpop.f32.mrb[0].mxu0
    %3365 = vmatprep.mubr.bf16.mxu0 %v2407
    %3366 = vmatmul.mubr.bf16.gmra.mrb[0].mxu0 %v2406
    %v3367 = vpop.f32.mrb[0].mxu0
    %v3368 = vadd.f32 %v3271, %v3367
    %v3369 = vpop.f32.mrb[0].mxu0
    %v3370 = vpop.f32.mrb[0].mxu0
    %v3371 = vadd.f32 %v3274, %v3370
    %v3372 = vpop.f32.mrb[0].mxu0
    %3373 = vmatprep.mubr.bf16.mxu0 %v2416
    %3374 = vmatmul.mubr.bf16.gmra.mrb[0].mxu0 %v2415
    %v3375 = vpop.f32.mrb[0].mxu0
    %v3376 = vadd.f32 %v3279, %v3375
    %v3377 = vpop.f32.mrb[0].mxu0
    %v3378 = vpop.f32.mrb[0].mxu0
    %v3379 = vadd.f32 %v3282, %v3378
    %v3380 = vpop.f32.mrb[0].mxu0
    %3381 = vdwg.mxu0
    %3382 = vmatprep.subr.bf16.mxu0 0
    %3383 = vmatpush1.bf16.msra.mxu0 %v2914
    %3384 = vmatprep.subr.bf16.mxu0 0
    %3385 = vmatpush1.bf16.msra.mxu0 %v2915
    %3386 = vmatprep.subr.bf16.mxu0 0
    %3387 = vmatpush1.bf16.msra.mxu0 %v2916
    %3388 = vmatprep.subr.bf16.mxu0 0
    %3389 = vmatpush1.bf16.msra.mxu0 %v2917
    %3390 = vmatprep.subr.bf16.mxu0 0
    %3391 = vmatpush1.bf16.msra.mxu0 %v2918
    %3392 = vmatprep.subr.bf16.mxu0 0
    %3393 = vmatpush1.bf16.msra.mxu0 %v2919
    %3394 = vmatprep.subr.bf16.mxu0 0
    %3395 = vmatpush1.bf16.msra.mxu0 %v2920
    %3396 = vmatprep.subr.bf16.mxu0 0
    %3397 = vmatpush1.bf16.msra.mxu0 %v2921
    %3398 = vmatprep.subr.bf16.mxu0 0
    %3399 = vmatpush1.bf16.msra.mxu0 0
    %3400 = vmatprep.subr.bf16.mxu0 0
    %3401 = vmatpush1.bf16.msra.mxu0 0
    %3402 = vmatprep.subr.bf16.mxu0 0
    %3403 = vmatpush1.bf16.msra.mxu0 0
    %3404 = vmatprep.subr.bf16.mxu0 0
    %3405 = vmatpush1.bf16.msra.mxu0 0
    %3406 = vmatprep.subr.bf16.mxu0 0
    %3407 = vmatpush1.bf16.msra.mxu0 0
    %3408 = vmatprep.subr.bf16.mxu0 0
    %3409 = vmatpush1.bf16.msra.mxu0 0
    %3410 = vmatprep.subr.bf16.mxu0 0
    %3411 = vmatpush1.bf16.msra.mxu0 0
    %3412 = vmatprep.subr.bf16.mxu0 0
    %3413 = vmatpush1.bf16.msra.mxu0 0
    %3414 = vmatprep.mubr.bf16.mxu0 0
    %3415 = vmatmul.mubr.bf16.gmra.mrb[0].mxu0 %v2354
    %v3416 = vpop.f32.mrb[0].mxu0
    %v3417 = vadd.f32 %v3320, %v3416
    %v3418 = vpop.f32.mrb[0].mxu0
    %v3419 = vpop.f32.mrb[0].mxu0
    %v3420 = vadd.f32 %v3323, %v3419
    %v3421 = vpop.f32.mrb[0].mxu0
    %3422 = vmatprep.mubr.bf16.mxu0 0
    %3423 = vmatmul.mubr.bf16.gmra.mrb[0].mxu0 %v2363
    %v3424 = vpop.f32.mrb[0].mxu0
    %v3425 = vadd.f32 %v3328, %v3424
    %v3426 = vpop.f32.mrb[0].mxu0
    %v3427 = vpop.f32.mrb[0].mxu0
    %v3428 = vadd.f32 %v3331, %v3427
    %v3429 = vpop.f32.mrb[0].mxu0
    %3430 = vmatprep.mubr.bf16.mxu0 0
    %3431 = vmatmul.mubr.bf16.gmra.mrb[0].mxu0 %v2372
    %v3432 = vpop.f32.mrb[0].mxu0
    %v3433 = vadd.f32 %v3336, %v3432
    %v3434 = vpop.f32.mrb[0].mxu0
    %v3435 = vpop.f32.mrb[0].mxu0
    %v3436 = vadd.f32 %v3339, %v3435
    %v3437 = vpop.f32.mrb[0].mxu0
    %3438 = vmatprep.mubr.bf16.mxu0 0
    %3439 = vmatmul.mubr.bf16.gmra.mrb[0].mxu0 %v2381
    %v3440 = vpop.f32.mrb[0].mxu0
    %v3441 = vadd.f32 %v3344, %v3440
    %v3442 = vpop.f32.mrb[0].mxu0
    %v3443 = vpop.f32.mrb[0].mxu0
    %v3444 = vadd.f32 %v3347, %v3443
    %v3445 = vpop.f32.mrb[0].mxu0
    %3446 = vmatprep.mubr.bf16.mxu0 0
    %3447 = vmatmul.mubr.bf16.gmra.mrb[0].mxu0 %v2390
    %v3448 = vpop.f32.mrb[0].mxu0
    %v3449 = vadd.f32 %v3352, %v3448
    %v3450 = vpop.f32.mrb[0].mxu0
    %v3451 = vpop.f32.mrb[0].mxu0
    %v3452 = vadd.f32 %v3355, %v3451
    %v3453 = vpop.f32.mrb[0].mxu0
    %3454 = vmatprep.mubr.bf16.mxu0 0
    %3455 = vmatmul.mubr.bf16.gmra.mrb[0].mxu0 %v2399
    %v3456 = vpop.f32.mrb[0].mxu0
    %v3457 = vadd.f32 %v3360, %v3456
    %v3458 = vpop.f32.mrb[0].mxu0
    %v3459 = vpop.f32.mrb[0].mxu0
    %v3460 = vadd.f32 %v3363, %v3459
    %v3461 = vpop.f32.mrb[0].mxu0
    %3462 = vmatprep.mubr.bf16.mxu0 0
    %3463 = vmatmul.mubr.bf16.gmra.mrb[0].mxu0 %v2408
    %v3464 = vpop.f32.mrb[0].mxu0
    %v3465 = vadd.f32 %v3368, %v3464
    %v3466 = vpop.f32.mrb[0].mxu0
    %v3467 = vpop.f32.mrb[0].mxu0
    %v3468 = vadd.f32 %v3371, %v3467
    %v3469 = vpop.f32.mrb[0].mxu0
    %3470 = vmatprep.mubr.bf16.mxu0 0
    %3471 = vmatmul.mubr.bf16.gmra.mrb[0].mxu0 %v2417
    %v3472 = vpop.f32.mrb[0].mxu0
    %v3473 = vadd.f32 %v3376, %v3472
    %v3474 = vpop.f32.mrb[0].mxu0
    %v3475 = vpop.f32.mrb[0].mxu0
    %v3476 = vadd.f32 %v3379, %v3475
    %v3477 = vpop.f32.mrb[0].mxu0
    %3478 = vdwg.mxu0
    %v3479 = vld [vmem:[%s6] sm:$0x1]
    %v3480 = vld [vmem:[%s7] sm:$0x1]
    %v3481 = vadd.f32 %v3417, %v3420
    %v3482 = vadd.f32 %v3481, %v3425
    %v3483 = vadd.f32 %v3482, %v3428
    %v3484 = vadd.f32 %v3483, %v3433
    %v3485 = vadd.f32 %v3484, %v3436
    %v3486 = vadd.f32 %v3485, %v3441
    %v3487 = vadd.f32 %v3486, %v3444
    %v3488 = vadd.f32 %v3487, %v3449
    %v3489 = vadd.f32 %v3488, %v3452
    %v3490 = vadd.f32 %v3489, %v3457
    %v3491 = vadd.f32 %v3490, %v3460
    %v3492 = vadd.f32 %v3491, %v3465
    %v3493 = vadd.f32 %v3492, %v3468
    %v3494 = vadd.f32 %v3493, %v3473
    %v3495 = vadd.f32 %v3494, %v3476
    %v3496 = vrot.slane %v3495, 4
    %v3497 = vadd.f32 %v3495, %v3496
    %v3498 = vrot.slane %v3497, 2
    %v3499 = vadd.f32 %v3497, %v3498
    %v3500 = vrot.slane %v3499, 1
    %v3501 = vadd.f32 %v3499, %v3500
    %v3502 = vmul.f32 %v3501, 0.0078125
    %v3503 = vmul.f32 %v3417, %v3417
    %v3504 = vmul.f32 %v3420, %v3420
    %v3505 = vmul.f32 %v3425, %v3425
    %v3506 = vmul.f32 %v3428, %v3428
    %v3507 = vmul.f32 %v3433, %v3433
    %v3508 = vmul.f32 %v3436, %v3436
    %v3509 = vmul.f32 %v3441, %v3441
    %v3510 = vmul.f32 %v3444, %v3444
    %v3511 = vmul.f32 %v3449, %v3449
    %v3512 = vmul.f32 %v3452, %v3452
    %v3513 = vmul.f32 %v3457, %v3457
    %v3514 = vmul.f32 %v3460, %v3460
    %v3515 = vmul.f32 %v3465, %v3465
    %v3516 = vmul.f32 %v3468, %v3468
    %v3517 = vmul.f32 %v3473, %v3473
    %v3518 = vmul.f32 %v3476, %v3476
    %v3519 = vadd.f32 %v3503, %v3504
    %v3520 = vadd.f32 %v3519, %v3505
    %v3521 = vadd.f32 %v3520, %v3506
    %v3522 = vadd.f32 %v3521, %v3507
    %v3523 = vadd.f32 %v3522, %v3508
    %v3524 = vadd.f32 %v3523, %v3509
    %v3525 = vadd.f32 %v3524, %v3510
    %v3526 = vadd.f32 %v3525, %v3511
    %v3527 = vadd.f32 %v3526, %v3512
    %v3528 = vadd.f32 %v3527, %v3513
    %v3529 = vadd.f32 %v3528, %v3514
    %v3530 = vadd.f32 %v3529, %v3515
    %v3531 = vadd.f32 %v3530, %v3516
    %v3532 = vadd.f32 %v3531, %v3517
    %v3533 = vadd.f32 %v3532, %v3518
    %v3534 = vrot.slane %v3533, 4
    %v3535 = vadd.f32 %v3533, %v3534
    %v3536 = vrot.slane %v3535, 2
    %v3537 = vadd.f32 %v3535, %v3536
    %v3538 = vrot.slane %v3537, 1
    %v3539 = vadd.f32 %v3537, %v3538
    %v3540 = vmul.f32 %v3539, 0.0078125
    %v3541 = vmul.f32 %v3502, %v3502
    %v3542 = vsub.f32 %v3540, %v3541
    %v3543 = vsub.f32 %v3417, %v3502
    %v3544 = vsub.f32 %v3420, %v3502
    %v3545 = vsub.f32 %v3425, %v3502
    %v3546 = vsub.f32 %v3428, %v3502
    %v3547 = vsub.f32 %v3433, %v3502
    %v3548 = vsub.f32 %v3436, %v3502
    %v3549 = vsub.f32 %v3441, %v3502
    %v3550 = vsub.f32 %v3444, %v3502
    %v3551 = vsub.f32 %v3449, %v3502
    %v3552 = vsub.f32 %v3452, %v3502
    %v3553 = vsub.f32 %v3457, %v3502
    %v3554 = vsub.f32 %v3460, %v3502
    %v3555 = vsub.f32 %v3465, %v3502
    %v3556 = vsub.f32 %v3468, %v3502
    %v3557 = vsub.f32 %v3473, %v3502
    %v3558 = vsub.f32 %v3476, %v3502
    %v3559 = vadd.f32 %v3542, 1e-05
    %v3560 = vrsqrt.pop %v3559
    %v3561 = vmul.f32 %v3543, %v3560
    %v3562 = vmul.f32 %v3544, %v3560
    %v3563 = vmul.f32 %v3545, %v3560
    %v3564 = vmul.f32 %v3546, %v3560
    %v3565 = vmul.f32 %v3547, %v3560
    %v3566 = vmul.f32 %v3548, %v3560
    %v3567 = vmul.f32 %v3549, %v3560
    %v3568 = vmul.f32 %v3550, %v3560
    %v3569 = vmul.f32 %v3551, %v3560
    %v3570 = vmul.f32 %v3552, %v3560
    %v3571 = vmul.f32 %v3553, %v3560
    %v3572 = vmul.f32 %v3554, %v3560
    %v3573 = vmul.f32 %v3555, %v3560
    %v3574 = vmul.f32 %v3556, %v3560
    %v3575 = vmul.f32 %v3557, %v3560
    %v3576 = vmul.f32 %v3558, %v3560
    %v3578 = vlaneseq
    %v3579 = vshrl.u32 %v3578, 7
    %v3580 = vsub.s32 0, %v3579
    %v3581 = vrot.slane %v3479, %v3580
    %v3583 = vmul.f32 %v3561, %v3581
    %v3584 = vmul.f32 %v3562, %v3581
    %v3585 = vmul.f32 %v3563, %v3581
    %v3586 = vmul.f32 %v3564, %v3581
    %v3587 = vmul.f32 %v3565, %v3581
    %v3588 = vmul.f32 %v3566, %v3581
    %v3589 = vmul.f32 %v3567, %v3581
    %v3590 = vmul.f32 %v3568, %v3581
    %v3591 = vmul.f32 %v3569, %v3581
    %v3592 = vmul.f32 %v3570, %v3581
    %v3593 = vmul.f32 %v3571, %v3581
    %v3594 = vmul.f32 %v3572, %v3581
    %v3595 = vmul.f32 %v3573, %v3581
    %v3596 = vmul.f32 %v3574, %v3581
    %v3597 = vmul.f32 %v3575, %v3581
    %v3598 = vmul.f32 %v3576, %v3581
    %v3600 = vlaneseq
    %v3601 = vshrl.u32 %v3600, 7
    %v3602 = vsub.s32 0, %v3601
    %v3603 = vrot.slane %v3480, %v3602
    %v3605 = vadd.f32 %v3583, %v3603
    %v3606 = vadd.f32 %v3584, %v3603
    %v3607 = vadd.f32 %v3585, %v3603
    %v3608 = vadd.f32 %v3586, %v3603
    %v3609 = vadd.f32 %v3587, %v3603
    %v3610 = vadd.f32 %v3588, %v3603
    %v3611 = vadd.f32 %v3589, %v3603
    %v3612 = vadd.f32 %v3590, %v3603
    %v3613 = vadd.f32 %v3591, %v3603
    %v3614 = vadd.f32 %v3592, %v3603
    %v3615 = vadd.f32 %v3593, %v3603
    %v3616 = vadd.f32 %v3594, %v3603
    %v3617 = vadd.f32 %v3595, %v3603
    %v3618 = vadd.f32 %v3596, %v3603
    %v3619 = vadd.f32 %v3597, %v3603
    %v3620 = vadd.f32 %v3598, %v3603
    %v3621 = vmax.f32 %v3605, 0.0
    %v3622 = vmax.f32 %v3606, 0.0
    %v3623 = vmax.f32 %v3607, 0.0
    %v3624 = vmax.f32 %v3608, 0.0
    %v3625 = vmax.f32 %v3609, 0.0
    %v3626 = vmax.f32 %v3610, 0.0
    %v3627 = vmax.f32 %v3611, 0.0
    %v3628 = vmax.f32 %v3612, 0.0
    %v3629 = vmax.f32 %v3613, 0.0
    %v3630 = vmax.f32 %v3614, 0.0
    %v3631 = vmax.f32 %v3615, 0.0
    %v3632 = vmax.f32 %v3616, 0.0
    %v3633 = vmax.f32 %v3617, 0.0
    %v3634 = vmax.f32 %v3618, 0.0
    %v3635 = vmax.f32 %v3619, 0.0
    %v3636 = vmax.f32 %v3620, 0.0
    %v3637 = vpack.c.bf16 %v3622, %v3621
    %v3638 = vpack.c.bf16 %v3624, %v3623
    %v3639 = vpack.c.bf16 %v3626, %v3625
    %v3640 = vpack.c.bf16 %v3628, %v3627
    %v3641 = vpack.c.bf16 %v3630, %v3629
    %v3642 = vpack.c.bf16 %v3632, %v3631
    %v3643 = vpack.c.bf16 %v3634, %v3633
    %v3644 = vpack.c.bf16 %v3636, %v3635
    %v3645 = vld [vmem:[%s3] sm:$0xf]
    %v3646 = vld [vmem:[%s3 + $0x4] sm:$0xf]
    %v3647 = vld [vmem:[%s3 + $0x8] sm:$0xf]
    %v3648 = vld [vmem:[%s3 + $0xc] sm:$0xf]
    %v3649 = vld [vmem:[%s3 + $0x10] sm:$0xf]
    %v3650 = vld [vmem:[%s3 + $0x14] sm:$0xf]
    %v3651 = vld [vmem:[%s3 + $0x18] sm:$0xf]
    %v3652 = vld [vmem:[%s3 + $0x1c] sm:$0xf]
    %v3653 = vld [vmem:[%s3 + $0x20] sm:$0xf]
    %v3654 = vld [vmem:[%s3 + $0x24] sm:$0xf]
    %v3655 = vld [vmem:[%s3 + $0x28] sm:$0xf]
    %v3656 = vld [vmem:[%s3 + $0x2c] sm:$0xf]
    %v3657 = vld [vmem:[%s3 + $0x30] sm:$0xf]
    %v3658 = vld [vmem:[%s3 + $0x34] sm:$0xf]
    %v3659 = vld [vmem:[%s3 + $0x38] sm:$0xf]
    %v3660 = vld [vmem:[%s3 + $0x3c] sm:$0xf]
    %v3677 = vunpack.c.l.b16 %v3645
    %v3678 = vunpack.c.l.b16 %v3646
    %v3679 = vunpack.c.l.b16 %v3647
    %v3680 = vunpack.c.l.b16 %v3648
    %v3681 = vunpack.c.l.b16 %v3649
    %v3682 = vunpack.c.l.b16 %v3650
    %v3683 = vunpack.c.l.b16 %v3651
    %v3684 = vunpack.c.l.b16 %v3652
    %v3685 = vunpack.c.l.b16 %v3653
    %v3686 = vunpack.c.l.b16 %v3654
    %v3687 = vunpack.c.l.b16 %v3655
    %v3688 = vunpack.c.l.b16 %v3656
    %v3689 = vunpack.c.l.b16 %v3657
    %v3690 = vunpack.c.l.b16 %v3658
    %v3691 = vunpack.c.l.b16 %v3659
    %v3692 = vunpack.c.l.b16 %v3660
    %v3693 = vpack.c.b16 %v3678, %v3677
    %v3694 = vpack.c.b16 %v3680, %v3679
    %v3695 = vpack.c.b16 %v3682, %v3681
    %v3696 = vpack.c.b16 %v3684, %v3683
    %v3697 = vpack.c.b16 %v3686, %v3685
    %v3698 = vpack.c.b16 %v3688, %v3687
    %v3699 = vpack.c.b16 %v3690, %v3689
    %v3700 = vpack.c.b16 %v3692, %v3691
    %3709 = vmatprep.subr.bf16.mxu0 0
    %3710 = vmatpush1.bf16.msra.mxu0 %v3693
    %3711 = vmatprep.subr.bf16.mxu0 0
    %3712 = vmatpush1.bf16.msra.mxu0 %v3694
    %3713 = vmatprep.subr.bf16.mxu0 0
    %3714 = vmatpush1.bf16.msra.mxu0 %v3695
    %3715 = vmatprep.subr.bf16.mxu0 0
    %3716 = vmatpush1.bf16.msra.mxu0 %v3696
    %3717 = vmatprep.subr.bf16.mxu0 0
    %3718 = vmatpush1.bf16.msra.mxu0 %v3697
    %3719 = vmatprep.subr.bf16.mxu0 0
    %3720 = vmatpush1.bf16.msra.mxu0 %v3698
    %3721 = vmatprep.subr.bf16.mxu0 0
    %3722 = vmatpush1.bf16.msra.mxu0 %v3699
    %3723 = vmatprep.subr.bf16.mxu0 0
    %3724 = vmatpush1.bf16.msra.mxu0 %v3700
    %3725 = vmatprep.subr.bf16.mxu0 0
    %3726 = vmatpush1.bf16.msra.mxu0 0
    %3727 = vmatprep.subr.bf16.mxu0 0
    %3728 = vmatpush1.bf16.msra.mxu0 0
    %3729 = vmatprep.subr.bf16.mxu0 0
    %3730 = vmatpush1.bf16.msra.mxu0 0
    %3731 = vmatprep.subr.bf16.mxu0 0
    %3732 = vmatpush1.bf16.msra.mxu0 0
    %3733 = vmatprep.subr.bf16.mxu0 0
    %3734 = vmatpush1.bf16.msra.mxu0 0
    %3735 = vmatprep.subr.bf16.mxu0 0
    %3736 = vmatpush1.bf16.msra.mxu0 0
    %3737 = vmatprep.subr.bf16.mxu0 0
    %3738 = vmatpush1.bf16.msra.mxu0 0
    %3739 = vmatprep.subr.bf16.mxu0 0
    %3740 = vmatpush1.bf16.msra.mxu0 0
    %3741 = vmatprep.mubr.bf16.mxu0 0
    %3742 = vmatmul.mubr.bf16.gmra.mrb[0].mxu0 %v3637
    %v3743 = vpop.f32.mrb[0].mxu0
    %v3744 = vadd.f32 0.0, %v3743
    %v3745 = vpop.f32.mrb[0].mxu0
    %v3746 = vpop.f32.mrb[0].mxu0
    %v3747 = vadd.f32 0.0, %v3746
    %v3748 = vpop.f32.mrb[0].mxu0
    %3749 = vmatprep.mubr.bf16.mxu0 0
    %3750 = vmatmul.mubr.bf16.gmra.mrb[0].mxu0 %v3638
    %v3751 = vpop.f32.mrb[0].mxu0
    %v3752 = vadd.f32 0.0, %v3751
    %v3753 = vpop.f32.mrb[0].mxu0
    %v3754 = vpop.f32.mrb[0].mxu0
    %v3755 = vadd.f32 0.0, %v3754
    %v3756 = vpop.f32.mrb[0].mxu0
    %3757 = vmatprep.mubr.bf16.mxu0 0
    %3758 = vmatmul.mubr.bf16.gmra.mrb[0].mxu0 %v3639
    %v3759 = vpop.f32.mrb[0].mxu0
    %v3760 = vadd.f32 0.0, %v3759
    %v3761 = vpop.f32.mrb[0].mxu0
    %v3762 = vpop.f32.mrb[0].mxu0
    %v3763 = vadd.f32 0.0, %v3762
    %v3764 = vpop.f32.mrb[0].mxu0
    %3765 = vmatprep.mubr.bf16.mxu0 0
    %3766 = vmatmul.mubr.bf16.gmra.mrb[0].mxu0 %v3640
    %v3767 = vpop.f32.mrb[0].mxu0
    %v3768 = vadd.f32 0.0, %v3767
    %v3769 = vpop.f32.mrb[0].mxu0
    %v3770 = vpop.f32.mrb[0].mxu0
    %v3771 = vadd.f32 0.0, %v3770
    %v3772 = vpop.f32.mrb[0].mxu0
    %3773 = vmatprep.mubr.bf16.mxu0 0
    %3774 = vmatmul.mubr.bf16.gmra.mrb[0].mxu0 %v3641
    %v3775 = vpop.f32.mrb[0].mxu0
    %v3776 = vadd.f32 0.0, %v3775
    %v3777 = vpop.f32.mrb[0].mxu0
    %v3778 = vpop.f32.mrb[0].mxu0
    %v3779 = vadd.f32 0.0, %v3778
    %v3780 = vpop.f32.mrb[0].mxu0
    %3781 = vmatprep.mubr.bf16.mxu0 0
    %3782 = vmatmul.mubr.bf16.gmra.mrb[0].mxu0 %v3642
    %v3783 = vpop.f32.mrb[0].mxu0
    %v3784 = vadd.f32 0.0, %v3783
    %v3785 = vpop.f32.mrb[0].mxu0
    %v3786 = vpop.f32.mrb[0].mxu0
    %v3787 = vadd.f32 0.0, %v3786
    %v3788 = vpop.f32.mrb[0].mxu0
    %3789 = vmatprep.mubr.bf16.mxu0 0
    %3790 = vmatmul.mubr.bf16.gmra.mrb[0].mxu0 %v3643
    %v3791 = vpop.f32.mrb[0].mxu0
    %v3792 = vadd.f32 0.0, %v3791
    %v3793 = vpop.f32.mrb[0].mxu0
    %v3794 = vpop.f32.mrb[0].mxu0
    %v3795 = vadd.f32 0.0, %v3794
    %v3796 = vpop.f32.mrb[0].mxu0
    %3797 = vmatprep.mubr.bf16.mxu0 0
    %3798 = vmatmul.mubr.bf16.gmra.mrb[0].mxu0 %v3644
    %v3799 = vpop.f32.mrb[0].mxu0
    %v3800 = vadd.f32 0.0, %v3799
    %v3801 = vpop.f32.mrb[0].mxu0
    %v3802 = vpop.f32.mrb[0].mxu0
    %v3803 = vadd.f32 0.0, %v3802
    %v3804 = vpop.f32.mrb[0].mxu0
    %3805 = vdwg.mxu0
    %v3806 = vld [vmem:[%s8] sm:$0x1]
    %v3807 = vld [vmem:[%s9] sm:$0x1]
    %v3808 = vadd.f32 %v3744, %v3747
    %v3809 = vadd.f32 %v3808, %v3752
    %v3810 = vadd.f32 %v3809, %v3755
    %v3811 = vadd.f32 %v3810, %v3760
    %v3812 = vadd.f32 %v3811, %v3763
    %v3813 = vadd.f32 %v3812, %v3768
    %v3814 = vadd.f32 %v3813, %v3771
    %v3815 = vadd.f32 %v3814, %v3776
    %v3816 = vadd.f32 %v3815, %v3779
    %v3817 = vadd.f32 %v3816, %v3784
    %v3818 = vadd.f32 %v3817, %v3787
    %v3819 = vadd.f32 %v3818, %v3792
    %v3820 = vadd.f32 %v3819, %v3795
    %v3821 = vadd.f32 %v3820, %v3800
    %v3822 = vadd.f32 %v3821, %v3803
    %v3823 = vrot.slane %v3822, 4
    %v3824 = vadd.f32 %v3822, %v3823
    %v3825 = vrot.slane %v3824, 2
    %v3826 = vadd.f32 %v3824, %v3825
    %v3827 = vrot.slane %v3826, 1
    %v3828 = vadd.f32 %v3826, %v3827
    %v3829 = vmul.f32 %v3828, 0.0078125
    %v3830 = vmul.f32 %v3744, %v3744
    %v3831 = vmul.f32 %v3747, %v3747
    %v3832 = vmul.f32 %v3752, %v3752
    %v3833 = vmul.f32 %v3755, %v3755
    %v3834 = vmul.f32 %v3760, %v3760
    %v3835 = vmul.f32 %v3763, %v3763
    %v3836 = vmul.f32 %v3768, %v3768
    %v3837 = vmul.f32 %v3771, %v3771
    %v3838 = vmul.f32 %v3776, %v3776
    %v3839 = vmul.f32 %v3779, %v3779
    %v3840 = vmul.f32 %v3784, %v3784
    %v3841 = vmul.f32 %v3787, %v3787
    %v3842 = vmul.f32 %v3792, %v3792
    %v3843 = vmul.f32 %v3795, %v3795
    %v3844 = vmul.f32 %v3800, %v3800
    %v3845 = vmul.f32 %v3803, %v3803
    %v3846 = vadd.f32 %v3830, %v3831
    %v3847 = vadd.f32 %v3846, %v3832
    %v3848 = vadd.f32 %v3847, %v3833
    %v3849 = vadd.f32 %v3848, %v3834
    %v3850 = vadd.f32 %v3849, %v3835
    %v3851 = vadd.f32 %v3850, %v3836
    %v3852 = vadd.f32 %v3851, %v3837
    %v3853 = vadd.f32 %v3852, %v3838
    %v3854 = vadd.f32 %v3853, %v3839
    %v3855 = vadd.f32 %v3854, %v3840
    %v3856 = vadd.f32 %v3855, %v3841
    %v3857 = vadd.f32 %v3856, %v3842
    %v3858 = vadd.f32 %v3857, %v3843
    %v3859 = vadd.f32 %v3858, %v3844
    %v3860 = vadd.f32 %v3859, %v3845
    %v3861 = vrot.slane %v3860, 4
    %v3862 = vadd.f32 %v3860, %v3861
    %v3863 = vrot.slane %v3862, 2
    %v3864 = vadd.f32 %v3862, %v3863
    %v3865 = vrot.slane %v3864, 1
    %v3866 = vadd.f32 %v3864, %v3865
    %v3867 = vmul.f32 %v3866, 0.0078125
    %v3868 = vmul.f32 %v3829, %v3829
    %v3869 = vsub.f32 %v3867, %v3868
    %v3870 = vsub.f32 %v3744, %v3829
    %v3871 = vsub.f32 %v3747, %v3829
    %v3872 = vsub.f32 %v3752, %v3829
    %v3873 = vsub.f32 %v3755, %v3829
    %v3874 = vsub.f32 %v3760, %v3829
    %v3875 = vsub.f32 %v3763, %v3829
    %v3876 = vsub.f32 %v3768, %v3829
    %v3877 = vsub.f32 %v3771, %v3829
    %v3878 = vsub.f32 %v3776, %v3829
    %v3879 = vsub.f32 %v3779, %v3829
    %v3880 = vsub.f32 %v3784, %v3829
    %v3881 = vsub.f32 %v3787, %v3829
    %v3882 = vsub.f32 %v3792, %v3829
    %v3883 = vsub.f32 %v3795, %v3829
    %v3884 = vsub.f32 %v3800, %v3829
    %v3885 = vsub.f32 %v3803, %v3829
    %v3886 = vadd.f32 %v3869, 1e-05
    %v3887 = vrsqrt.pop %v3886
    %v3888 = vmul.f32 %v3870, %v3887
    %v3889 = vmul.f32 %v3871, %v3887
    %v3890 = vmul.f32 %v3872, %v3887
    %v3891 = vmul.f32 %v3873, %v3887
    %v3892 = vmul.f32 %v3874, %v3887
    %v3893 = vmul.f32 %v3875, %v3887
    %v3894 = vmul.f32 %v3876, %v3887
    %v3895 = vmul.f32 %v3877, %v3887
    %v3896 = vmul.f32 %v3878, %v3887
    %v3897 = vmul.f32 %v3879, %v3887
    %v3898 = vmul.f32 %v3880, %v3887
    %v3899 = vmul.f32 %v3881, %v3887
    %v3900 = vmul.f32 %v3882, %v3887
    %v3901 = vmul.f32 %v3883, %v3887
    %v3902 = vmul.f32 %v3884, %v3887
    %v3903 = vmul.f32 %v3885, %v3887
    %v3905 = vlaneseq
    %v3906 = vshrl.u32 %v3905, 7
    %v3907 = vsub.s32 0, %v3906
    %v3908 = vrot.slane %v3806, %v3907
    %v3910 = vmul.f32 %v3888, %v3908
    %v3911 = vmul.f32 %v3889, %v3908
    %v3912 = vmul.f32 %v3890, %v3908
    %v3913 = vmul.f32 %v3891, %v3908
    %v3914 = vmul.f32 %v3892, %v3908
    %v3915 = vmul.f32 %v3893, %v3908
    %v3916 = vmul.f32 %v3894, %v3908
    %v3917 = vmul.f32 %v3895, %v3908
    %v3918 = vmul.f32 %v3896, %v3908
    %v3919 = vmul.f32 %v3897, %v3908
    %v3920 = vmul.f32 %v3898, %v3908
    %v3921 = vmul.f32 %v3899, %v3908
    %v3922 = vmul.f32 %v3900, %v3908
    %v3923 = vmul.f32 %v3901, %v3908
    %v3924 = vmul.f32 %v3902, %v3908
    %v3925 = vmul.f32 %v3903, %v3908
    %v3927 = vlaneseq
    %v3928 = vshrl.u32 %v3927, 7
    %v3929 = vsub.s32 0, %v3928
    %v3930 = vrot.slane %v3807, %v3929
    %v3932 = vadd.f32 %v3910, %v3930
    %v3933 = vadd.f32 %v3911, %v3930
    %v3934 = vadd.f32 %v3912, %v3930
    %v3935 = vadd.f32 %v3913, %v3930
    %v3936 = vadd.f32 %v3914, %v3930
    %v3937 = vadd.f32 %v3915, %v3930
    %v3938 = vadd.f32 %v3916, %v3930
    %v3939 = vadd.f32 %v3917, %v3930
    %v3940 = vadd.f32 %v3918, %v3930
    %v3941 = vadd.f32 %v3919, %v3930
    %v3942 = vadd.f32 %v3920, %v3930
    %v3943 = vadd.f32 %v3921, %v3930
    %v3944 = vadd.f32 %v3922, %v3930
    %v3945 = vadd.f32 %v3923, %v3930
    %v3946 = vadd.f32 %v3924, %v3930
    %v3947 = vadd.f32 %v3925, %v3930
    %v3948 = vadd.f32 %v3932, %v37
    %v3949 = vadd.f32 %v3933, %v38
    %v3950 = vadd.f32 %v3934, %v39
    %v3951 = vadd.f32 %v3935, %v40
    %v3952 = vadd.f32 %v3936, %v41
    %v3953 = vadd.f32 %v3937, %v42
    %v3954 = vadd.f32 %v3938, %v43
    %v3955 = vadd.f32 %v3939, %v44
    %v3956 = vadd.f32 %v3940, %v45
    %v3957 = vadd.f32 %v3941, %v46
    %v3958 = vadd.f32 %v3942, %v47
    %v3959 = vadd.f32 %v3943, %v48
    %v3960 = vadd.f32 %v3944, %v49
    %v3961 = vadd.f32 %v3945, %v50
    %v3962 = vadd.f32 %v3946, %v51
    %v3963 = vadd.f32 %v3947, %v52
    %v3964 = vmax.f32 %v3948, 0.0
    %v3965 = vmax.f32 %v3949, 0.0
    %v3966 = vmax.f32 %v3950, 0.0
    %v3967 = vmax.f32 %v3951, 0.0
    %v3968 = vmax.f32 %v3952, 0.0
    %v3969 = vmax.f32 %v3953, 0.0
    %v3970 = vmax.f32 %v3954, 0.0
    %v3971 = vmax.f32 %v3955, 0.0
    %v3972 = vmax.f32 %v3956, 0.0
    %v3973 = vmax.f32 %v3957, 0.0
    %v3974 = vmax.f32 %v3958, 0.0
    %v3975 = vmax.f32 %v3959, 0.0
    %v3976 = vmax.f32 %v3960, 0.0
    %v3977 = vmax.f32 %v3961, 0.0
    %v3978 = vmax.f32 %v3962, 0.0
    %v3979 = vmax.f32 %v3963, 0.0
    %3980 = vst [vmem:[#allocation4] sm:$0xff] %v3964
    %3981 = vst [vmem:[#allocation4 + $0x8] sm:$0xff] %v3965
    %3982 = vst [vmem:[#allocation4 + $0x10] sm:$0xff] %v3966
    %3983 = vst [vmem:[#allocation4 + $0x18] sm:$0xff] %v3967
    %3984 = vst [vmem:[#allocation4 + $0x20] sm:$0xff] %v3968
    %3985 = vst [vmem:[#allocation4 + $0x28] sm:$0xff] %v3969
    %3986 = vst [vmem:[#allocation4 + $0x30] sm:$0xff] %v3970
    %3987 = vst [vmem:[#allocation4 + $0x38] sm:$0xff] %v3971
    %3988 = vst [vmem:[#allocation4 + $0x40] sm:$0xff] %v3972
    %3989 = vst [vmem:[#allocation4 + $0x48] sm:$0xff] %v3973
    %3990 = vst [vmem:[#allocation4 + $0x50] sm:$0xff] %v3974
    %3991 = vst [vmem:[#allocation4 + $0x58] sm:$0xff] %v3975
    %3992 = vst [vmem:[#allocation4 + $0x60] sm:$0xff] %v3976
    %3993 = vst [vmem:[#allocation4 + $0x68] sm:$0xff] %v3977
    %3994 = vst [vmem:[#allocation4 + $0x70] sm:$0xff] %v3978
    %3995 = vst [vmem:[#allocation4 + $0x78] sm:$0xff] %v3979
    // Predicated region
    $region42: #{bottleneck_forward.1} parent=1 // pred_check
      _
    $region43: #{bottleneck_forward.1} parent=1 // pred_check_branch
      %3997 = sbr.rel (0) target = $region45
    $region44: #{bottleneck_forward.1} parent=1 // pred_region
      %s3999 = ssub.s32 2048, 2048
      %4000 = vsyncadd [#allocation5], %s3999
      %s4001 = sshll.u32 [#allocation4], 4
      %s4002 = int_to_ptr.vmem [resolvable:$true] %s4001
      %4007 = dma.vmem_to_hbm [thread:$0]  %s4002, 2048, %s10, [#allocation5], 128, 128, 8
    $region45: #{bottleneck_forward.1} parent=1 // pred_fallthru
      _
    // Predicated region
    $region46: #{bottleneck_forward.1} parent=1 // pred_check
      _
    $region47: #{bottleneck_forward.1} parent=1 // pred_check_branch
      %4009 = sbr.rel (0) target = $region49
    $region48: #{bottleneck_forward.1} parent=1 // pred_region
      %4010 = dma.done [#allocation5], 2048
    $region49: #{bottleneck_forward.1} parent=1 // pred_fallthru
      _
    %4011 = vsyncpa [#allocation5], 1

</llo_original>
